<compile_context>
chip_gen: v5e
topology: v5e:2x2
jax: 0.10.0
libtpu: 0.0.40
codegen_flags: <defaults>
</compile_context>

<pallas_src>
import functools

import jax
import jax.numpy as jnp
import numpy as np
from jax.experimental import pallas as pl
from jax.experimental.pallas import tpu as pltpu


def _layernorm(x, gamma, beta, eps):
    mean = jnp.mean(x, axis=-1, keepdims=True)
    var = jnp.mean((x - mean) ** 2, axis=-1, keepdims=True)
    return (x - mean) * jax.lax.rsqrt(var + eps) * gamma + beta


def transformer_block_kernel(q_ref, k_ref, v_ref, mask_ref,
                             wq_ref, bq_ref, wk_ref, bk_ref,
                             wv_ref, bv_ref, wo_ref, bo_ref,
                             w1_ref, b1_ref, w2_ref, b2_ref,
                             g1_ref, be1_ref, g2_ref, be2_ref,
                             out_ref, *, num_heads, head_dim):
    f32 = jnp.float32
    bf16 = jnp.bfloat16

    q_res = q_ref[...].astype(f32)            # (Tq, E) f32 copy kept for residual
    q = q_res.astype(bf16)
    k = k_ref[...]                            # already bf16 (wrapper-side cast)
    v = v_ref[...]

    # QKV projections: bf16 operands on the MXU, f32 accumulation.
    # 1/sqrt(head_dim) is pre-folded into wq/bq (prepare_params).
    Q = jnp.dot(q, wq_ref[...], preferred_element_type=f32) + bq_ref[...]
    K = jnp.dot(k, wk_ref[...], preferred_element_type=f32) + bk_ref[...]
    V = jnp.dot(v, wv_ref[...], preferred_element_type=f32) + bv_ref[...]

    Tq = Q.shape[0]
    Skv = K.shape[0]

    # Additive mask bias, computed once per grid step, compared directly on the
    # bf16 mask (no full-tile convert to f32).  -1e30 instead of -inf avoids
    # inf-inf = NaN for fully-masked rows.
    bias = jnp.where(mask_ref[...] == 0, jnp.float32(-1e30), jnp.float32(0.0))

    # Batched multi-head attention: one contraction over all heads.
    Q3 = Q.reshape(Tq, num_heads, head_dim).astype(bf16)
    K3 = K.reshape(Skv, num_heads, head_dim).astype(bf16)
    V3 = V.reshape(Skv, num_heads, head_dim).astype(bf16)

    # TODO(synk): tile this over Skv with an online softmax for very long KV.
    scores = jnp.einsum("qhd,khd->hqk", Q3, K3,
                        preferred_element_type=f32)           # (H, Tq, Skv) f32
    scores = scores + bias[None, :, :]

    m = jnp.max(scores, axis=-1, keepdims=True)
    p = jnp.exp(scores - m)
    denom = jnp.sum(p, axis=-1, keepdims=True)                # (H, Tq, 1)

    attn = jnp.einsum("hqk,khd->hqd", p.astype(bf16), V3,
                      preferred_element_type=f32)             # (H, Tq, Dh) f32
    # Deferred softmax normalization: Dh-wide multiply instead of Skv-wide.
    attn = attn * pl.reciprocal(denom, approx=True)           # EUP, not VALU
    attn = jnp.transpose(attn, (1, 0, 2)).reshape(Tq, num_heads * head_dim)

    mha = jnp.dot(attn.astype(bf16), wo_ref[...],
                  preferred_element_type=f32) + bo_ref[...]

    # dropout == identity at inference; residual + LayerNorm in f32.
    skip1 = mha + q_res
    normed1 = _layernorm(skip1, g1_ref[...], be1_ref[...], 1e-6)

    # TODO(synk): tile Fdim with an f32 VMEM accumulator for very large Fdim.
    hidden = jnp.dot(normed1.astype(bf16), w1_ref[...],
                     preferred_element_type=f32) + b1_ref[...]
    hidden = jnp.maximum(hidden, 0.0)                         # ReLU
    ffn = jnp.dot(hidden.astype(bf16), w2_ref[...],
                  preferred_element_type=f32) + b2_ref[...]

    skip2 = ffn + normed1
    out_ref[...] = _layernorm(skip2, g2_ref[...], be2_ref[...], 1e-6).astype(out_ref.dtype)


def prepare_params(params, num_heads):
    """One-time weight prep (hoisted out of the per-call path):
    bf16 matmul weights (half the DMA bytes, bf16 MXU) and the attention
    1/sqrt(head_dim) scale folded into Wq / bq."""
    bf16 = jnp.bfloat16
    f32 = jnp.float32
    E = params["wq"].shape[0]
    scale = 1.0 / float(np.sqrt(E // num_heads))
    return {
        "wq": (params["wq"] * scale).astype(bf16),
        "bq": (params["bq"] * scale).astype(f32),
        "wk": params["wk"].astype(bf16), "bk": params["bk"].astype(f32),
        "wv": params["wv"].astype(bf16), "bv": params["bv"].astype(f32),
        "wo": params["wo"].astype(bf16), "bo": params["bo"].astype(f32),
        "w1": params["w1"].astype(bf16), "b1": params["b1"].astype(f32),
        "w2": params["w2"].astype(bf16), "b2": params["b2"].astype(f32),
        "g1": params["g1"].astype(f32), "be1": params["be1"].astype(f32),
        "g2": params["g2"].astype(f32), "be2": params["be2"].astype(f32),
        "_prepared": True,
    }


def _vmem_capacity_bytes():
    try:
        return int(pltpu.get_tpu_info().vmem_capacity_bytes)
    except Exception:
        return 64 * 2**20  # conservative (v7x per-TensorCore VMEM)


def _pick_q_block(Sq, Skv, H, cap):
    """Generation-aware query-tile size: larger on 128 MiB parts, bounded by
    the (H, q_block, Skv) f32 score-tile budget on 64 MiB parts."""
    big_vmem = cap > 96 * 2**20
    qb = 512 if big_vmem else 256
    score_budget = (16 if big_vmem else 8) * 2**20
    while qb > 8 and H * qb * Skv * 4 > score_budget:
        qb //= 2
    qb = min(qb, Sq)
    while qb > 1 and Sq % qb:
        qb //= 2
    if qb < 8 and qb != Sq:
        qb = Sq  # fall back to an un-tiled query axis (full block)
    return qb


def _vmem_estimate(q_block, Skv, E, Fdim, H, weight_buffers):
    bf2, f4 = 2, 4
    weights = weight_buffers * (bf2 * (4 * E * E + 2 * E * Fdim)
                                + f4 * (9 * E + Fdim))
    acts_in = 2 * (f4 * q_block * E            # q (f32, double-buffered)
                   + 2 * bf2 * Skv * E         # k, v (bf16)
                   + bf2 * q_block * Skv)      # mask (bf16)
    acts_out = 2 * f4 * q_block * E
    work = (2 * f4 * H * q_block * Skv         # scores + p
            + f4 * q_block * Fdim              # ffn hidden
            + f4 * (q_block + 2 * Skv) * E     # Q, K, V f32
            + 4 * f4 * q_block * E)            # attn / mha / normed / skip
    return weights + acts_in + acts_out + work


def transformer_block(q, k, v, mask, params, num_heads, q_block=None):
    B, Sq, E = q.shape
    Skv = k.shape[1]
    bf16 = jnp.bfloat16
    assert E % num_heads == 0
    head_dim = E // num_heads

    prepared = params if params.get("_prepared", False) else prepare_params(params, num_heads)
    Fdim = prepared["w1"].shape[1]

    cap = _vmem_capacity_bytes()
    if q_block is None:
        q_block = _pick_q_block(Sq, Skv, num_heads, cap)
    assert Sq % q_block == 0, "Sq must be divisible by q_block"
    grid = (B, Sq // q_block)

    # bf16 K/V transport (kernel used them in bf16 anyway); q stays f32 for
    # the full-precision residual.  Mask transported as exact-0/1 bf16.
    k_b = k.astype(bf16)
    v_b = v.astype(bf16)
    mask_b = mask if mask.dtype == bf16 else (mask != 0).astype(bf16)

    q_spec = pl.BlockSpec((pl.Squeezed(), q_block, E), lambda b, qi: (b, qi, 0))
    kv_spec = pl.BlockSpec((pl.Squeezed(), Skv, E), lambda b, qi: (b, 0, 0))
    mask_spec = pl.BlockSpec((pl.Squeezed(), q_block, Skv), lambda b, qi: (b, qi, 0))
    out_spec = pl.BlockSpec((pl.Squeezed(), q_block, E), lambda b, qi: (b, qi, 0))

    kernel = functools.partial(transformer_block_kernel,
                               num_heads=num_heads, head_dim=head_dim)

    args = (q, k_b, v_b, mask_b,
            prepared["wq"], prepared["bq"], prepared["wk"], prepared["bk"],
            prepared["wv"], prepared["bv"], prepared["wo"], prepared["bo"],
            prepared["w1"], prepared["b1"], prepared["w2"], prepared["b2"],
            prepared["g1"], prepared["be1"], prepared["g2"], prepared["be2"])

    def build(single_buffer_weights):
        def w_spec(shape):
            idx = lambda b, qi: (0,) * len(shape)
            if single_buffer_weights:
                # Grid-invariant blocks: one buffer is enough (block index
                # never changes), halving weight VMEM residency.
                return pl.BlockSpec(shape, idx, pipeline_mode=pl.Buffered(1))
            return pl.BlockSpec(shape, idx)

        in_specs = [
            q_spec, kv_spec, kv_spec, mask_spec,
            w_spec((E, E)), w_spec((1, E)),            # Wq, bq (pre-scaled)
            w_spec((E, E)), w_spec((1, E)),            # Wk, bk
            w_spec((E, E)), w_spec((1, E)),            # Wv, bv
            w_spec((E, E)), w_spec((1, E)),            # Wo, bo
            w_spec((E, Fdim)), w_spec((1, Fdim)),      # W1, b1
            w_spec((Fdim, E)), w_spec((1, E)),         # W2, b2
            w_spec((1, E)), w_spec((1, E)),            # ln1 gamma, beta
            w_spec((1, E)), w_spec((1, E)),            # ln2 gamma, beta
        ]

        wbuf = 1 if single_buffer_weights else 2
        est = _vmem_estimate(q_block, Skv, E, Fdim, num_heads, wbuf)
        # Generation-aware scoped-VMEM request: never above physical - headroom.
        vmem_limit = int(min(cap - 4 * 2**20, max(32 * 2**20, int(1.3 * est))))

        return pl.pallas_call(
            kernel,
            out_shape=jax.ShapeDtypeStruct((B, Sq, E), q.dtype),
            grid_spec=pltpu.PrefetchScalarGridSpec(
                num_scalar_prefetch=0,
                grid=grid,
                in_specs=in_specs,
                out_specs=out_spec,
            ),
            compiler_params=pltpu.CompilerParams(
                dimension_semantics=("parallel", "parallel"),
                vmem_limit_bytes=vmem_limit,
            ),
        )

    try:
        return build(True)(*args)
    except Exception:
        # TODO(synk): drop this fallback once pl.Buffered(1) on invariant
        #             weights is exercised in CI on all generations.
        return build(False)(*args)


def reference_transformer_block(q, k, v, mask, params, num_heads):
    """Pure-JAX f32 reference mirroring the PyTorch forward."""
    B, S, E = q.shape
    Dh = E // num_heads

    def lin(x, w, b):
        return x @ w + b

    Q = lin(q, params["wq"], params["bq"]).reshape(B, S, num_heads, Dh).transpose(0, 2, 1, 3)
    K = lin(k, params["wk"], params["bk"]).reshape(B, -1, num_heads, Dh).transpose(0, 2, 1, 3)
    V = lin(v, params["wv"], params["bv"]).reshape(B, -1, num_heads, Dh).transpose(0, 2, 1, 3)

    scores = jnp.einsum("bhqd,bhkd->bhqk", Q, K) / jnp.sqrt(jnp.float32(Dh))
    scores = jnp.where(mask[:, None, :, :] == 0, -jnp.inf, scores)
    w = jax.nn.softmax(scores, axis=-1)
    attn = jnp.einsum("bhqk,bhkd->bhqd", w, V).transpose(0, 2, 1, 3).reshape(B, S, E)
    mha_out = lin(attn, params["wo"], params["bo"])

    skip1 = mha_out + q
    normed1 = _layernorm(skip1, params["g1"], params["be1"], 1e-6)
    ffn = lin(jnp.maximum(lin(normed1, params["w1"], params["b1"]), 0.0),
              params["w2"], params["b2"])
    skip2 = ffn + normed1
    return _layernorm(skip2, params["g2"], params["be2"], 1e-6)


def make_params(key, emb_dim, forward_dim):
    keys = jax.random.split(key, 10)
    s = 0.05
    return {
        "wq": s * jax.random.normal(keys[0], (emb_dim, emb_dim), jnp.float32),
        "bq": s * jax.random.normal(keys[1], (1, emb_dim), jnp.float32),
        "wk": s * jax.random.normal(keys[2], (emb_dim, emb_dim), jnp.float32),
        "bk": s * jax.random.normal(keys[3], (1, emb_dim), jnp.float32),
        "wv": s * jax.random.normal(keys[4], (emb_dim, emb_dim), jnp.float32),
        "bv": s * jax.random.normal(keys[5], (1, emb_dim), jnp.float32),
        "wo": s * jax.random.normal(keys[6], (emb_dim, emb_dim), jnp.float32),
        "bo": s * jax.random.normal(keys[7], (1, emb_dim), jnp.float32),
        "w1": s * jax.random.normal(keys[8], (emb_dim, forward_dim), jnp.float32),
        "b1": jnp.zeros((1, forward_dim), jnp.float32),
        "w2": s * jax.random.normal(keys[9], (forward_dim, emb_dim), jnp.float32),
        "b2": jnp.zeros((1, emb_dim), jnp.float32),
        "g1": jnp.ones((1, emb_dim), jnp.float32),
        "be1": jnp.zeros((1, emb_dim), jnp.float32),
        "g2": jnp.ones((1, emb_dim), jnp.float32),
        "be2": jnp.zeros((1, emb_dim), jnp.float32),
    }


if __name__ == "__main__":
    # NOTE: production models should use E as a multiple of 128 for lane-dense
    # stores; the toy shapes below follow the module's small-scale semantics.
    B, S, E, H, FWD = 2, 8, 32, 4, 64

    root = jax.random.PRNGKey(0)
    kq, kk, kv, kp = jax.random.split(root, 4)

    q = jax.random.normal(kq, (B, S, E), jnp.float32)
    k = jax.random.normal(kk, (B, S, E), jnp.float32)
    v = jax.random.normal(kv, (B, S, E), jnp.float32)
    # causal mask (0 = masked) so every query row has at least one valid key
    mask = jnp.broadcast_to(jnp.tril(jnp.ones((S, S), jnp.float32)), (B, S, S))

    params = make_params(kp, E, FWD)

    # One-time (hoisted) parameter / mask prep.
    prepared = prepare_params(params, num_heads=H)
    mask_bf16 = (mask != 0).astype(jnp.bfloat16)

    out = transformer_block(q, k, v, mask_bf16, prepared, num_heads=H)
    out = jax.block_until_ready(out)

    ref = reference_transformer_block(q, k, v, mask, params, num_heads=H)
    np.testing.assert_allclose(np.asarray(out), np.asarray(ref), rtol=5e-2, atol=5e-2)

    print("KERNEL_OK")
</pallas_src>

<mosaic_0001>
module attributes {stable_mosaic.version = 11 : i64} {
  func.func @transformer_block_kernel(%arg0: i32, %arg1: i32, %arg2: memref<1x8x32xf32, #tpu.memory_space<vmem>>, %arg3: memref<1x8x32xbf16, #tpu.memory_space<vmem>>, %arg4: memref<1x8x32xbf16, #tpu.memory_space<vmem>>, %arg5: memref<1x8x8xbf16, #tpu.memory_space<vmem>>, %arg6: memref<32x32xbf16, #tpu.memory_space<vmem>>, %arg7: memref<1x32xf32, #tpu.memory_space<vmem>>, %arg8: memref<32x32xbf16, #tpu.memory_space<vmem>>, %arg9: memref<1x32xf32, #tpu.memory_space<vmem>>, %arg10: memref<32x32xbf16, #tpu.memory_space<vmem>>, %arg11: memref<1x32xf32, #tpu.memory_space<vmem>>, %arg12: memref<32x32xbf16, #tpu.memory_space<vmem>>, %arg13: memref<1x32xf32, #tpu.memory_space<vmem>>, %arg14: memref<32x64xbf16, #tpu.memory_space<vmem>>, %arg15: memref<1x64xf32, #tpu.memory_space<vmem>>, %arg16: memref<64x32xbf16, #tpu.memory_space<vmem>>, %arg17: memref<1x32xf32, #tpu.memory_space<vmem>>, %arg18: memref<1x32xf32, #tpu.memory_space<vmem>>, %arg19: memref<1x32xf32, #tpu.memory_space<vmem>>, %arg20: memref<1x32xf32, #tpu.memory_space<vmem>>, %arg21: memref<1x32xf32, #tpu.memory_space<vmem>>, %arg22: memref<1x8x32xf32, #tpu.memory_space<vmem>>) attributes {dimension_semantics = [#tpu.dimension_semantics<parallel>, #tpu.dimension_semantics<parallel>], iteration_bounds = array<i64: 2, 1>, scalar_prefetch = 0 : i64, scratch_operands = 0 : i64, tpu.core_type = #tpu.core_type<tc>, window_params = [{transform_indices = @transform_0, window_bounds = array<i64: 1, 8, 32>}, {transform_indices = @transform_1, window_bounds = array<i64: 1, 8, 32>}, {transform_indices = @transform_2, window_bounds = array<i64: 1, 8, 32>}, {transform_indices = @transform_3, window_bounds = array<i64: 1, 8, 8>}, {pipeline_mode = #tpu.pipeline_mode<synchronous>, transform_indices = @transform_4, window_bounds = array<i64: 32, 32>}, {pipeline_mode = #tpu.pipeline_mode<synchronous>, transform_indices = @transform_5, window_bounds = array<i64: 1, 32>}, {pipeline_mode = #tpu.pipeline_mode<synchronous>, transform_indices = @transform_6, window_bounds = array<i64: 32, 32>}, {pipeline_mode = #tpu.pipeline_mode<synchronous>, transform_indices = @transform_7, window_bounds = array<i64: 1, 32>}, {pipeline_mode = #tpu.pipeline_mode<synchronous>, transform_indices = @transform_8, window_bounds = array<i64: 32, 32>}, {pipeline_mode = #tpu.pipeline_mode<synchronous>, transform_indices = @transform_9, window_bounds = array<i64: 1, 32>}, {pipeline_mode = #tpu.pipeline_mode<synchronous>, transform_indices = @transform_10, window_bounds = array<i64: 32, 32>}, {pipeline_mode = #tpu.pipeline_mode<synchronous>, transform_indices = @transform_11, window_bounds = array<i64: 1, 32>}, {pipeline_mode = #tpu.pipeline_mode<synchronous>, transform_indices = @transform_12, window_bounds = array<i64: 32, 64>}, {pipeline_mode = #tpu.pipeline_mode<synchronous>, transform_indices = @transform_13, window_bounds = array<i64: 1, 64>}, {pipeline_mode = #tpu.pipeline_mode<synchronous>, transform_indices = @transform_14, window_bounds = array<i64: 64, 32>}, {pipeline_mode = #tpu.pipeline_mode<synchronous>, transform_indices = @transform_15, window_bounds = array<i64: 1, 32>}, {pipeline_mode = #tpu.pipeline_mode<synchronous>, transform_indices = @transform_16, window_bounds = array<i64: 1, 32>}, {pipeline_mode = #tpu.pipeline_mode<synchronous>, transform_indices = @transform_17, window_bounds = array<i64: 1, 32>}, {pipeline_mode = #tpu.pipeline_mode<synchronous>, transform_indices = @transform_18, window_bounds = array<i64: 1, 32>}, {pipeline_mode = #tpu.pipeline_mode<synchronous>, transform_indices = @transform_19, window_bounds = array<i64: 1, 32>}, {transform_indices = @transform_20, window_bounds = array<i64: 1, 8, 32>}]} {
    %c0 = arith.constant 0 : index
    %c0_0 = arith.constant 0 : index
    %c0_1 = arith.constant 0 : index
    %0 = vector.load %arg2[%c0, %c0_0, %c0_1] : memref<1x8x32xf32, #tpu.memory_space<vmem>>, vector<1x8x32xf32>
    %1 = vector.shape_cast %0 : vector<1x8x32xf32> to vector<8x32xf32>
    %2 = arith.truncf %1 : vector<8x32xf32> to vector<8x32xbf16>
    %c0_2 = arith.constant 0 : index
    %c0_3 = arith.constant 0 : index
    %c0_4 = arith.constant 0 : index
    %3 = vector.load %arg3[%c0_2, %c0_3, %c0_4] : memref<1x8x32xbf16, #tpu.memory_space<vmem>>, vector<1x8x32xbf16>
    %4 = vector.shape_cast %3 : vector<1x8x32xbf16> to vector<8x32xbf16>
    %c0_5 = arith.constant 0 : index
    %c0_6 = arith.constant 0 : index
    %c0_7 = arith.constant 0 : index
    %5 = vector.load %arg4[%c0_5, %c0_6, %c0_7] : memref<1x8x32xbf16, #tpu.memory_space<vmem>>, vector<1x8x32xbf16>
    %6 = vector.shape_cast %5 : vector<1x8x32xbf16> to vector<8x32xbf16>
    %c0_8 = arith.constant 0 : index
    %c0_9 = arith.constant 0 : index
    %7 = vector.load %arg6[%c0_8, %c0_9] : memref<32x32xbf16, #tpu.memory_space<vmem>>, vector<32x32xbf16>
    %cst = arith.constant dense<0.000000e+00> : vector<8x32xf32>
    %8 = tpu.matmul %2, %7, %cst {dimension_numbers = #tpu.dot_dimension_numbers<[1], [0], [0], [1], [0, 0, 1, 1], [], []>} : vector<8x32xbf16>, vector<32x32xbf16>, vector<8x32xf32> -> vector<8x32xf32>
    %c0_10 = arith.constant 0 : index
    %c0_11 = arith.constant 0 : index
    %9 = vector.load %arg7[%c0_10, %c0_11] : memref<1x32xf32, #tpu.memory_space<vmem>>, vector<1x32xf32>
    %10 = vector.broadcast %9 : vector<1x32xf32> to vector<8x32xf32>
    %11 = arith.addf %8, %10 : vector<8x32xf32>
    %c0_12 = arith.constant 0 : index
    %c0_13 = arith.constant 0 : index
    %12 = vector.load %arg8[%c0_12, %c0_13] : memref<32x32xbf16, #tpu.memory_space<vmem>>, vector<32x32xbf16>
    %cst_14 = arith.constant dense<0.000000e+00> : vector<8x32xf32>
    %13 = tpu.matmul %4, %12, %cst_14 {dimension_numbers = #tpu.dot_dimension_numbers<[1], [0], [0], [1], [0, 0, 1, 1], [], []>} : vector<8x32xbf16>, vector<32x32xbf16>, vector<8x32xf32> -> vector<8x32xf32>
    %c0_15 = arith.constant 0 : index
    %c0_16 = arith.constant 0 : index
    %14 = vector.load %arg9[%c0_15, %c0_16] : memref<1x32xf32, #tpu.memory_space<vmem>>, vector<1x32xf32>
    %15 = vector.broadcast %14 : vector<1x32xf32> to vector<8x32xf32>
    %16 = arith.addf %13, %15 : vector<8x32xf32>
    %c0_17 = arith.constant 0 : index
    %c0_18 = arith.constant 0 : index
    %17 = vector.load %arg10[%c0_17, %c0_18] : memref<32x32xbf16, #tpu.memory_space<vmem>>, vector<32x32xbf16>
    %cst_19 = arith.constant dense<0.000000e+00> : vector<8x32xf32>
    %18 = tpu.matmul %6, %17, %cst_19 {dimension_numbers = #tpu.dot_dimension_numbers<[1], [0], [0], [1], [0, 0, 1, 1], [], []>} : vector<8x32xbf16>, vector<32x32xbf16>, vector<8x32xf32> -> vector<8x32xf32>
    %c0_20 = arith.constant 0 : index
    %c0_21 = arith.constant 0 : index
    %19 = vector.load %arg11[%c0_20, %c0_21] : memref<1x32xf32, #tpu.memory_space<vmem>>, vector<1x32xf32>
    %20 = vector.broadcast %19 : vector<1x32xf32> to vector<8x32xf32>
    %21 = arith.addf %18, %20 : vector<8x32xf32>
    %c0_22 = arith.constant 0 : index
    %c0_23 = arith.constant 0 : index
    %c0_24 = arith.constant 0 : index
    %22 = vector.load %arg5[%c0_22, %c0_23, %c0_24] : memref<1x8x8xbf16, #tpu.memory_space<vmem>>, vector<1x8x8xbf16>
    %23 = vector.shape_cast %22 : vector<1x8x8xbf16> to vector<8x8xbf16>
    %cst_25 = arith.constant 0.000000e+00 : bf16
    %24 = vector.broadcast %cst_25 : bf16 to vector<8x8xbf16>
    %25 = arith.cmpf oeq, %23, %24 : vector<8x8xbf16>
    %cst_26 = arith.constant -1.000000e+30 : f32
    %cst_27 = arith.constant 0.000000e+00 : f32
    %26 = vector.broadcast %cst_26 : f32 to vector<8x8xf32>
    %27 = vector.broadcast %cst_27 : f32 to vector<8x8xf32>
    %28 = arith.select %25, %26, %27 : vector<8x8xi1>, vector<8x8xf32>
    %29 = vector.shape_cast %11 : vector<8x32xf32> to vector<8x4x8xf32>
    %30 = arith.truncf %29 : vector<8x4x8xf32> to vector<8x4x8xbf16>
    %31 = vector.shape_cast %16 : vector<8x32xf32> to vector<8x4x8xf32>
    %32 = arith.truncf %31 : vector<8x4x8xf32> to vector<8x4x8xbf16>
    %33 = vector.shape_cast %21 : vector<8x32xf32> to vector<8x4x8xf32>
    %34 = arith.truncf %33 : vector<8x4x8xf32> to vector<8x4x8xbf16>
    "tpu.trace_start"() <{level = 10 : i32, message = "qhd,khd->hqk"}> : () -> ()
    %cst_28 = arith.constant dense<0.000000e+00> : vector<4x8x8xf32>
    %35 = tpu.matmul %30, %32, %cst_28 {dimension_numbers = #tpu.dot_dimension_numbers<[2], [2], [0], [0], [0, 1, 0, 0, 1, 0], [1], [1]>} : vector<8x4x8xbf16>, vector<8x4x8xbf16>, vector<4x8x8xf32> -> vector<4x8x8xf32>
    "tpu.trace_stop"() : () -> ()
    %36 = vector.shape_cast %28 : vector<8x8xf32> to vector<1x8x8xf32>
    %37 = vector.broadcast %36 : vector<1x8x8xf32> to vector<4x8x8xf32>
    %38 = arith.addf %35, %37 : vector<4x8x8xf32>
    %cst_29 = arith.constant dense<0xFF800000> : vector<4x8xf32>
    %39 = vector.multi_reduction <maximumf>, %38, %cst_29 [2] : vector<4x8x8xf32> to vector<4x8xf32>
    %40 = vector.shape_cast %39 : vector<4x8xf32> to vector<4x8x1xf32>
    %41 = vector.broadcast %40 : vector<4x8x1xf32> to vector<4x8x8xf32>
    %42 = arith.subf %38, %41 : vector<4x8x8xf32>
    %43 = math.exp %42 : vector<4x8x8xf32>
    %cst_30 = arith.constant dense<0.000000e+00> : vector<4x8xf32>
    %44 = vector.multi_reduction <add>, %43, %cst_30 [2] : vector<4x8x8xf32> to vector<4x8xf32>
    %45 = vector.shape_cast %44 : vector<4x8xf32> to vector<4x8x1xf32>
    %46 = arith.truncf %43 : vector<4x8x8xf32> to vector<4x8x8xbf16>
    "tpu.trace_start"() <{level = 10 : i32, message = "hqk,khd->hqd"}> : () -> ()
    %cst_31 = arith.constant dense<0.000000e+00> : vector<4x8x8xf32>
    %47 = tpu.matmul %46, %34, %cst_31 {dimension_numbers = #tpu.dot_dimension_numbers<[2], [0], [1], [2], [0, 0, 0, 1, 1, 2], [0], [1]>} : vector<4x8x8xbf16>, vector<8x4x8xbf16>, vector<4x8x8xf32> -> vector<4x8x8xf32>
    "tpu.trace_stop"() : () -> ()
    %48 = tpu.reciprocal %45 {approx = true} : vector<4x8x1xf32> -> vector<4x8x1xf32>
    %49 = vector.broadcast %48 : vector<4x8x1xf32> to vector<4x8x8xf32>
    %50 = arith.mulf %47, %49 : vector<4x8x8xf32>
    %51 = tpu.transpose %50, [1, 0, 2] : vector<4x8x8xf32> -> vector<8x4x8xf32>
    %52 = vector.shape_cast %51 : vector<8x4x8xf32> to vector<8x32xf32>
    %53 = arith.truncf %52 : vector<8x32xf32> to vector<8x32xbf16>
    %c0_32 = arith.constant 0 : index
    %c0_33 = arith.constant 0 : index
    %54 = vector.load %arg12[%c0_32, %c0_33] : memref<32x32xbf16, #tpu.memory_space<vmem>>, vector<32x32xbf16>
    %cst_34 = arith.constant dense<0.000000e+00> : vector<8x32xf32>
    %55 = tpu.matmul %53, %54, %cst_34 {dimension_numbers = #tpu.dot_dimension_numbers<[1], [0], [0], [1], [0, 0, 1, 1], [], []>} : vector<8x32xbf16>, vector<32x32xbf16>, vector<8x32xf32> -> vector<8x32xf32>
    %c0_35 = arith.constant 0 : index
    %c0_36 = arith.constant 0 : index
    %56 = vector.load %arg13[%c0_35, %c0_36] : memref<1x32xf32, #tpu.memory_space<vmem>>, vector<1x32xf32>
    %57 = vector.broadcast %56 : vector<1x32xf32> to vector<8x32xf32>
    %58 = arith.addf %55, %57 : vector<8x32xf32>
    %59 = arith.addf %58, %1 : vector<8x32xf32>
    %c0_37 = arith.constant 0 : index
    %c0_38 = arith.constant 0 : index
    %60 = vector.load %arg18[%c0_37, %c0_38] : memref<1x32xf32, #tpu.memory_space<vmem>>, vector<1x32xf32>
    %c0_39 = arith.constant 0 : index
    %c0_40 = arith.constant 0 : index
    %61 = vector.load %arg19[%c0_39, %c0_40] : memref<1x32xf32, #tpu.memory_space<vmem>>, vector<1x32xf32>
    %cst_41 = arith.constant dense<0.000000e+00> : vector<8xf32>
    %62 = vector.multi_reduction <add>, %59, %cst_41 [1] : vector<8x32xf32> to vector<8xf32>
    %63 = vector.shape_cast %62 : vector<8xf32> to vector<8x1xf32>
    %cst_42 = arith.constant 3.200000e+01 : f32
    %64 = vector.broadcast %cst_42 : f32 to vector<8x1xf32>
    %65 = arith.divf %63, %64 : vector<8x1xf32>
    %66 = vector.broadcast %65 : vector<8x1xf32> to vector<8x32xf32>
    %67 = arith.subf %59, %66 : vector<8x32xf32>
    %68 = arith.mulf %67, %67 : vector<8x32xf32>
    %cst_43 = arith.constant dense<0.000000e+00> : vector<8xf32>
    %69 = vector.multi_reduction <add>, %68, %cst_43 [1] : vector<8x32xf32> to vector<8xf32>
    %70 = vector.shape_cast %69 : vector<8xf32> to vector<8x1xf32>
    %cst_44 = arith.constant 3.200000e+01 : f32
    %71 = vector.broadcast %cst_44 : f32 to vector<8x1xf32>
    %72 = arith.divf %70, %71 : vector<8x1xf32>
    %73 = vector.broadcast %65 : vector<8x1xf32> to vector<8x32xf32>
    %74 = arith.subf %59, %73 : vector<8x32xf32>
    %cst_45 = arith.constant 9.99999997E-7 : f32
    %75 = vector.broadcast %cst_45 : f32 to vector<8x1xf32>
    %76 = arith.addf %72, %75 : vector<8x1xf32>
    %77 = math.rsqrt %76 : vector<8x1xf32>
    %78 = vector.broadcast %77 : vector<8x1xf32> to vector<8x32xf32>
    %79 = arith.mulf %74, %78 : vector<8x32xf32>
    %80 = vector.broadcast %60 : vector<1x32xf32> to vector<8x32xf32>
    %81 = arith.mulf %79, %80 : vector<8x32xf32>
    %82 = vector.broadcast %61 : vector<1x32xf32> to vector<8x32xf32>
    %83 = arith.addf %81, %82 : vector<8x32xf32>
    %84 = arith.truncf %83 : vector<8x32xf32> to vector<8x32xbf16>
    %c0_46 = arith.constant 0 : index
    %c0_47 = arith.constant 0 : index
    %85 = vector.load %arg14[%c0_46, %c0_47] : memref<32x64xbf16, #tpu.memory_space<vmem>>, vector<32x64xbf16>
    %cst_48 = arith.constant dense<0.000000e+00> : vector<8x64xf32>
    %86 = tpu.matmul %84, %85, %cst_48 {dimension_numbers = #tpu.dot_dimension_numbers<[1], [0], [0], [1], [0, 0, 1, 1], [], []>} : vector<8x32xbf16>, vector<32x64xbf16>, vector<8x64xf32> -> vector<8x64xf32>
    %c0_49 = arith.constant 0 : index
    %c0_50 = arith.constant 0 : index
    %87 = vector.load %arg15[%c0_49, %c0_50] : memref<1x64xf32, #tpu.memory_space<vmem>>, vector<1x64xf32>
    %88 = vector.broadcast %87 : vector<1x64xf32> to vector<8x64xf32>
    %89 = arith.addf %86, %88 : vector<8x64xf32>
    %cst_51 = arith.constant 0.000000e+00 : f32
    %90 = vector.broadcast %cst_51 : f32 to vector<8x64xf32>
    %91 = arith.maximumf %89, %90 : vector<8x64xf32>
    %92 = arith.truncf %91 : vector<8x64xf32> to vector<8x64xbf16>
    %c0_52 = arith.constant 0 : index
    %c0_53 = arith.constant 0 : index
    %93 = vector.load %arg16[%c0_52, %c0_53] : memref<64x32xbf16, #tpu.memory_space<vmem>>, vector<64x32xbf16>
    %cst_54 = arith.constant dense<0.000000e+00> : vector<8x32xf32>
    %94 = tpu.matmul %92, %93, %cst_54 {dimension_numbers = #tpu.dot_dimension_numbers<[1], [0], [0], [1], [0, 0, 1, 1], [], []>} : vector<8x64xbf16>, vector<64x32xbf16>, vector<8x32xf32> -> vector<8x32xf32>
    %c0_55 = arith.constant 0 : index
    %c0_56 = arith.constant 0 : index
    %95 = vector.load %arg17[%c0_55, %c0_56] : memref<1x32xf32, #tpu.memory_space<vmem>>, vector<1x32xf32>
    %96 = vector.broadcast %95 : vector<1x32xf32> to vector<8x32xf32>
    %97 = arith.addf %94, %96 : vector<8x32xf32>
    %98 = arith.addf %97, %83 : vector<8x32xf32>
    %c0_57 = arith.constant 0 : index
    %c0_58 = arith.constant 0 : index
    %99 = vector.load %arg20[%c0_57, %c0_58] : memref<1x32xf32, #tpu.memory_space<vmem>>, vector<1x32xf32>
    %c0_59 = arith.constant 0 : index
    %c0_60 = arith.constant 0 : index
    %100 = vector.load %arg21[%c0_59, %c0_60] : memref<1x32xf32, #tpu.memory_space<vmem>>, vector<1x32xf32>
    %cst_61 = arith.constant dense<0.000000e+00> : vector<8xf32>
    %101 = vector.multi_reduction <add>, %98, %cst_61 [1] : vector<8x32xf32> to vector<8xf32>
    %102 = vector.shape_cast %101 : vector<8xf32> to vector<8x1xf32>
    %cst_62 = arith.constant 3.200000e+01 : f32
    %103 = vector.broadcast %cst_62 : f32 to vector<8x1xf32>
    %104 = arith.divf %102, %103 : vector<8x1xf32>
    %105 = vector.broadcast %104 : vector<8x1xf32> to vector<8x32xf32>
    %106 = arith.subf %98, %105 : vector<8x32xf32>
    %107 = arith.mulf %106, %106 : vector<8x32xf32>
    %cst_63 = arith.constant dense<0.000000e+00> : vector<8xf32>
    %108 = vector.multi_reduction <add>, %107, %cst_63 [1] : vector<8x32xf32> to vector<8xf32>
    %109 = vector.shape_cast %108 : vector<8xf32> to vector<8x1xf32>
    %cst_64 = arith.constant 3.200000e+01 : f32
    %110 = vector.broadcast %cst_64 : f32 to vector<8x1xf32>
    %111 = arith.divf %109, %110 : vector<8x1xf32>
    %112 = vector.broadcast %104 : vector<8x1xf32> to vector<8x32xf32>
    %113 = arith.subf %98, %112 : vector<8x32xf32>
    %cst_65 = arith.constant 9.99999997E-7 : f32
    %114 = vector.broadcast %cst_65 : f32 to vector<8x1xf32>
    %115 = arith.addf %111, %114 : vector<8x1xf32>
    %116 = math.rsqrt %115 : vector<8x1xf32>
    %117 = vector.broadcast %116 : vector<8x1xf32> to vector<8x32xf32>
    %118 = arith.mulf %113, %117 : vector<8x32xf32>
    %119 = vector.broadcast %99 : vector<1x32xf32> to vector<8x32xf32>
    %120 = arith.mulf %118, %119 : vector<8x32xf32>
    %121 = vector.broadcast %100 : vector<1x32xf32> to vector<8x32xf32>
    %122 = arith.addf %120, %121 : vector<8x32xf32>
    %c0_66 = arith.constant 0 : index
    %c0_67 = arith.constant 0 : index
    %c0_68 = arith.constant 0 : index
    %123 = vector.load %arg22[%c0_66, %c0_67, %c0_68] : memref<1x8x32xf32, #tpu.memory_space<vmem>>, vector<1x8x32xf32>
    %124 = vector.shape_cast %123 : vector<1x8x32xf32> to vector<8x32xf32>
    %125 = vector.shape_cast %122 : vector<8x32xf32> to vector<1x8x32xf32>
    tpu.vector_store %arg22[%c0_66, %c0_67, %c0_68], %125 {strides = array<i32>} : memref<1x8x32xf32, #tpu.memory_space<vmem>>, vector<1x8x32xf32>,
    return
  }
  func.func @transform_0(%arg0: i32, %arg1: i32) -> (i32, i32, i32) {
    %c0_i32 = arith.constant 0 : i32
    %c0_i32_0 = arith.constant 0 : i32
    return %arg0, %arg1, %c0_i32 : i32, i32, i32
  }
  func.func @transform_1(%arg0: i32, %arg1: i32) -> (i32, i32, i32) {
    %c0_i32 = arith.constant 0 : i32
    %c0_i32_0 = arith.constant 0 : i32
    %c0_i32_1 = arith.constant 0 : i32
    return %arg0, %c0_i32, %c0_i32_0 : i32, i32, i32
  }
  func.func @transform_2(%arg0: i32, %arg1: i32) -> (i32, i32, i32) {
    %c0_i32 = arith.constant 0 : i32
    %c0_i32_0 = arith.constant 0 : i32
    %c0_i32_1 = arith.constant 0 : i32
    return %arg0, %c0_i32, %c0_i32_0 : i32, i32, i32
  }
  func.func @transform_3(%arg0: i32, %arg1: i32) -> (i32, i32, i32) {
    %c0_i32 = arith.constant 0 : i32
    %c0_i32_0 = arith.constant 0 : i32
    return %arg0, %arg1, %c0_i32 : i32, i32, i32
  }
  func.func @transform_4(%arg0: i32, %arg1: i32) -> (i32, i32) {
    %c0_i32 = arith.constant 0 : i32
    %c0_i32_0 = arith.constant 0 : i32
    %c0_i32_1 = arith.constant 0 : i32
    return %c0_i32, %c0_i32_0 : i32, i32
  }
  func.func @transform_5(%arg0: i32, %arg1: i32) -> (i32, i32) {
    %c0_i32 = arith.constant 0 : i32
    %c0_i32_0 = arith.constant 0 : i32
    %c0_i32_1 = arith.constant 0 : i32
    return %c0_i32, %c0_i32_0 : i32, i32
  }
  func.func @transform_6(%arg0: i32, %arg1: i32) -> (i32, i32) {
    %c0_i32 = arith.constant 0 : i32
    %c0_i32_0 = arith.constant 0 : i32
    %c0_i32_1 = arith.constant 0 : i32
    return %c0_i32, %c0_i32_0 : i32, i32
  }
  func.func @transform_7(%arg0: i32, %arg1: i32) -> (i32, i32) {
    %c0_i32 = arith.constant 0 : i32
    %c0_i32_0 = arith.constant 0 : i32
    %c0_i32_1 = arith.constant 0 : i32
    return %c0_i32, %c0_i32_0 : i32, i32
  }
  func.func @transform_8(%arg0: i32, %arg1: i32) -> (i32, i32) {
    %c0_i32 = arith.constant 0 : i32
    %c0_i32_0 = arith.constant 0 : i32
    %c0_i32_1 = arith.constant 0 : i32
    return %c0_i32, %c0_i32_0 : i32, i32
  }
  func.func @transform_9(%arg0: i32, %arg1: i32) -> (i32, i32) {
    %c0_i32 = arith.constant 0 : i32
    %c0_i32_0 = arith.constant 0 : i32
    %c0_i32_1 = arith.constant 0 : i32
    return %c0_i32, %c0_i32_0 : i32, i32
  }
  func.func @transform_10(%arg0: i32, %arg1: i32) -> (i32, i32) {
    %c0_i32 = arith.constant 0 : i32
    %c0_i32_0 = arith.constant 0 : i32
    %c0_i32_1 = arith.constant 0 : i32
    return %c0_i32, %c0_i32_0 : i32, i32
  }
  func.func @transform_11(%arg0: i32, %arg1: i32) -> (i32, i32) {
    %c0_i32 = arith.constant 0 : i32
    %c0_i32_0 = arith.constant 0 : i32
    %c0_i32_1 = arith.constant 0 : i32
    return %c0_i32, %c0_i32_0 : i32, i32
  }
  func.func @transform_12(%arg0: i32, %arg1: i32) -> (i32, i32) {
    %c0_i32 = arith.constant 0 : i32
    %c0_i32_0 = arith.constant 0 : i32
    %c0_i32_1 = arith.constant 0 : i32
    return %c0_i32, %c0_i32_0 : i32, i32
  }
  func.func @transform_13(%arg0: i32, %arg1: i32) -> (i32, i32) {
    %c0_i32 = arith.constant 0 : i32
    %c0_i32_0 = arith.constant 0 : i32
    %c0_i32_1 = arith.constant 0 : i32
    return %c0_i32, %c0_i32_0 : i32, i32
  }
  func.func @transform_14(%arg0: i32, %arg1: i32) -> (i32, i32) {
    %c0_i32 = arith.constant 0 : i32
    %c0_i32_0 = arith.constant 0 : i32
    %c0_i32_1 = arith.constant 0 : i32
    return %c0_i32, %c0_i32_0 : i32, i32
  }
  func.func @transform_15(%arg0: i32, %arg1: i32) -> (i32, i32) {
    %c0_i32 = arith.constant 0 : i32
    %c0_i32_0 = arith.constant 0 : i32
    %c0_i32_1 = arith.constant 0 : i32
    return %c0_i32, %c0_i32_0 : i32, i32
  }
  func.func @transform_16(%arg0: i32, %arg1: i32) -> (i32, i32) {
    %c0_i32 = arith.constant 0 : i32
    %c0_i32_0 = arith.constant 0 : i32
    %c0_i32_1 = arith.constant 0 : i32
    return %c0_i32, %c0_i32_0 : i32, i32
  }
  func.func @transform_17(%arg0: i32, %arg1: i32) -> (i32, i32) {
    %c0_i32 = arith.constant 0 : i32
    %c0_i32_0 = arith.constant 0 : i32
    %c0_i32_1 = arith.constant 0 : i32
    return %c0_i32, %c0_i32_0 : i32, i32
  }
  func.func @transform_18(%arg0: i32, %arg1: i32) -> (i32, i32) {
    %c0_i32 = arith.constant 0 : i32
    %c0_i32_0 = arith.constant 0 : i32
    %c0_i32_1 = arith.constant 0 : i32
    return %c0_i32, %c0_i32_0 : i32, i32
  }
  func.func @transform_19(%arg0: i32, %arg1: i32) -> (i32, i32) {
    %c0_i32 = arith.constant 0 : i32
    %c0_i32_0 = arith.constant 0 : i32
    %c0_i32_1 = arith.constant 0 : i32
    return %c0_i32, %c0_i32_0 : i32, i32
  }
  func.func @transform_20(%arg0: i32, %arg1: i32) -> (i32, i32, i32) {
    %c0_i32 = arith.constant 0 : i32
    %c0_i32_0 = arith.constant 0 : i32
    return %arg0, %arg1, %c0_i32 : i32, i32, i32
  }
}

module attributes {stable_mosaic.version = 11 : i64} {
  func.func @transformer_block_kernel(%arg0: i32, %arg1: i32, %arg2: memref<1x8x32xf32, #tpu.memory_space<vmem>>, %arg3: memref<1x8x32xbf16, #tpu.memory_space<vmem>>, %arg4: memref<1x8x32xbf16, #tpu.memory_space<vmem>>, %arg5: memref<1x8x8xbf16, #tpu.memory_space<vmem>>, %arg6: memref<32x32xbf16, #tpu.memory_space<vmem>>, %arg7: memref<1x32xf32, #tpu.memory_space<vmem>>, %arg8: memref<32x32xbf16, #tpu.memory_space<vmem>>, %arg9: memref<1x32xf32, #tpu.memory_space<vmem>>, %arg10: memref<32x32xbf16, #tpu.memory_space<vmem>>, %arg11: memref<1x32xf32, #tpu.memory_space<vmem>>, %arg12: memref<32x32xbf16, #tpu.memory_space<vmem>>, %arg13: memref<1x32xf32, #tpu.memory_space<vmem>>, %arg14: memref<32x64xbf16, #tpu.memory_space<vmem>>, %arg15: memref<1x64xf32, #tpu.memory_space<vmem>>, %arg16: memref<64x32xbf16, #tpu.memory_space<vmem>>, %arg17: memref<1x32xf32, #tpu.memory_space<vmem>>, %arg18: memref<1x32xf32, #tpu.memory_space<vmem>>, %arg19: memref<1x32xf32, #tpu.memory_space<vmem>>, %arg20: memref<1x32xf32, #tpu.memory_space<vmem>>, %arg21: memref<1x32xf32, #tpu.memory_space<vmem>>, %arg22: memref<1x8x32xf32, #tpu.memory_space<vmem>>) attributes {dimension_semantics = [#tpu.dimension_semantics<parallel>, #tpu.dimension_semantics<parallel>], iteration_bounds = array<i64: 2, 1>, scalar_prefetch = 0 : i64, scratch_operands = 0 : i64, tpu.core_type = #tpu.core_type<tc>, window_params = [{transform_indices = @transform_0, window_bounds = array<i64: 1, 8, 32>}, {transform_indices = @transform_1, window_bounds = array<i64: 1, 8, 32>}, {transform_indices = @transform_2, window_bounds = array<i64: 1, 8, 32>}, {transform_indices = @transform_3, window_bounds = array<i64: 1, 8, 8>}, {pipeline_mode = #tpu.pipeline_mode<synchronous>, transform_indices = @transform_4, window_bounds = array<i64: 32, 32>}, {pipeline_mode = #tpu.pipeline_mode<synchronous>, transform_indices = @transform_5, window_bounds = array<i64: 1, 32>}, {pipeline_mode = #tpu.pipeline_mode<synchronous>, transform_indices = @transform_6, window_bounds = array<i64: 32, 32>}, {pipeline_mode = #tpu.pipeline_mode<synchronous>, transform_indices = @transform_7, window_bounds = array<i64: 1, 32>}, {pipeline_mode = #tpu.pipeline_mode<synchronous>, transform_indices = @transform_8, window_bounds = array<i64: 32, 32>}, {pipeline_mode = #tpu.pipeline_mode<synchronous>, transform_indices = @transform_9, window_bounds = array<i64: 1, 32>}, {pipeline_mode = #tpu.pipeline_mode<synchronous>, transform_indices = @transform_10, window_bounds = array<i64: 32, 32>}, {pipeline_mode = #tpu.pipeline_mode<synchronous>, transform_indices = @transform_11, window_bounds = array<i64: 1, 32>}, {pipeline_mode = #tpu.pipeline_mode<synchronous>, transform_indices = @transform_12, window_bounds = array<i64: 32, 64>}, {pipeline_mode = #tpu.pipeline_mode<synchronous>, transform_indices = @transform_13, window_bounds = array<i64: 1, 64>}, {pipeline_mode = #tpu.pipeline_mode<synchronous>, transform_indices = @transform_14, window_bounds = array<i64: 64, 32>}, {pipeline_mode = #tpu.pipeline_mode<synchronous>, transform_indices = @transform_15, window_bounds = array<i64: 1, 32>}, {pipeline_mode = #tpu.pipeline_mode<synchronous>, transform_indices = @transform_16, window_bounds = array<i64: 1, 32>}, {pipeline_mode = #tpu.pipeline_mode<synchronous>, transform_indices = @transform_17, window_bounds = array<i64: 1, 32>}, {pipeline_mode = #tpu.pipeline_mode<synchronous>, transform_indices = @transform_18, window_bounds = array<i64: 1, 32>}, {pipeline_mode = #tpu.pipeline_mode<synchronous>, transform_indices = @transform_19, window_bounds = array<i64: 1, 32>}, {transform_indices = @transform_20, window_bounds = array<i64: 1, 8, 32>}]} {
    %c0 = arith.constant 0 : index
    %c0_0 = arith.constant 0 : index
    %c0_1 = arith.constant 0 : index
    %0 = vector.load %arg2[%c0, %c0_0, %c0_1] : memref<1x8x32xf32, #tpu.memory_space<vmem>>, vector<1x8x32xf32>
    %1 = vector.shape_cast %0 : vector<1x8x32xf32> to vector<8x32xf32>
    %2 = arith.truncf %1 : vector<8x32xf32> to vector<8x32xbf16>
    %c0_2 = arith.constant 0 : index
    %c0_3 = arith.constant 0 : index
    %c0_4 = arith.constant 0 : index
    %3 = vector.load %arg3[%c0_2, %c0_3, %c0_4] : memref<1x8x32xbf16, #tpu.memory_space<vmem>>, vector<1x8x32xbf16>
    %4 = vector.shape_cast %3 : vector<1x8x32xbf16> to vector<8x32xbf16>
    %c0_5 = arith.constant 0 : index
    %c0_6 = arith.constant 0 : index
    %c0_7 = arith.constant 0 : index
    %5 = vector.load %arg4[%c0_5, %c0_6, %c0_7] : memref<1x8x32xbf16, #tpu.memory_space<vmem>>, vector<1x8x32xbf16>
    %6 = vector.shape_cast %5 : vector<1x8x32xbf16> to vector<8x32xbf16>
    %c0_8 = arith.constant 0 : index
    %c0_9 = arith.constant 0 : index
    %7 = vector.load %arg6[%c0_8, %c0_9] : memref<32x32xbf16, #tpu.memory_space<vmem>>, vector<32x32xbf16>
    %cst = arith.constant dense<0.000000e+00> : vector<8x32xf32>
    %8 = tpu.matmul %2, %7, %cst {dimension_numbers = #tpu.dot_dimension_numbers<[1], [0], [0], [1], [0, 0, 1, 1], [], []>} : vector<8x32xbf16>, vector<32x32xbf16>, vector<8x32xf32> -> vector<8x32xf32>
    %c0_10 = arith.constant 0 : index
    %c0_11 = arith.constant 0 : index
    %9 = vector.load %arg7[%c0_10, %c0_11] : memref<1x32xf32, #tpu.memory_space<vmem>>, vector<1x32xf32>
    %10 = vector.broadcast %9 : vector<1x32xf32> to vector<8x32xf32>
    %11 = arith.addf %8, %10 : vector<8x32xf32>
    %c0_12 = arith.constant 0 : index
    %c0_13 = arith.constant 0 : index
    %12 = vector.load %arg8[%c0_12, %c0_13] : memref<32x32xbf16, #tpu.memory_space<vmem>>, vector<32x32xbf16>
    %cst_14 = arith.constant dense<0.000000e+00> : vector<8x32xf32>
    %13 = tpu.matmul %4, %12, %cst_14 {dimension_numbers = #tpu.dot_dimension_numbers<[1], [0], [0], [1], [0, 0, 1, 1], [], []>} : vector<8x32xbf16>, vector<32x32xbf16>, vector<8x32xf32> -> vector<8x32xf32>
    %c0_15 = arith.constant 0 : index
    %c0_16 = arith.constant 0 : index
    %14 = vector.load %arg9[%c0_15, %c0_16] : memref<1x32xf32, #tpu.memory_space<vmem>>, vector<1x32xf32>
    %15 = vector.broadcast %14 : vector<1x32xf32> to vector<8x32xf32>
    %16 = arith.addf %13, %15 : vector<8x32xf32>
    %c0_17 = arith.constant 0 : index
    %c0_18 = arith.constant 0 : index
    %17 = vector.load %arg10[%c0_17, %c0_18] : memref<32x32xbf16, #tpu.memory_space<vmem>>, vector<32x32xbf16>
    %cst_19 = arith.constant dense<0.000000e+00> : vector<8x32xf32>
    %18 = tpu.matmul %6, %17, %cst_19 {dimension_numbers = #tpu.dot_dimension_numbers<[1], [0], [0], [1], [0, 0, 1, 1], [], []>} : vector<8x32xbf16>, vector<32x32xbf16>, vector<8x32xf32> -> vector<8x32xf32>
    %c0_20 = arith.constant 0 : index
    %c0_21 = arith.constant 0 : index
    %19 = vector.load %arg11[%c0_20, %c0_21] : memref<1x32xf32, #tpu.memory_space<vmem>>, vector<1x32xf32>
    %20 = vector.broadcast %19 : vector<1x32xf32> to vector<8x32xf32>
    %21 = arith.addf %18, %20 : vector<8x32xf32>
    %c0_22 = arith.constant 0 : index
    %c0_23 = arith.constant 0 : index
    %c0_24 = arith.constant 0 : index
    %22 = vector.load %arg5[%c0_22, %c0_23, %c0_24] : memref<1x8x8xbf16, #tpu.memory_space<vmem>>, vector<1x8x8xbf16>
    %23 = vector.shape_cast %22 : vector<1x8x8xbf16> to vector<8x8xbf16>
    %cst_25 = arith.constant 0.000000e+00 : bf16
    %24 = vector.broadcast %cst_25 : bf16 to vector<8x8xbf16>
    %25 = arith.cmpf oeq, %23, %24 : vector<8x8xbf16>
    %cst_26 = arith.constant -1.000000e+30 : f32
    %cst_27 = arith.constant 0.000000e+00 : f32
    %26 = vector.broadcast %cst_26 : f32 to vector<8x8xf32>
    %27 = vector.broadcast %cst_27 : f32 to vector<8x8xf32>
    %28 = arith.select %25, %26, %27 : vector<8x8xi1>, vector<8x8xf32>
    %29 = vector.shape_cast %11 : vector<8x32xf32> to vector<8x4x8xf32>
    %30 = arith.truncf %29 : vector<8x4x8xf32> to vector<8x4x8xbf16>
    %31 = vector.shape_cast %16 : vector<8x32xf32> to vector<8x4x8xf32>
    %32 = arith.truncf %31 : vector<8x4x8xf32> to vector<8x4x8xbf16>
    %33 = vector.shape_cast %21 : vector<8x32xf32> to vector<8x4x8xf32>
    %34 = arith.truncf %33 : vector<8x4x8xf32> to vector<8x4x8xbf16>
    "tpu.trace_start"() <{level = 10 : i32, message = "qhd,khd->hqk"}> : () -> ()
    %cst_28 = arith.constant dense<0.000000e+00> : vector<4x8x8xf32>
    %35 = tpu.matmul %30, %32, %cst_28 {dimension_numbers = #tpu.dot_dimension_numbers<[2], [2], [0], [0], [0, 1, 0, 0, 1, 0], [1], [1]>} : vector<8x4x8xbf16>, vector<8x4x8xbf16>, vector<4x8x8xf32> -> vector<4x8x8xf32>
    "tpu.trace_stop"() : () -> ()
    %36 = vector.shape_cast %28 : vector<8x8xf32> to vector<1x8x8xf32>
    %37 = vector.broadcast %36 : vector<1x8x8xf32> to vector<4x8x8xf32>
    %38 = arith.addf %35, %37 : vector<4x8x8xf32>
    %cst_29 = arith.constant dense<0xFF800000> : vector<4x8xf32>
    %39 = vector.multi_reduction <maximumf>, %38, %cst_29 [2] : vector<4x8x8xf32> to vector<4x8xf32>
    %40 = vector.shape_cast %39 : vector<4x8xf32> to vector<4x8x1xf32>
    %41 = vector.broadcast %40 : vector<4x8x1xf32> to vector<4x8x8xf32>
    %42 = arith.subf %38, %41 : vector<4x8x8xf32>
    %43 = math.exp %42 : vector<4x8x8xf32>
    %cst_30 = arith.constant dense<0.000000e+00> : vector<4x8xf32>
    %44 = vector.multi_reduction <add>, %43, %cst_30 [2] : vector<4x8x8xf32> to vector<4x8xf32>
    %45 = vector.shape_cast %44 : vector<4x8xf32> to vector<4x8x1xf32>
    %46 = arith.truncf %43 : vector<4x8x8xf32> to vector<4x8x8xbf16>
    "tpu.trace_start"() <{level = 10 : i32, message = "hqk,khd->hqd"}> : () -> ()
    %cst_31 = arith.constant dense<0.000000e+00> : vector<4x8x8xf32>
    %47 = tpu.matmul %46, %34, %cst_31 {dimension_numbers = #tpu.dot_dimension_numbers<[2], [0], [1], [2], [0, 0, 0, 1, 1, 2], [0], [1]>} : vector<4x8x8xbf16>, vector<8x4x8xbf16>, vector<4x8x8xf32> -> vector<4x8x8xf32>
    "tpu.trace_stop"() : () -> ()
    %48 = tpu.reciprocal %45 {approx = true} : vector<4x8x1xf32> -> vector<4x8x1xf32>
    %49 = vector.broadcast %48 : vector<4x8x1xf32> to vector<4x8x8xf32>
    %50 = arith.mulf %47, %49 : vector<4x8x8xf32>
    %51 = tpu.transpose %50, [1, 0, 2] : vector<4x8x8xf32> -> vector<8x4x8xf32>
    %52 = vector.shape_cast %51 : vector<8x4x8xf32> to vector<8x32xf32>
    %53 = arith.truncf %52 : vector<8x32xf32> to vector<8x32xbf16>
    %c0_32 = arith.constant 0 : index
    %c0_33 = arith.constant 0 : index
    %54 = vector.load %arg12[%c0_32, %c0_33] : memref<32x32xbf16, #tpu.memory_space<vmem>>, vector<32x32xbf16>
    %cst_34 = arith.constant dense<0.000000e+00> : vector<8x32xf32>
    %55 = tpu.matmul %53, %54, %cst_34 {dimension_numbers = #tpu.dot_dimension_numbers<[1], [0], [0], [1], [0, 0, 1, 1], [], []>} : vector<8x32xbf16>, vector<32x32xbf16>, vector<8x32xf32> -> vector<8x32xf32>
    %c0_35 = arith.constant 0 : index
    %c0_36 = arith.constant 0 : index
    %56 = vector.load %arg13[%c0_35, %c0_36] : memref<1x32xf32, #tpu.memory_space<vmem>>, vector<1x32xf32>
    %57 = vector.broadcast %56 : vector<1x32xf32> to vector<8x32xf32>
    %58 = arith.addf %55, %57 : vector<8x32xf32>
    %59 = arith.addf %58, %1 : vector<8x32xf32>
    %c0_37 = arith.constant 0 : index
    %c0_38 = arith.constant 0 : index
    %60 = vector.load %arg18[%c0_37, %c0_38] : memref<1x32xf32, #tpu.memory_space<vmem>>, vector<1x32xf32>
    %c0_39 = arith.constant 0 : index
    %c0_40 = arith.constant 0 : index
    %61 = vector.load %arg19[%c0_39, %c0_40] : memref<1x32xf32, #tpu.memory_space<vmem>>, vector<1x32xf32>
    %cst_41 = arith.constant dense<0.000000e+00> : vector<8xf32>
    %62 = vector.multi_reduction <add>, %59, %cst_41 [1] : vector<8x32xf32> to vector<8xf32>
    %63 = vector.shape_cast %62 : vector<8xf32> to vector<8x1xf32>
    %cst_42 = arith.constant 3.200000e+01 : f32
    %64 = vector.broadcast %cst_42 : f32 to vector<8x1xf32>
    %65 = arith.divf %63, %64 : vector<8x1xf32>
    %66 = vector.broadcast %65 : vector<8x1xf32> to vector<8x32xf32>
    %67 = arith.subf %59, %66 : vector<8x32xf32>
    %68 = arith.mulf %67, %67 : vector<8x32xf32>
    %cst_43 = arith.constant dense<0.000000e+00> : vector<8xf32>
    %69 = vector.multi_reduction <add>, %68, %cst_43 [1] : vector<8x32xf32> to vector<8xf32>
    %70 = vector.shape_cast %69 : vector<8xf32> to vector<8x1xf32>
    %cst_44 = arith.constant 3.200000e+01 : f32
    %71 = vector.broadcast %cst_44 : f32 to vector<8x1xf32>
    %72 = arith.divf %70, %71 : vector<8x1xf32>
    %73 = vector.broadcast %65 : vector<8x1xf32> to vector<8x32xf32>
    %74 = arith.subf %59, %73 : vector<8x32xf32>
    %cst_45 = arith.constant 9.99999997E-7 : f32
    %75 = vector.broadcast %cst_45 : f32 to vector<8x1xf32>
    %76 = arith.addf %72, %75 : vector<8x1xf32>
    %77 = math.rsqrt %76 : vector<8x1xf32>
    %78 = vector.broadcast %77 : vector<8x1xf32> to vector<8x32xf32>
    %79 = arith.mulf %74, %78 : vector<8x32xf32>
    %80 = vector.broadcast %60 : vector<1x32xf32> to vector<8x32xf32>
    %81 = arith.mulf %79, %80 : vector<8x32xf32>
    %82 = vector.broadcast %61 : vector<1x32xf32> to vector<8x32xf32>
    %83 = arith.addf %81, %82 : vector<8x32xf32>
    %84 = arith.truncf %83 : vector<8x32xf32> to vector<8x32xbf16>
    %c0_46 = arith.constant 0 : index
    %c0_47 = arith.constant 0 : index
    %85 = vector.load %arg14[%c0_46, %c0_47] : memref<32x64xbf16, #tpu.memory_space<vmem>>, vector<32x64xbf16>
    %cst_48 = arith.constant dense<0.000000e+00> : vector<8x64xf32>
    %86 = tpu.matmul %84, %85, %cst_48 {dimension_numbers = #tpu.dot_dimension_numbers<[1], [0], [0], [1], [0, 0, 1, 1], [], []>} : vector<8x32xbf16>, vector<32x64xbf16>, vector<8x64xf32> -> vector<8x64xf32>
    %c0_49 = arith.constant 0 : index
    %c0_50 = arith.constant 0 : index
    %87 = vector.load %arg15[%c0_49, %c0_50] : memref<1x64xf32, #tpu.memory_space<vmem>>, vector<1x64xf32>
    %88 = vector.broadcast %87 : vector<1x64xf32> to vector<8x64xf32>
    %89 = arith.addf %86, %88 : vector<8x64xf32>
    %cst_51 = arith.constant 0.000000e+00 : f32
    %90 = vector.broadcast %cst_51 : f32 to vector<8x64xf32>
    %91 = arith.maximumf %89, %90 : vector<8x64xf32>
    %92 = arith.truncf %91 : vector<8x64xf32> to vector<8x64xbf16>
    %c0_52 = arith.constant 0 : index
    %c0_53 = arith.constant 0 : index
    %93 = vector.load %arg16[%c0_52, %c0_53] : memref<64x32xbf16, #tpu.memory_space<vmem>>, vector<64x32xbf16>
    %cst_54 = arith.constant dense<0.000000e+00> : vector<8x32xf32>
    %94 = tpu.matmul %92, %93, %cst_54 {dimension_numbers = #tpu.dot_dimension_numbers<[1], [0], [0], [1], [0, 0, 1, 1], [], []>} : vector<8x64xbf16>, vector<64x32xbf16>, vector<8x32xf32> -> vector<8x32xf32>
    %c0_55 = arith.constant 0 : index
    %c0_56 = arith.constant 0 : index
    %95 = vector.load %arg17[%c0_55, %c0_56] : memref<1x32xf32, #tpu.memory_space<vmem>>, vector<1x32xf32>
    %96 = vector.broadcast %95 : vector<1x32xf32> to vector<8x32xf32>
    %97 = arith.addf %94, %96 : vector<8x32xf32>
    %98 = arith.addf %97, %83 : vector<8x32xf32>
    %c0_57 = arith.constant 0 : index
    %c0_58 = arith.constant 0 : index
    %99 = vector.load %arg20[%c0_57, %c0_58] : memref<1x32xf32, #tpu.memory_space<vmem>>, vector<1x32xf32>
    %c0_59 = arith.constant 0 : index
    %c0_60 = arith.constant 0 : index
    %100 = vector.load %arg21[%c0_59, %c0_60] : memref<1x32xf32, #tpu.memory_space<vmem>>, vector<1x32xf32>
    %cst_61 = arith.constant dense<0.000000e+00> : vector<8xf32>
    %101 = vector.multi_reduction <add>, %98, %cst_61 [1] : vector<8x32xf32> to vector<8xf32>
    %102 = vector.shape_cast %101 : vector<8xf32> to vector<8x1xf32>
    %cst_62 = arith.constant 3.200000e+01 : f32
    %103 = vector.broadcast %cst_62 : f32 to vector<8x1xf32>
    %104 = arith.divf %102, %103 : vector<8x1xf32>
    %105 = vector.broadcast %104 : vector<8x1xf32> to vector<8x32xf32>
    %106 = arith.subf %98, %105 : vector<8x32xf32>
    %107 = arith.mulf %106, %106 : vector<8x32xf32>
    %cst_63 = arith.constant dense<0.000000e+00> : vector<8xf32>
    %108 = vector.multi_reduction <add>, %107, %cst_63 [1] : vector<8x32xf32> to vector<8xf32>
    %109 = vector.shape_cast %108 : vector<8xf32> to vector<8x1xf32>
    %cst_64 = arith.constant 3.200000e+01 : f32
    %110 = vector.broadcast %cst_64 : f32 to vector<8x1xf32>
    %111 = arith.divf %109, %110 : vector<8x1xf32>
    %112 = vector.broadcast %104 : vector<8x1xf32> to vector<8x32xf32>
    %113 = arith.subf %98, %112 : vector<8x32xf32>
    %cst_65 = arith.constant 9.99999997E-7 : f32
    %114 = vector.broadcast %cst_65 : f32 to vector<8x1xf32>
    %115 = arith.addf %111, %114 : vector<8x1xf32>
    %116 = math.rsqrt %115 : vector<8x1xf32>
    %117 = vector.broadcast %116 : vector<8x1xf32> to vector<8x32xf32>
    %118 = arith.mulf %113, %117 : vector<8x32xf32>
    %119 = vector.broadcast %99 : vector<1x32xf32> to vector<8x32xf32>
    %120 = arith.mulf %118, %119 : vector<8x32xf32>
    %121 = vector.broadcast %100 : vector<1x32xf32> to vector<8x32xf32>
    %122 = arith.addf %120, %121 : vector<8x32xf32>
    %c0_66 = arith.constant 0 : index
    %c0_67 = arith.constant 0 : index
    %c0_68 = arith.constant 0 : index
    %123 = vector.load %arg22[%c0_66, %c0_67, %c0_68] : memref<1x8x32xf32, #tpu.memory_space<vmem>>, vector<1x8x32xf32>
    %124 = vector.shape_cast %123 : vector<1x8x32xf32> to vector<8x32xf32>
    %125 = vector.shape_cast %122 : vector<8x32xf32> to vector<1x8x32xf32>
    tpu.vector_store %arg22[%c0_66, %c0_67, %c0_68], %125 {strides = array<i32>} : memref<1x8x32xf32, #tpu.memory_space<vmem>>, vector<1x8x32xf32>,
    return
  }
  func.func @transform_0(%arg0: i32, %arg1: i32) -> (i32, i32, i32) {
    %c0_i32 = arith.constant 0 : i32
    %c0_i32_0 = arith.constant 0 : i32
    return %arg0, %arg1, %c0_i32 : i32, i32, i32
  }
  func.func @transform_1(%arg0: i32, %arg1: i32) -> (i32, i32, i32) {
    %c0_i32 = arith.constant 0 : i32
    %c0_i32_0 = arith.constant 0 : i32
    %c0_i32_1 = arith.constant 0 : i32
    return %arg0, %c0_i32, %c0_i32_0 : i32, i32, i32
  }
  func.func @transform_2(%arg0: i32, %arg1: i32) -> (i32, i32, i32) {
    %c0_i32 = arith.constant 0 : i32
    %c0_i32_0 = arith.constant 0 : i32
    %c0_i32_1 = arith.constant 0 : i32
    return %arg0, %c0_i32, %c0_i32_0 : i32, i32, i32
  }
  func.func @transform_3(%arg0: i32, %arg1: i32) -> (i32, i32, i32) {
    %c0_i32 = arith.constant 0 : i32
    %c0_i32_0 = arith.constant 0 : i32
    return %arg0, %arg1, %c0_i32 : i32, i32, i32
  }
  func.func @transform_4(%arg0: i32, %arg1: i32) -> (i32, i32) {
    %c0_i32 = arith.constant 0 : i32
    %c0_i32_0 = arith.constant 0 : i32
    %c0_i32_1 = arith.constant 0 : i32
    return %c0_i32, %c0_i32_0 : i32, i32
  }
  func.func @transform_5(%arg0: i32, %arg1: i32) -> (i32, i32) {
    %c0_i32 = arith.constant 0 : i32
    %c0_i32_0 = arith.constant 0 : i32
    %c0_i32_1 = arith.constant 0 : i32
    return %c0_i32, %c0_i32_0 : i32, i32
  }
  func.func @transform_6(%arg0: i32, %arg1: i32) -> (i32, i32) {
    %c0_i32 = arith.constant 0 : i32
    %c0_i32_0 = arith.constant 0 : i32
    %c0_i32_1 = arith.constant 0 : i32
    return %c0_i32, %c0_i32_0 : i32, i32
  }
  func.func @transform_7(%arg0: i32, %arg1: i32) -> (i32, i32) {
    %c0_i32 = arith.constant 0 : i32
    %c0_i32_0 = arith.constant 0 : i32
    %c0_i32_1 = arith.constant 0 : i32
    return %c0_i32, %c0_i32_0 : i32, i32
  }
  func.func @transform_8(%arg0: i32, %arg1: i32) -> (i32, i32) {
    %c0_i32 = arith.constant 0 : i32
    %c0_i32_0 = arith.constant 0 : i32
    %c0_i32_1 = arith.constant 0 : i32
    return %c0_i32, %c0_i32_0 : i32, i32
  }
  func.func @transform_9(%arg0: i32, %arg1: i32) -> (i32, i32) {
    %c0_i32 = arith.constant 0 : i32
    %c0_i32_0 = arith.constant 0 : i32
    %c0_i32_1 = arith.constant 0 : i32
    return %c0_i32, %c0_i32_0 : i32, i32
  }
  func.func @transform_10(%arg0: i32, %arg1: i32) -> (i32, i32) {
    %c0_i32 = arith.constant 0 : i32
    %c0_i32_0 = arith.constant 0 : i32
    %c0_i32_1 = arith.constant 0 : i32
    return %c0_i32, %c0_i32_0 : i32, i32
  }
  func.func @transform_11(%arg0: i32, %arg1: i32) -> (i32, i32) {
    %c0_i32 = arith.constant 0 : i32
    %c0_i32_0 = arith.constant 0 : i32
    %c0_i32_1 = arith.constant 0 : i32
    return %c0_i32, %c0_i32_0 : i32, i32
  }
  func.func @transform_12(%arg0: i32, %arg1: i32) -> (i32, i32) {
    %c0_i32 = arith.constant 0 : i32
    %c0_i32_0 = arith.constant 0 : i32
    %c0_i32_1 = arith.constant 0 : i32
    return %c0_i32, %c0_i32_0 : i32, i32
  }
  func.func @transform_13(%arg0: i32, %arg1: i32) -> (i32, i32) {
    %c0_i32 = arith.constant 0 : i32
    %c0_i32_0 = arith.constant 0 : i32
    %c0_i32_1 = arith.constant 0 : i32
    return %c0_i32, %c0_i32_0 : i32, i32
  }
  func.func @transform_14(%arg0: i32, %arg1: i32) -> (i32, i32) {
    %c0_i32 = arith.constant 0 : i32
    %c0_i32_0 = arith.constant 0 : i32
    %c0_i32_1 = arith.constant 0 : i32
    return %c0_i32, %c0_i32_0 : i32, i32
  }
  func.func @transform_15(%arg0: i32, %arg1: i32) -> (i32, i32) {
    %c0_i32 = arith.constant 0 : i32
    %c0_i32_0 = arith.constant 0 : i32
    %c0_i32_1 = arith.constant 0 : i32
    return %c0_i32, %c0_i32_0 : i32, i32
  }
  func.func @transform_16(%arg0: i32, %arg1: i32) -> (i32, i32) {
    %c0_i32 = arith.constant 0 : i32
    %c0_i32_0 = arith.constant 0 : i32
    %c0_i32_1 = arith.constant 0 : i32
    return %c0_i32, %c0_i32_0 : i32, i32
  }
  func.func @transform_17(%arg0: i32, %arg1: i32) -> (i32, i32) {
    %c0_i32 = arith.constant 0 : i32
    %c0_i32_0 = arith.constant 0 : i32
    %c0_i32_1 = arith.constant 0 : i32
    return %c0_i32, %c0_i32_0 : i32, i32
  }
  func.func @transform_18(%arg0: i32, %arg1: i32) -> (i32, i32) {
    %c0_i32 = arith.constant 0 : i32
    %c0_i32_0 = arith.constant 0 : i32
    %c0_i32_1 = arith.constant 0 : i32
    return %c0_i32, %c0_i32_0 : i32, i32
  }
  func.func @transform_19(%arg0: i32, %arg1: i32) -> (i32, i32) {
    %c0_i32 = arith.constant 0 : i32
    %c0_i32_0 = arith.constant 0 : i32
    %c0_i32_1 = arith.constant 0 : i32
    return %c0_i32, %c0_i32_0 : i32, i32
  }
  func.func @transform_20(%arg0: i32, %arg1: i32) -> (i32, i32, i32) {
    %c0_i32 = arith.constant 0 : i32
    %c0_i32_0 = arith.constant 0 : i32
    return %arg0, %arg1, %c0_i32 : i32, i32, i32
  }
}

</mosaic_0001>

<llo_original>
// kernel: tpu_custom_call.1
$region0: #{tpu_custom_call.1}
  #allocation0 [shape = 'u32[]', space=smem, size = 0x4, offset = 0x4, fixed_abs, tag = 'smem constant byte address 0x4 - core index']
  #allocation1 [shape = 'u32[72,128]{1,0:T(1,128)}', space=vmem, size = 0x9000, scoped, tag = 'internal scratch']
  %s0 = inlined_call_operand.vmem [shape: f32[2,8,32], index: 0, kind: input, shape index: {}]
  %s1 = inlined_call_operand.hbm [shape: bf16[2,8,32], index: 1, kind: input, shape index: {}]
  %s2 = inlined_call_operand.hbm [shape: bf16[2,8,32], index: 2, kind: input, shape index: {}]
  %s3 = inlined_call_operand.hbm [shape: bf16[2,8,8], index: 3, kind: input, shape index: {}]
  %s4 = inlined_call_operand.vmem [shape: bf16[32,32], index: 4, kind: input, shape index: {}]
  %s5 = inlined_call_operand.vmem [shape: f32[1,32], index: 5, kind: input, shape index: {}]
  %s6 = inlined_call_operand.vmem [shape: bf16[32,32], index: 6, kind: input, shape index: {}]
  %s7 = inlined_call_operand.vmem [shape: f32[1,32], index: 7, kind: input, shape index: {}]
  %s8 = inlined_call_operand.hbm [shape: bf16[32,32], index: 8, kind: input, shape index: {}]
  %s9 = inlined_call_operand.vmem [shape: f32[1,32], index: 9, kind: input, shape index: {}]
  %s10 = inlined_call_operand.hbm [shape: bf16[32,32], index: 10, kind: input, shape index: {}]
  %s11 = inlined_call_operand.vmem [shape: f32[1,32], index: 11, kind: input, shape index: {}]
  %s12 = inlined_call_operand.hbm [shape: bf16[32,64], index: 12, kind: input, shape index: {}]
  %s13 = inlined_call_operand.vmem [shape: f32[1,64], index: 13, kind: input, shape index: {}]
  %s14 = inlined_call_operand.vmem [shape: bf16[64,32], index: 14, kind: input, shape index: {}]
  %s15 = inlined_call_operand.vmem [shape: f32[1,32], index: 15, kind: input, shape index: {}]
  %s16 = inlined_call_operand.vmem [shape: f32[1,32], index: 16, kind: input, shape index: {}]
  %s17 = inlined_call_operand.vmem [shape: f32[1,32], index: 17, kind: input, shape index: {}]
  %s18 = inlined_call_operand.vmem [shape: f32[1,32], index: 18, kind: input, shape index: {}]
  %s19 = inlined_call_operand.vmem [shape: f32[1,32], index: 19, kind: input, shape index: {}]
  %s20 = inlined_call_operand.hbm [shape: f32[2,8,32], index: 20, kind: output, shape index: {}]
  %s21 = sld [smem:[#allocation0]]
  $region137: #{tpu_custom_call.1} parent=0
    _
  %s23 = ssub.s32 1, %s21
  %s24 = scalar_select 0, %s23, %s21
  $region1: #{tpu_custom_call.1} parent=0
    #allocation2 [shape = 'u8[4096]{0}', space=vmem, size = 0x1000, scoped, tag = 'input window, operand 1']
    #allocation3 [shape = 's32[2]{0}', space=sflag, size = 0x8, scoped, tag = 'scoped memory for tpu_custom_call.1']
    #allocation4 [shape = 's32[2]{0}', space=sflag, size = 0x8, scoped, tag = 'scoped memory for tpu_custom_call.1']
    #allocation5 [shape = 'u8[4096]{0}', space=vmem, size = 0x1000, scoped, tag = 'input window, operand 2']
    #allocation6 [shape = 's32[2]{0}', space=sflag, size = 0x8, scoped, tag = 'scoped memory for tpu_custom_call.1']
    #allocation7 [shape = 'u8[4096]{0}', space=vmem, size = 0x1000, scoped, tag = 'input window, operand 3']
    #allocation8 [shape = 'u8[8192]{0}', space=vmem, size = 0x2000, scoped, tag = 'input window, operand 8, single buffered']
    #allocation9 [shape = 's32[1]{0}', space=sflag, size = 0x4, scoped, tag = 'scoped memory for tpu_custom_call.1']
    #allocation10 [shape = 'u8[8192]{0}', space=vmem, size = 0x2000, scoped, tag = 'input window, operand 10, single buffered']
    #allocation11 [shape = 'u8[8192]{0}', space=vmem, size = 0x2000, scoped, tag = 'input window, operand 12, single buffered']
    #allocation12 [shape = 's32[1]{0}', space=sflag, size = 0x4, scoped, tag = 'scoped memory for tpu_custom_call.1']
    #allocation13 [shape = 'u8[8192]{0}', space=vmem, size = 0x2000, scoped, tag = 'output window, operand 0']
    %25 = vsyncpa [#allocation3], 0
    %s26 = scalar_lea.sflag [#allocation3], 1
    %27 = vsyncpa %s26, 0
    %28 = vsyncpa [#allocation6], 0
    %s29 = scalar_lea.sflag [#allocation6], 1
    %30 = vsyncpa %s29, 0
    %31 = vsyncpa [#allocation9], 0
    %32 = vsyncpa [#allocation12], 0
    %33 = vsyncpa [#allocation4], 0
    %s34 = scalar_lea.sflag [#allocation4], 1
    %35 = vsyncpa %s34, 0
    loop: start=0, step=1, limit=4
    $region2: #{tpu_custom_call.1} parent=1 // loop_pre_header
      _
    $region3: #{tpu_custom_call.1} parent=1 // loop_header
      %s37 = sphi 0, %s41
      %p38 = scmp.ge.s32.totalorder %s37, 4
      %s44 = sphi 0, %s56
      %s45 = sphi 0, %s52
      %s46 = sphi 0, %s44
      %s47 = sphi 0, %s45
      %s48 = sphi 0, %s46
      %s49 = sphi 0, %s47
      %s61 = sphi 0, %s63
      %s64 = sphi 0, %s61
      %s65 = sphi 0, %s64
      %s81 = sphi 0, %s65
      %s87 = sphi 0, %s89
      %s90 = sphi 0, %s87
      %s91 = sphi 0, %s90
      %s107 = sphi 0, %s91
      %s113 = sphi 0, %s115
      %s116 = sphi 0, %s113
      %s117 = sphi 0, %s116
      %s133 = sphi 0, %s117
      %s141 = sphi 0, %s143
      %s144 = sphi 0, %s141
      %s145 = sphi 0, %s144
      %s161 = sphi 0, %s145
      %s165 = sphi 0, %s165
      %s167 = sphi 0, %s165
      %s168 = sphi 0, %s167
      %s182 = sphi 0, %s168
      %s186 = sphi 0, %s186
      %s188 = sphi 0, %s186
      %s189 = sphi 0, %s188
      %s203 = sphi 0, %s189
      %s207 = sphi 0, %s207
      %s209 = sphi 0, %s207
      %s210 = sphi 0, %s209
      %s224 = sphi 0, %s210
      %s228 = sphi 0, %s228
      %s230 = sphi 0, %s228
      %s231 = sphi 0, %s230
      %s245 = sphi 0, %s231
      %s249 = sphi 0, %s249
      %s251 = sphi 0, %s249
      %s252 = sphi 0, %s251
      %s266 = sphi 0, %s252
      %s270 = sphi 0, %s270
      %s272 = sphi 0, %s270
      %s273 = sphi 0, %s272
      %s287 = sphi 0, %s273
      %s291 = sphi 0, %s291
      %s293 = sphi 0, %s291
      %s294 = sphi 0, %s293
      %s308 = sphi 0, %s294
      %s312 = sphi 0, %s312
      %s314 = sphi 0, %s312
      %s315 = sphi 0, %s314
      %s329 = sphi 0, %s315
      %s333 = sphi 0, %s333
      %s335 = sphi 0, %s333
      %s336 = sphi 0, %s335
      %s350 = sphi 0, %s336
      %s354 = sphi 0, %s354
      %s356 = sphi 0, %s354
      %s357 = sphi 0, %s356
      %s371 = sphi 0, %s357
      %s375 = sphi 0, %s375
      %s377 = sphi 0, %s375
      %s378 = sphi 0, %s377
      %s392 = sphi 0, %s378
      %s396 = sphi 0, %s396
      %s398 = sphi 0, %s396
      %s399 = sphi 0, %s398
      %s413 = sphi 0, %s399
      %s417 = sphi 0, %s417
      %s419 = sphi 0, %s417
      %s420 = sphi 0, %s419
      %s434 = sphi 0, %s420
      %s438 = sphi 0, %s438
      %s440 = sphi 0, %s438
      %s441 = sphi 0, %s440
      %s455 = sphi 0, %s441
      %s459 = sphi 0, %s459
      %s461 = sphi 0, %s459
      %s462 = sphi 0, %s461
      %s476 = sphi 0, %s462
      %s480 = sphi 0, %s480
      %s482 = sphi 0, %s480
      %s483 = sphi 0, %s482
      %s497 = sphi 0, %s483
      %s505 = sphi 0, %s507
      %s508 = sphi 0, %s505
      %s509 = sphi 0, %s508
      %s525 = sphi 0, %s509
    $region4: #{tpu_custom_call.1} parent=1 // loop_header_branch
      %40 = sbr.rel (%p38) target = $region8
    $region5: #{tpu_custom_call.1} parent=1 // loop_body
      %s42 = ssub.s32 %s37, 1
      %s43 = ssub.s32 %s37, 2
      %s50 = sadd.s32 1, %s45
      %p51 = scmp.ge.s32.totalorder %s50, 1
      %s52 = scalar_select %p51, 0, %s50
      %s53 = sadd.s32 1, %s44
      %s54 = scalar_select %p51, %s53, %s44
      %p55 = scmp.ge.s32.totalorder %s54, 2
      %s56 = scalar_select %p55, 0, %s54
      %s57 = ssub.s32 %s44, %s56
      %s58 = ssub.s32 %s45, %s52
      %s59 = sor.u32 %s57, %s58
      %p60 = scmp.eq.s32.totalorder %s59, 0
      %s62 = sadd.s32 %s61, 1
      %s63 = scalar_select %p60, %s61, %s62
      %p66 = pneg %p60
      %p67 = scmp.eq.s32.totalorder %s37, 1
      %p68 = por %p66, %p67
      %p69 = scmp.ne.s32.totalorder %s61, %s64
      %p70 = scmp.eq.s32.totalorder %s37, 0
      %p71 = por %p69, %p70
      %p72 = scmp.ne.s32.totalorder %s61, %s64
      %p73 = scmp.eq.s32.totalorder %s42, 1
      %p74 = por %p72, %p73
      %p75 = scmp.ne.s32.totalorder %s64, %s65
      %p76 = scmp.eq.s32.totalorder %s42, 0
      %p77 = por %p75, %p76
      %p78 = scmp.ne.s32.totalorder %s64, %s65
      %p79 = scmp.eq.s32.totalorder %s43, 1
      %p80 = por %p78, %p79
      %p82 = scmp.ne.s32.totalorder %s65, %s81
      %p83 = scmp.eq.s32.totalorder %s43, 0
      %p84 = por %p82, %p83
      %s85 = ssub.s32 %s44, %s56
      %p86 = scmp.eq.s32.totalorder %s85, 0
      %s88 = sadd.s32 %s87, 1
      %s89 = scalar_select %p86, %s87, %s88
      %p92 = pneg %p86
      %p93 = scmp.eq.s32.totalorder %s37, 1
      %p94 = por %p92, %p93
      %p95 = scmp.ne.s32.totalorder %s87, %s90
      %p96 = scmp.eq.s32.totalorder %s37, 0
      %p97 = por %p95, %p96
      %p98 = scmp.ne.s32.totalorder %s87, %s90
      %p99 = scmp.eq.s32.totalorder %s42, 1
      %p100 = por %p98, %p99
      %p101 = scmp.ne.s32.totalorder %s90, %s91
      %p102 = scmp.eq.s32.totalorder %s42, 0
      %p103 = por %p101, %p102
      %p104 = scmp.ne.s32.totalorder %s90, %s91
      %p105 = scmp.eq.s32.totalorder %s43, 1
      %p106 = por %p104, %p105
      %p108 = scmp.ne.s32.totalorder %s91, %s107
      %p109 = scmp.eq.s32.totalorder %s43, 0
      %p110 = por %p108, %p109
      %s111 = ssub.s32 %s44, %s56
      %p112 = scmp.eq.s32.totalorder %s111, 0
      %s114 = sadd.s32 %s113, 1
      %s115 = scalar_select %p112, %s113, %s114
      %p118 = pneg %p112
      %p119 = scmp.eq.s32.totalorder %s37, 1
      %p120 = por %p118, %p119
      %p121 = scmp.ne.s32.totalorder %s113, %s116
      %p122 = scmp.eq.s32.totalorder %s37, 0
      %p123 = por %p121, %p122
      %p124 = scmp.ne.s32.totalorder %s113, %s116
      %p125 = scmp.eq.s32.totalorder %s42, 1
      %p126 = por %p124, %p125
      %p127 = scmp.ne.s32.totalorder %s116, %s117
      %p128 = scmp.eq.s32.totalorder %s42, 0
      %p129 = por %p127, %p128
      %p130 = scmp.ne.s32.totalorder %s116, %s117
      %p131 = scmp.eq.s32.totalorder %s43, 1
      %p132 = por %p130, %p131
      %p134 = scmp.ne.s32.totalorder %s117, %s133
      %p135 = scmp.eq.s32.totalorder %s43, 0
      %p136 = por %p134, %p135
      %s137 = ssub.s32 %s44, %s56
      %s138 = ssub.s32 %s45, %s52
      %s139 = sor.u32 %s137, %s138
      %p140 = scmp.eq.s32.totalorder %s139, 0
      %s142 = sadd.s32 %s141, 1
      %s143 = scalar_select %p140, %s141, %s142
      %p146 = pneg %p140
      %p147 = scmp.eq.s32.totalorder %s37, 1
      %p148 = por %p146, %p147
      %p149 = scmp.ne.s32.totalorder %s141, %s144
      %p150 = scmp.eq.s32.totalorder %s37, 0
      %p151 = por %p149, %p150
      %p152 = scmp.ne.s32.totalorder %s141, %s144
      %p153 = scmp.eq.s32.totalorder %s42, 1
      %p154 = por %p152, %p153
      %p155 = scmp.ne.s32.totalorder %s144, %s145
      %p156 = scmp.eq.s32.totalorder %s42, 0
      %p157 = por %p155, %p156
      %p158 = scmp.ne.s32.totalorder %s144, %s145
      %p159 = scmp.eq.s32.totalorder %s43, 1
      %p160 = por %p158, %p159
      %p162 = scmp.ne.s32.totalorder %s145, %s161
      %p163 = scmp.eq.s32.totalorder %s43, 0
      %p164 = por %p162, %p163
      %s166 = sadd.s32 %s165, 1
      %p169 = scmp.eq.s32.totalorder %s37, 1
      %p170 = scmp.ne.s32.totalorder %s165, %s167
      %p171 = scmp.eq.s32.totalorder %s37, 0
      %p172 = por %p170, %p171
      %p173 = scmp.ne.s32.totalorder %s165, %s167
      %p174 = scmp.eq.s32.totalorder %s42, 1
      %p175 = por %p173, %p174
      %p176 = scmp.ne.s32.totalorder %s167, %s168
      %p177 = scmp.eq.s32.totalorder %s42, 0
      %p178 = por %p176, %p177
      %p179 = scmp.ne.s32.totalorder %s167, %s168
      %p180 = scmp.eq.s32.totalorder %s43, 1
      %p181 = por %p179, %p180
      %p183 = scmp.ne.s32.totalorder %s168, %s182
      %p184 = scmp.eq.s32.totalorder %s43, 0
      %p185 = por %p183, %p184
      %s187 = sadd.s32 %s186, 1
      %p190 = scmp.eq.s32.totalorder %s37, 1
      %p191 = scmp.ne.s32.totalorder %s186, %s188
      %p192 = scmp.eq.s32.totalorder %s37, 0
      %p193 = por %p191, %p192
      %p194 = scmp.ne.s32.totalorder %s186, %s188
      %p195 = scmp.eq.s32.totalorder %s42, 1
      %p196 = por %p194, %p195
      %p197 = scmp.ne.s32.totalorder %s188, %s189
      %p198 = scmp.eq.s32.totalorder %s42, 0
      %p199 = por %p197, %p198
      %p200 = scmp.ne.s32.totalorder %s188, %s189
      %p201 = scmp.eq.s32.totalorder %s43, 1
      %p202 = por %p200, %p201
      %p204 = scmp.ne.s32.totalorder %s189, %s203
      %p205 = scmp.eq.s32.totalorder %s43, 0
      %p206 = por %p204, %p205
      %s208 = sadd.s32 %s207, 1
      %p211 = scmp.eq.s32.totalorder %s37, 1
      %p212 = scmp.ne.s32.totalorder %s207, %s209
      %p213 = scmp.eq.s32.totalorder %s37, 0
      %p214 = por %p212, %p213
      %p215 = scmp.ne.s32.totalorder %s207, %s209
      %p216 = scmp.eq.s32.totalorder %s42, 1
      %p217 = por %p215, %p216
      %p218 = scmp.ne.s32.totalorder %s209, %s210
      %p219 = scmp.eq.s32.totalorder %s42, 0
      %p220 = por %p218, %p219
      %p221 = scmp.ne.s32.totalorder %s209, %s210
      %p222 = scmp.eq.s32.totalorder %s43, 1
      %p223 = por %p221, %p222
      %p225 = scmp.ne.s32.totalorder %s210, %s224
      %p226 = scmp.eq.s32.totalorder %s43, 0
      %p227 = por %p225, %p226
      %s229 = sadd.s32 %s228, 1
      %p232 = scmp.eq.s32.totalorder %s37, 1
      %p233 = scmp.ne.s32.totalorder %s228, %s230
      %p234 = scmp.eq.s32.totalorder %s37, 0
      %p235 = por %p233, %p234
      %p236 = scmp.ne.s32.totalorder %s228, %s230
      %p237 = scmp.eq.s32.totalorder %s42, 1
      %p238 = por %p236, %p237
      %p239 = scmp.ne.s32.totalorder %s230, %s231
      %p240 = scmp.eq.s32.totalorder %s42, 0
      %p241 = por %p239, %p240
      %p242 = scmp.ne.s32.totalorder %s230, %s231
      %p243 = scmp.eq.s32.totalorder %s43, 1
      %p244 = por %p242, %p243
      %p246 = scmp.ne.s32.totalorder %s231, %s245
      %p247 = scmp.eq.s32.totalorder %s43, 0
      %p248 = por %p246, %p247
      %s250 = sadd.s32 %s249, 1
      %p253 = scmp.eq.s32.totalorder %s37, 1
      %p254 = scmp.ne.s32.totalorder %s249, %s251
      %p255 = scmp.eq.s32.totalorder %s37, 0
      %p256 = por %p254, %p255
      %p257 = scmp.ne.s32.totalorder %s249, %s251
      %p258 = scmp.eq.s32.totalorder %s42, 1
      %p259 = por %p257, %p258
      %p260 = scmp.ne.s32.totalorder %s251, %s252
      %p261 = scmp.eq.s32.totalorder %s42, 0
      %p262 = por %p260, %p261
      %p263 = scmp.ne.s32.totalorder %s251, %s252
      %p264 = scmp.eq.s32.totalorder %s43, 1
      %p265 = por %p263, %p264
      %p267 = scmp.ne.s32.totalorder %s252, %s266
      %p268 = scmp.eq.s32.totalorder %s43, 0
      %p269 = por %p267, %p268
      %s271 = sadd.s32 %s270, 1
      %p274 = scmp.eq.s32.totalorder %s37, 1
      %p275 = scmp.ne.s32.totalorder %s270, %s272
      %p276 = scmp.eq.s32.totalorder %s37, 0
      %p277 = por %p275, %p276
      %p278 = scmp.ne.s32.totalorder %s270, %s272
      %p279 = scmp.eq.s32.totalorder %s42, 1
      %p280 = por %p278, %p279
      %p281 = scmp.ne.s32.totalorder %s272, %s273
      %p282 = scmp.eq.s32.totalorder %s42, 0
      %p283 = por %p281, %p282
      %p284 = scmp.ne.s32.totalorder %s272, %s273
      %p285 = scmp.eq.s32.totalorder %s43, 1
      %p286 = por %p284, %p285
      %p288 = scmp.ne.s32.totalorder %s273, %s287
      %p289 = scmp.eq.s32.totalorder %s43, 0
      %p290 = por %p288, %p289
      %s292 = sadd.s32 %s291, 1
      %p295 = scmp.eq.s32.totalorder %s37, 1
      %p296 = scmp.ne.s32.totalorder %s291, %s293
      %p297 = scmp.eq.s32.totalorder %s37, 0
      %p298 = por %p296, %p297
      %p299 = scmp.ne.s32.totalorder %s291, %s293
      %p300 = scmp.eq.s32.totalorder %s42, 1
      %p301 = por %p299, %p300
      %p302 = scmp.ne.s32.totalorder %s293, %s294
      %p303 = scmp.eq.s32.totalorder %s42, 0
      %p304 = por %p302, %p303
      %p305 = scmp.ne.s32.totalorder %s293, %s294
      %p306 = scmp.eq.s32.totalorder %s43, 1
      %p307 = por %p305, %p306
      %p309 = scmp.ne.s32.totalorder %s294, %s308
      %p310 = scmp.eq.s32.totalorder %s43, 0
      %p311 = por %p309, %p310
      %s313 = sadd.s32 %s312, 1
      %p316 = scmp.eq.s32.totalorder %s37, 1
      %p317 = scmp.ne.s32.totalorder %s312, %s314
      %p318 = scmp.eq.s32.totalorder %s37, 0
      %p319 = por %p317, %p318
      %p320 = scmp.ne.s32.totalorder %s312, %s314
      %p321 = scmp.eq.s32.totalorder %s42, 1
      %p322 = por %p320, %p321
      %p323 = scmp.ne.s32.totalorder %s314, %s315
      %p324 = scmp.eq.s32.totalorder %s42, 0
      %p325 = por %p323, %p324
      %p326 = scmp.ne.s32.totalorder %s314, %s315
      %p327 = scmp.eq.s32.totalorder %s43, 1
      %p328 = por %p326, %p327
      %p330 = scmp.ne.s32.totalorder %s315, %s329
      %p331 = scmp.eq.s32.totalorder %s43, 0
      %p332 = por %p330, %p331
      %s334 = sadd.s32 %s333, 1
      %p337 = scmp.eq.s32.totalorder %s37, 1
      %p338 = scmp.ne.s32.totalorder %s333, %s335
      %p339 = scmp.eq.s32.totalorder %s37, 0
      %p340 = por %p338, %p339
      %p341 = scmp.ne.s32.totalorder %s333, %s335
      %p342 = scmp.eq.s32.totalorder %s42, 1
      %p343 = por %p341, %p342
      %p344 = scmp.ne.s32.totalorder %s335, %s336
      %p345 = scmp.eq.s32.totalorder %s42, 0
      %p346 = por %p344, %p345
      %p347 = scmp.ne.s32.totalorder %s335, %s336
      %p348 = scmp.eq.s32.totalorder %s43, 1
      %p349 = por %p347, %p348
      %p351 = scmp.ne.s32.totalorder %s336, %s350
      %p352 = scmp.eq.s32.totalorder %s43, 0
      %p353 = por %p351, %p352
      %s355 = sadd.s32 %s354, 1
      %p358 = scmp.eq.s32.totalorder %s37, 1
      %p359 = scmp.ne.s32.totalorder %s354, %s356
      %p360 = scmp.eq.s32.totalorder %s37, 0
      %p361 = por %p359, %p360
      %p362 = scmp.ne.s32.totalorder %s354, %s356
      %p363 = scmp.eq.s32.totalorder %s42, 1
      %p364 = por %p362, %p363
      %p365 = scmp.ne.s32.totalorder %s356, %s357
      %p366 = scmp.eq.s32.totalorder %s42, 0
      %p367 = por %p365, %p366
      %p368 = scmp.ne.s32.totalorder %s356, %s357
      %p369 = scmp.eq.s32.totalorder %s43, 1
      %p370 = por %p368, %p369
      %p372 = scmp.ne.s32.totalorder %s357, %s371
      %p373 = scmp.eq.s32.totalorder %s43, 0
      %p374 = por %p372, %p373
      %s376 = sadd.s32 %s375, 1
      %p379 = scmp.eq.s32.totalorder %s37, 1
      %p380 = scmp.ne.s32.totalorder %s375, %s377
      %p381 = scmp.eq.s32.totalorder %s37, 0
      %p382 = por %p380, %p381
      %p383 = scmp.ne.s32.totalorder %s375, %s377
      %p384 = scmp.eq.s32.totalorder %s42, 1
      %p385 = por %p383, %p384
      %p386 = scmp.ne.s32.totalorder %s377, %s378
      %p387 = scmp.eq.s32.totalorder %s42, 0
      %p388 = por %p386, %p387
      %p389 = scmp.ne.s32.totalorder %s377, %s378
      %p390 = scmp.eq.s32.totalorder %s43, 1
      %p391 = por %p389, %p390
      %p393 = scmp.ne.s32.totalorder %s378, %s392
      %p394 = scmp.eq.s32.totalorder %s43, 0
      %p395 = por %p393, %p394
      %s397 = sadd.s32 %s396, 1
      %p400 = scmp.eq.s32.totalorder %s37, 1
      %p401 = scmp.ne.s32.totalorder %s396, %s398
      %p402 = scmp.eq.s32.totalorder %s37, 0
      %p403 = por %p401, %p402
      %p404 = scmp.ne.s32.totalorder %s396, %s398
      %p405 = scmp.eq.s32.totalorder %s42, 1
      %p406 = por %p404, %p405
      %p407 = scmp.ne.s32.totalorder %s398, %s399
      %p408 = scmp.eq.s32.totalorder %s42, 0
      %p409 = por %p407, %p408
      %p410 = scmp.ne.s32.totalorder %s398, %s399
      %p411 = scmp.eq.s32.totalorder %s43, 1
      %p412 = por %p410, %p411
      %p414 = scmp.ne.s32.totalorder %s399, %s413
      %p415 = scmp.eq.s32.totalorder %s43, 0
      %p416 = por %p414, %p415
      %s418 = sadd.s32 %s417, 1
      %p421 = scmp.eq.s32.totalorder %s37, 1
      %p422 = scmp.ne.s32.totalorder %s417, %s419
      %p423 = scmp.eq.s32.totalorder %s37, 0
      %p424 = por %p422, %p423
      %p425 = scmp.ne.s32.totalorder %s417, %s419
      %p426 = scmp.eq.s32.totalorder %s42, 1
      %p427 = por %p425, %p426
      %p428 = scmp.ne.s32.totalorder %s419, %s420
      %p429 = scmp.eq.s32.totalorder %s42, 0
      %p430 = por %p428, %p429
      %p431 = scmp.ne.s32.totalorder %s419, %s420
      %p432 = scmp.eq.s32.totalorder %s43, 1
      %p433 = por %p431, %p432
      %p435 = scmp.ne.s32.totalorder %s420, %s434
      %p436 = scmp.eq.s32.totalorder %s43, 0
      %p437 = por %p435, %p436
      %s439 = sadd.s32 %s438, 1
      %p442 = scmp.eq.s32.totalorder %s37, 1
      %p443 = scmp.ne.s32.totalorder %s438, %s440
      %p444 = scmp.eq.s32.totalorder %s37, 0
      %p445 = por %p443, %p444
      %p446 = scmp.ne.s32.totalorder %s438, %s440
      %p447 = scmp.eq.s32.totalorder %s42, 1
      %p448 = por %p446, %p447
      %p449 = scmp.ne.s32.totalorder %s440, %s441
      %p450 = scmp.eq.s32.totalorder %s42, 0
      %p451 = por %p449, %p450
      %p452 = scmp.ne.s32.totalorder %s440, %s441
      %p453 = scmp.eq.s32.totalorder %s43, 1
      %p454 = por %p452, %p453
      %p456 = scmp.ne.s32.totalorder %s441, %s455
      %p457 = scmp.eq.s32.totalorder %s43, 0
      %p458 = por %p456, %p457
      %s460 = sadd.s32 %s459, 1
      %p463 = scmp.eq.s32.totalorder %s37, 1
      %p464 = scmp.ne.s32.totalorder %s459, %s461
      %p465 = scmp.eq.s32.totalorder %s37, 0
      %p466 = por %p464, %p465
      %p467 = scmp.ne.s32.totalorder %s459, %s461
      %p468 = scmp.eq.s32.totalorder %s42, 1
      %p469 = por %p467, %p468
      %p470 = scmp.ne.s32.totalorder %s461, %s462
      %p471 = scmp.eq.s32.totalorder %s42, 0
      %p472 = por %p470, %p471
      %p473 = scmp.ne.s32.totalorder %s461, %s462
      %p474 = scmp.eq.s32.totalorder %s43, 1
      %p475 = por %p473, %p474
      %p477 = scmp.ne.s32.totalorder %s462, %s476
      %p478 = scmp.eq.s32.totalorder %s43, 0
      %p479 = por %p477, %p478
      %s481 = sadd.s32 %s480, 1
      %p484 = scmp.eq.s32.totalorder %s37, 1
      %p485 = scmp.ne.s32.totalorder %s480, %s482
      %p486 = scmp.eq.s32.totalorder %s37, 0
      %p487 = por %p485, %p486
      %p488 = scmp.ne.s32.totalorder %s480, %s482
      %p489 = scmp.eq.s32.totalorder %s42, 1
      %p490 = por %p488, %p489
      %p491 = scmp.ne.s32.totalorder %s482, %s483
      %p492 = scmp.eq.s32.totalorder %s42, 0
      %p493 = por %p491, %p492
      %p494 = scmp.ne.s32.totalorder %s482, %s483
      %p495 = scmp.eq.s32.totalorder %s43, 1
      %p496 = por %p494, %p495
      %p498 = scmp.ne.s32.totalorder %s483, %s497
      %p499 = scmp.eq.s32.totalorder %s43, 0
      %p500 = por %p498, %p499
      %s501 = ssub.s32 %s44, %s56
      %s502 = ssub.s32 %s45, %s52
      %s503 = sor.u32 %s501, %s502
      %p504 = scmp.eq.s32.totalorder %s503, 0
      %s506 = sadd.s32 %s505, 1
      %s507 = scalar_select %p504, %s505, %s506
      %p510 = pneg %p504
      %p511 = scmp.eq.s32.totalorder %s37, 1
      %p512 = por %p510, %p511
      %p513 = scmp.ne.s32.totalorder %s505, %s508
      %p514 = scmp.eq.s32.totalorder %s37, 0
      %p515 = por %p513, %p514
      %p516 = scmp.ne.s32.totalorder %s505, %s508
      %p517 = scmp.eq.s32.totalorder %s42, 1
      %p518 = por %p516, %p517
      %p519 = scmp.ne.s32.totalorder %s508, %s509
      %p520 = scmp.eq.s32.totalorder %s42, 0
      %p521 = por %p519, %p520
      %p522 = scmp.ne.s32.totalorder %s508, %s509
      %p523 = scmp.eq.s32.totalorder %s43, 1
      %p524 = por %p522, %p523
      %p526 = scmp.ne.s32.totalorder %s509, %s525
      %p527 = scmp.eq.s32.totalorder %s43, 0
      %p528 = por %p526, %p527
      %p529 = scmp.le.s32.totalorder 1, %s37
      %p530 = scmp.lt.s32.totalorder %s37, 3
      %p531 = pnand %p529, %p530
      %p532 = pneg %p531
      // Predicated region
      $region9: #{tpu_custom_call.1} parent=5 // pred_check
        _
      $region10: #{tpu_custom_call.1} parent=5 // pred_check_branch
        %534 = sbr.rel (%p531) target = $region12
      $region11: #{tpu_custom_call.1} parent=5 // pred_region
        %s535 = ssub.s32 %s37, 1
        // Predicated region
        $region13: #{tpu_custom_call.1} parent=11 // pred_check
          %p536 = pneg %p178
        $region14: #{tpu_custom_call.1} parent=11 // pred_check_branch
          %538 = sbr.rel (%p536) target = $region16
        $region15: #{tpu_custom_call.1} parent=11 // pred_region
          _
        $region16: #{tpu_custom_call.1} parent=11 // pred_fallthru
          _
        // Predicated region
        $region17: #{tpu_custom_call.1} parent=11 // pred_check
          %p539 = pneg %p199
        $region18: #{tpu_custom_call.1} parent=11 // pred_check_branch
          %541 = sbr.rel (%p539) target = $region20
        $region19: #{tpu_custom_call.1} parent=11 // pred_region
          _
        $region20: #{tpu_custom_call.1} parent=11 // pred_fallthru
          _
        // Predicated region
        $region21: #{tpu_custom_call.1} parent=11 // pred_check
          %p542 = pneg %p220
        $region22: #{tpu_custom_call.1} parent=11 // pred_check_branch
          %544 = sbr.rel (%p542) target = $region24
        $region23: #{tpu_custom_call.1} parent=11 // pred_region
          _
        $region24: #{tpu_custom_call.1} parent=11 // pred_fallthru
          _
        // Predicated region
        $region25: #{tpu_custom_call.1} parent=11 // pred_check
          %p545 = pneg %p241
        $region26: #{tpu_custom_call.1} parent=11 // pred_check_branch
          %547 = sbr.rel (%p545) target = $region28
        $region27: #{tpu_custom_call.1} parent=11 // pred_region
          _
        $region28: #{tpu_custom_call.1} parent=11 // pred_fallthru
          _
        // Predicated region
        $region29: #{tpu_custom_call.1} parent=11 // pred_check
          %p548 = pneg %p262
        $region30: #{tpu_custom_call.1} parent=11 // pred_check_branch
          %550 = sbr.rel (%p548) target = $region32
        $region31: #{tpu_custom_call.1} parent=11 // pred_region
          %552 = vsyncadd [#allocation9], 0
          %s553 = sshll.u32 %s8, 4
          %s554 = int_to_ptr.hbm [resolvable:$true] %s553
          %s555 = sshll.u32 [#allocation8], 4
          %s556 = int_to_ptr.vmem [resolvable:$true] %s555
          %561 = dma.hbm_to_vmem [thread:$0]  %s554, 256, %s556, [#allocation9], 64, 64, 4
        $region32: #{tpu_custom_call.1} parent=11 // pred_fallthru
          _
        // Predicated region
        $region33: #{tpu_custom_call.1} parent=11 // pred_check
          %p562 = pneg %p283
        $region34: #{tpu_custom_call.1} parent=11 // pred_check_branch
          %564 = sbr.rel (%p562) target = $region36
        $region35: #{tpu_custom_call.1} parent=11 // pred_region
          _
        $region36: #{tpu_custom_call.1} parent=11 // pred_fallthru
          _
        // Predicated region
        $region37: #{tpu_custom_call.1} parent=11 // pred_check
          %p565 = pneg %p304
        $region38: #{tpu_custom_call.1} parent=11 // pred_check_branch
          %567 = sbr.rel (%p565) target = $region40
        $region39: #{tpu_custom_call.1} parent=11 // pred_region
          %569 = vsyncadd [#allocation9], 0
          %s570 = sshll.u32 %s10, 4
          %s571 = int_to_ptr.hbm [resolvable:$true] %s570
          %s572 = sshll.u32 [#allocation10], 4
          %s573 = int_to_ptr.vmem [resolvable:$true] %s572
          %578 = dma.hbm_to_vmem [thread:$0]  %s571, 256, %s573, [#allocation9], 64, 64, 4
        $region40: #{tpu_custom_call.1} parent=11 // pred_fallthru
          _
        // Predicated region
        $region41: #{tpu_custom_call.1} parent=11 // pred_check
          %p579 = pneg %p325
        $region42: #{tpu_custom_call.1} parent=11 // pred_check_branch
          %581 = sbr.rel (%p579) target = $region44
        $region43: #{tpu_custom_call.1} parent=11 // pred_region
          _
        $region44: #{tpu_custom_call.1} parent=11 // pred_fallthru
          _
        // Predicated region
        $region45: #{tpu_custom_call.1} parent=11 // pred_check
          %p582 = pneg %p346
        $region46: #{tpu_custom_call.1} parent=11 // pred_check_branch
          %584 = sbr.rel (%p582) target = $region48
        $region47: #{tpu_custom_call.1} parent=11 // pred_region
          %586 = vsyncadd [#allocation12], 0
          %s587 = sshll.u32 %s12, 4
          %s588 = int_to_ptr.hbm [resolvable:$true] %s587
          %s589 = sshll.u32 [#allocation11], 4
          %s590 = int_to_ptr.vmem [resolvable:$true] %s589
          %595 = dma.hbm_to_vmem [thread:$0]  %s588, 256, %s590, [#allocation12], 64, 64, 4
        $region48: #{tpu_custom_call.1} parent=11 // pred_fallthru
          _
        // Predicated region
        $region49: #{tpu_custom_call.1} parent=11 // pred_check
          %p596 = pneg %p367
        $region50: #{tpu_custom_call.1} parent=11 // pred_check_branch
          %598 = sbr.rel (%p596) target = $region52
        $region51: #{tpu_custom_call.1} parent=11 // pred_region
          _
        $region52: #{tpu_custom_call.1} parent=11 // pred_fallthru
          _
        // Predicated region
        $region53: #{tpu_custom_call.1} parent=11 // pred_check
          %p599 = pneg %p388
        $region54: #{tpu_custom_call.1} parent=11 // pred_check_branch
          %601 = sbr.rel (%p599) target = $region56
        $region55: #{tpu_custom_call.1} parent=11 // pred_region
          _
        $region56: #{tpu_custom_call.1} parent=11 // pred_fallthru
          _
        // Predicated region
        $region57: #{tpu_custom_call.1} parent=11 // pred_check
          %p602 = pneg %p409
        $region58: #{tpu_custom_call.1} parent=11 // pred_check_branch
          %604 = sbr.rel (%p602) target = $region60
        $region59: #{tpu_custom_call.1} parent=11 // pred_region
          _
        $region60: #{tpu_custom_call.1} parent=11 // pred_fallthru
          _
        // Predicated region
        $region61: #{tpu_custom_call.1} parent=11 // pred_check
          %p605 = pneg %p430
        $region62: #{tpu_custom_call.1} parent=11 // pred_check_branch
          %607 = sbr.rel (%p605) target = $region64
        $region63: #{tpu_custom_call.1} parent=11 // pred_region
          _
        $region64: #{tpu_custom_call.1} parent=11 // pred_fallthru
          _
        // Predicated region
        $region65: #{tpu_custom_call.1} parent=11 // pred_check
          %p608 = pneg %p451
        $region66: #{tpu_custom_call.1} parent=11 // pred_check_branch
          %610 = sbr.rel (%p608) target = $region68
        $region67: #{tpu_custom_call.1} parent=11 // pred_region
          _
        $region68: #{tpu_custom_call.1} parent=11 // pred_fallthru
          _
        // Predicated region
        $region69: #{tpu_custom_call.1} parent=11 // pred_check
          %p611 = pneg %p472
        $region70: #{tpu_custom_call.1} parent=11 // pred_check_branch
          %613 = sbr.rel (%p611) target = $region72
        $region71: #{tpu_custom_call.1} parent=11 // pred_region
          _
        $region72: #{tpu_custom_call.1} parent=11 // pred_fallthru
          _
        // Predicated region
        $region73: #{tpu_custom_call.1} parent=11 // pred_check
          %p614 = pneg %p493
        $region74: #{tpu_custom_call.1} parent=11 // pred_check_branch
          %616 = sbr.rel (%p614) target = $region76
        $region75: #{tpu_custom_call.1} parent=11 // pred_region
          _
        $region76: #{tpu_custom_call.1} parent=11 // pred_fallthru
          _
      $region12: #{tpu_custom_call.1} parent=5 // pred_fallthru
        _
      %p617 = scmp.lt.s32.totalorder %s37, 2
      // Predicated region
      $region77: #{tpu_custom_call.1} parent=5 // pred_check
        %p618 = pneg %p617
      $region78: #{tpu_custom_call.1} parent=5 // pred_check_branch
        %620 = sbr.rel (%p618) target = $region80
      $region79: #{tpu_custom_call.1} parent=5 // pred_region
        // Predicated region
        $region81: #{tpu_custom_call.1} parent=79 // pred_check
          %p621 = pneg %p71
        $region82: #{tpu_custom_call.1} parent=79 // pred_check_branch
          %623 = sbr.rel (%p621) target = $region84
        $region83: #{tpu_custom_call.1} parent=79 // pred_region
          %p624 = scmp.lt.s32.totalorder %s44, 1
          %s625 = scalar_select %p624, %s44, 1
          %p626 = scmp.lt.s32.totalorder %s45, 0
          %s627 = scalar_select %p626, %s45, 0
          %s628 = sadd.s32 %s627, %s625
          %s629 = smul.addr %s628, 8
          %s630 = scalar_lea.vmem %s0, %s629
        $region84: #{tpu_custom_call.1} parent=79 // pred_fallthru
          _
        // Predicated region
        $region85: #{tpu_custom_call.1} parent=79 // pred_check
          %p631 = pneg %p97
        $region86: #{tpu_custom_call.1} parent=79 // pred_check_branch
          %633 = sbr.rel (%p631) target = $region88
        $region87: #{tpu_custom_call.1} parent=79 // pred_region
          %s634 = sand.u32 %s87, 1
          %s635 = scalar_lea.sflag [#allocation3], %s634
          %s636 = sand.u32 %s87, 1
          %s637 = smul.addr %s636, 4
          %s638 = scalar_lea.vmem [#allocation2], %s637
          %640 = vsyncadd %s635, 0
          %s641 = smul.addr %s44, 4
          %s642 = scalar_lea.hbm %s1, %s641
          %s644 = sshll.u32 %s642, 4
          %s645 = int_to_ptr.hbm [resolvable:$true] %s644
          %s646 = sshll.u32 %s638, 4
          %s647 = int_to_ptr.vmem [resolvable:$true] %s646
          %649 = dma.hbm_to_vmem [thread:$0]  %s645, 64, %s647, %s635
        $region88: #{tpu_custom_call.1} parent=79 // pred_fallthru
          _
        // Predicated region
        $region89: #{tpu_custom_call.1} parent=79 // pred_check
          %p650 = pneg %p123
        $region90: #{tpu_custom_call.1} parent=79 // pred_check_branch
          %652 = sbr.rel (%p650) target = $region92
        $region91: #{tpu_custom_call.1} parent=79 // pred_region
          %s653 = sand.u32 %s37, 1
          %s654 = scalar_lea.sflag [#allocation6], %s653
          %s655 = sand.u32 %s113, 1
          %s656 = smul.addr %s655, 4
          %s657 = scalar_lea.vmem [#allocation5], %s656
          %659 = vsyncadd %s654, 0
          %s660 = smul.addr %s44, 4
          %s661 = scalar_lea.hbm %s2, %s660
          %s663 = sshll.u32 %s661, 4
          %s664 = int_to_ptr.hbm [resolvable:$true] %s663
          %s665 = sshll.u32 %s657, 4
          %s666 = int_to_ptr.vmem [resolvable:$true] %s665
          %668 = dma.hbm_to_vmem [thread:$0]  %s664, 64, %s666, %s654
        $region92: #{tpu_custom_call.1} parent=79 // pred_fallthru
          _
        // Predicated region
        $region93: #{tpu_custom_call.1} parent=79 // pred_check
          %p669 = pneg %p151
        $region94: #{tpu_custom_call.1} parent=79 // pred_check_branch
          %671 = sbr.rel (%p669) target = $region96
        $region95: #{tpu_custom_call.1} parent=79 // pred_region
          %s672 = sand.u32 %s37, 1
          %s673 = scalar_lea.sflag [#allocation6], %s672
          %s674 = sand.u32 %s141, 1
          %s675 = smul.addr %s674, 4
          %s676 = scalar_lea.vmem [#allocation7], %s675
          %678 = vsyncadd %s673, 0
          %s679 = sadd.s32 %s45, %s44
          %s680 = smul.addr %s679, 4
          %s681 = scalar_lea.hbm %s3, %s680
          %s683 = sshll.u32 %s681, 4
          %s684 = int_to_ptr.hbm [resolvable:$true] %s683
          %s685 = sshll.u32 %s676, 4
          %s686 = int_to_ptr.vmem [resolvable:$true] %s685
          %688 = dma.hbm_to_vmem [thread:$0]  %s684, 64, %s686, %s673
        $region96: #{tpu_custom_call.1} parent=79 // pred_fallthru
          _
      $region80: #{tpu_custom_call.1} parent=5 // pred_fallthru
        _
      %p689 = scmp.le.s32.totalorder 1, %s37
      %p690 = scmp.lt.s32.totalorder %s37, 3
      %p691 = pnand %p689, %p690
      %p692 = pneg %p691
      // Predicated region
      $region97: #{tpu_custom_call.1} parent=5 // pred_check
        _
      $region98: #{tpu_custom_call.1} parent=5 // pred_check_branch
        %694 = sbr.rel (%p691) target = $region100
      $region99: #{tpu_custom_call.1} parent=5 // pred_region
        %s695 = ssub.s32 %s37, 1
        %s696 = sand.u32 %s90, 1
        %s697 = scalar_lea.sflag [#allocation3], %s696
        %s698 = sand.u32 %s90, 1
        %s699 = smul.addr %s698, 4
        %s700 = scalar_lea.vmem [#allocation2], %s699
        // Predicated region
        $region101: #{tpu_custom_call.1} parent=99 // pred_check
          %p701 = pneg %p103
        $region102: #{tpu_custom_call.1} parent=99 // pred_check_branch
          %703 = sbr.rel (%p701) target = $region104
        $region103: #{tpu_custom_call.1} parent=99 // pred_region
          %705 = dma.done %s697, 64
        $region104: #{tpu_custom_call.1} parent=99 // pred_fallthru
          _
        %s706 = sand.u32 %s42, 1
        %s707 = scalar_lea.sflag [#allocation6], %s706
        %s708 = sand.u32 %s116, 1
        %s709 = smul.addr %s708, 4
        %s710 = scalar_lea.vmem [#allocation5], %s709
        // Predicated region
        $region105: #{tpu_custom_call.1} parent=99 // pred_check
          %p711 = pneg %p129
        $region106: #{tpu_custom_call.1} parent=99 // pred_check_branch
          %713 = sbr.rel (%p711) target = $region108
        $region107: #{tpu_custom_call.1} parent=99 // pred_region
          %715 = dma.done %s707, 64
        $region108: #{tpu_custom_call.1} parent=99 // pred_fallthru
          _
        %s716 = sand.u32 %s42, 1
        %s717 = scalar_lea.sflag [#allocation6], %s716
        %s718 = sand.u32 %s144, 1
        %s719 = smul.addr %s718, 4
        %s720 = scalar_lea.vmem [#allocation7], %s719
        // Predicated region
        $region109: #{tpu_custom_call.1} parent=99 // pred_check
          %p721 = pneg %p157
        $region110: #{tpu_custom_call.1} parent=99 // pred_check_branch
          %723 = sbr.rel (%p721) target = $region112
        $region111: #{tpu_custom_call.1} parent=99 // pred_region
          %725 = dma.done %s717, 64
        $region112: #{tpu_custom_call.1} parent=99 // pred_fallthru
          _
        // Predicated region
        $region113: #{tpu_custom_call.1} parent=99 // pred_check
          %p726 = pneg %p262
        $region114: #{tpu_custom_call.1} parent=99 // pred_check_branch
          %728 = sbr.rel (%p726) target = $region116
        $region115: #{tpu_custom_call.1} parent=99 // pred_region
          %730 = dma.done [#allocation9], 256
        $region116: #{tpu_custom_call.1} parent=99 // pred_fallthru
          _
        // Predicated region
        $region117: #{tpu_custom_call.1} parent=99 // pred_check
          %p731 = pneg %p304
        $region118: #{tpu_custom_call.1} parent=99 // pred_check_branch
          %733 = sbr.rel (%p731) target = $region120
        $region119: #{tpu_custom_call.1} parent=99 // pred_region
          %735 = dma.done [#allocation9], 256
        $region120: #{tpu_custom_call.1} parent=99 // pred_fallthru
          _
        // Predicated region
        $region121: #{tpu_custom_call.1} parent=99 // pred_check
          %p736 = pneg %p346
        $region122: #{tpu_custom_call.1} parent=99 // pred_check_branch
          %738 = sbr.rel (%p736) target = $region124
        $region123: #{tpu_custom_call.1} parent=99 // pred_region
          %740 = dma.done [#allocation12], 256
        $region124: #{tpu_custom_call.1} parent=99 // pred_fallthru
          _
        %p741 = scmp.lt.s32.totalorder %s46, 1
        %s742 = scalar_select %p741, %s46, 1
        %p743 = scmp.lt.s32.totalorder %s47, 0
        %s744 = scalar_select %p743, %s47, 0
        %s745 = sadd.s32 %s744, %s742
        %s746 = smul.addr %s745, 8
        %s747 = scalar_lea.vmem %s0, %s746
        %p748 = pneg %p77
        %p749 = pneg %p74
        %s750 = sand.u32 %s90, 1
        %s751 = scalar_lea.sflag [#allocation3], %s750
        %s752 = sand.u32 %s90, 1
        %s753 = smul.addr %s752, 4
        %s754 = scalar_lea.vmem [#allocation2], %s753
        %p755 = pneg %p103
        %p756 = pneg %p100
        %s757 = sand.u32 %s42, 1
        %s758 = scalar_lea.sflag [#allocation6], %s757
        %s759 = sand.u32 %s116, 1
        %s760 = smul.addr %s759, 4
        %s761 = scalar_lea.vmem [#allocation5], %s760
        %p762 = pneg %p129
        %p763 = pneg %p126
        %s764 = sand.u32 %s42, 1
        %s765 = scalar_lea.sflag [#allocation6], %s764
        %s766 = sand.u32 %s144, 1
        %s767 = smul.addr %s766, 4
        %s768 = scalar_lea.vmem [#allocation7], %s767
        %p769 = pneg %p157
        %p770 = pneg %p154
        %p771 = pneg %p178
        %p772 = pneg %p175
        %p773 = pneg %p199
        %p774 = pneg %p196
        %p775 = pneg %p220
        %p776 = pneg %p217
        %p777 = pneg %p241
        %p778 = pneg %p238
        %p779 = pneg %p262
        %p780 = pneg %p259
        %p781 = pneg %p283
        %p782 = pneg %p280
        %p783 = pneg %p304
        %p784 = pneg %p301
        %p785 = pneg %p325
        %p786 = pneg %p322
        %p787 = pneg %p346
        %p788 = pneg %p343
        %p789 = pneg %p367
        %p790 = pneg %p364
        %p791 = pneg %p388
        %p792 = pneg %p385
        %p793 = pneg %p409
        %p794 = pneg %p406
        %p795 = pneg %p430
        %p796 = pneg %p427
        %p797 = pneg %p451
        %p798 = pneg %p448
        %p799 = pneg %p472
        %p800 = pneg %p469
        %p801 = pneg %p493
        %p802 = pneg %p490
        %p803 = pneg %p521
        %p804 = pneg %p518
        %s805 = sand.u32 %s508, 1
        %s806 = scalar_lea.sflag [#allocation4], %s805
        %s807 = sand.u32 %s508, 1
        %s808 = smul.addr %s807, 8
        %s809 = scalar_lea.vmem [#allocation13], %s808
        %p810 = scmp.lt.s32.totalorder %s46, 1
        %s811 = scalar_select %p810, %s46, 1
        %p812 = scmp.lt.s32.totalorder %s47, 0
        %s813 = scalar_select %p812, %s47, 0
        %s814 = sadd.s32 %s813, %s811
        %s815 = smul.addr %s814, 8
        %s816 = scalar_lea.vmem %s0, %s815
        %v818 = vld [vmem:[%s816] sm:$0xff]
        %v819 = vpack.c.bf16 %v818, %v818
        %v820 = vld [vmem:[%s700] sm:$0xf]
        %v821 = vld [vmem:[%s710] sm:$0xf]
        %v822 = vld [vmem:[%s4] sm:$0xf]
        %v823 = vld [vmem:[%s4 + $0x4] sm:$0xf]
        %v824 = vld [vmem:[%s4 + $0x8] sm:$0xf]
        %v825 = vld [vmem:[%s4 + $0xc] sm:$0xf]
        %v826 = vld [vmem:[%s5] sm:$0x1]
        %v828 = vperm.slane %v826, 0
        %v834 = vunpack.c.l.b16 %v822
        %v835 = vunpack.c.l.b16 %v823
        %v836 = vunpack.c.l.b16 %v824
        %v837 = vunpack.c.l.b16 %v825
        %v838 = vpack.c.b16 %v835, %v834
        %v839 = vpack.c.b16 %v837, %v836
        %vm842 = vcmask 261120
        %v844 = vsel %vm842, %v819, 0
        %846 = vmatpush.bf16.msra.mxu0 0
        %847 = vmatpush.bf16.msra.mxu0 0
        %848 = vmatpush.bf16.msra.mxu0 0
        %849 = vmatpush.bf16.msra.mxu0 0
        %850 = vmatpush.bf16.msra.mxu0 0
        %851 = vmatpush.bf16.msra.mxu0 0
        %852 = vmatpush.bf16.msra.mxu0 %v839
        %853 = vmatpush.bf16.msra.mxu0 %v838
        %854 = vmatmul.bf16.gmra.mxu0 %v844
        %v855 = vpop.f32.mrf.mxu0
        %v856 = vadd.f32 %v828, %v855
        %v857 = vpop.f32.mrf.mxu0
        %858 = vdwg.mxu0
        %v859 = vld [vmem:[%s6] sm:$0xf]
        %v860 = vld [vmem:[%s6 + $0x4] sm:$0xf]
        %v861 = vld [vmem:[%s6 + $0x8] sm:$0xf]
        %v862 = vld [vmem:[%s6 + $0xc] sm:$0xf]
        %v863 = vld [vmem:[%s7] sm:$0x1]
        %v865 = vperm.slane %v863, 0
        %v871 = vunpack.c.l.b16 %v859
        %v872 = vunpack.c.l.b16 %v860
        %v873 = vunpack.c.l.b16 %v861
        %v874 = vunpack.c.l.b16 %v862
        %v875 = vpack.c.b16 %v872, %v871
        %v876 = vpack.c.b16 %v874, %v873
        %v880 = vsel %vm842, %v820, 0
        %882 = vmatpush.bf16.msra.mxu0 0
        %883 = vmatpush.bf16.msra.mxu0 0
        %884 = vmatpush.bf16.msra.mxu0 0
        %885 = vmatpush.bf16.msra.mxu0 0
        %886 = vmatpush.bf16.msra.mxu0 0
        %887 = vmatpush.bf16.msra.mxu0 0
        %888 = vmatpush.bf16.msra.mxu0 %v876
        %889 = vmatpush.bf16.msra.mxu0 %v875
        %890 = vmatmul.bf16.gmra.mxu0 %v880
        %v891 = vpop.f32.mrf.mxu0
        %v892 = vadd.f32 %v865, %v891
        %v893 = vpop.f32.mrf.mxu0
        %894 = vdwg.mxu0
        %v895 = vld [vmem:[#allocation8] sm:$0xf]
        %v896 = vld [vmem:[#allocation8 + $0x4] sm:$0xf]
        %v897 = vld [vmem:[#allocation8 + $0x8] sm:$0xf]
        %v898 = vld [vmem:[#allocation8 + $0xc] sm:$0xf]
        %v899 = vld [vmem:[%s9] sm:$0x1]
        %v901 = vperm.slane %v899, 0
        %v907 = vunpack.c.l.b16 %v895
        %v908 = vunpack.c.l.b16 %v896
        %v909 = vunpack.c.l.b16 %v897
        %v910 = vunpack.c.l.b16 %v898
        %v911 = vpack.c.b16 %v908, %v907
        %v912 = vpack.c.b16 %v910, %v909
        %v916 = vsel %vm842, %v821, 0
        %918 = vmatpush.bf16.msra.mxu0 0
        %919 = vmatpush.bf16.msra.mxu0 0
        %920 = vmatpush.bf16.msra.mxu0 0
        %921 = vmatpush.bf16.msra.mxu0 0
        %922 = vmatpush.bf16.msra.mxu0 0
        %923 = vmatpush.bf16.msra.mxu0 0
        %924 = vmatpush.bf16.msra.mxu0 %v912
        %925 = vmatpush.bf16.msra.mxu0 %v911
        %926 = vmatmul.bf16.gmra.mxu0 %v916
        %v927 = vpop.f32.mrf.mxu0
        %v928 = vadd.f32 %v901, %v927
        %v929 = vpop.f32.mrf.mxu0
        %930 = vdwg.mxu0
        %v931 = vld [vmem:[%s720] sm:$0xf]
        %v932 = vunpack.c.l.bf16 %v931
        %vm933 = vcmp.eq.f32.partialorder %v932, 0.0
        %v934 = vsel %vm933, -1e+30, 0.0
        %936 = vrot.lane.b32.xlu0 %v856, 120
        %v937 = vpop.permute.xlu0 %936
        %939 = vrot.lane.b32.xlu0 %v856, 112
        %v940 = vpop.permute.xlu0 %939
        %942 = vrot.lane.b32.xlu0 %v856, 104
        %v943 = vpop.permute.xlu0 %942
        %v945 = vrot.slane %v940, 4
        %vm946 = vcmask 1047556
        %v947 = vsel %vm946, %v945, %v856
        %v948 = vrot.slane %v856, 4
        %v949 = vsel %vm946, %v940, %v948
        %v951 = vunpack.c.l.s4 1983009808
        %v952 = vunpack.c.0.s8 %v951
        %v953 = vperm.slane %v947, %v952
        %v955 = vunpack.c.l.s4 1983009808
        %v956 = vunpack.c.0.s8 %v955
        %v957 = vperm.slane %v949, %v956
        %v958 = vrot.slane %v943, 4
        %v959 = vsel %vm946, %v958, %v937
        %v960 = vrot.slane %v937, 4
        %v961 = vsel %vm946, %v943, %v960
        %v963 = vunpack.c.l.s4 1983009808
        %v964 = vunpack.c.0.s8 %v963
        %v965 = vperm.slane %v959, %v964
        %v967 = vunpack.c.l.s4 1983009808
        %v968 = vunpack.c.0.s8 %v967
        %v969 = vperm.slane %v961, %v968
        %v970 = vrot.slane %v965, 4
        %v971 = vsel %vm946, %v970, %v953
        %v972 = vrot.slane %v953, 4
        %v973 = vsel %vm946, %v965, %v972
        %v975 = vunpack.c.l.s4 1934713408
        %v976 = vunpack.c.0.s8 %v975
        %v977 = vperm.slane %v971, %v976
        %v979 = vunpack.c.l.s4 1934713408
        %v980 = vunpack.c.0.s8 %v979
        %v981 = vperm.slane %v973, %v980
        %v982 = vrot.slane %v969, 4
        %v983 = vsel %vm946, %v982, %v957
        %v984 = vrot.slane %v957, 4
        %v985 = vsel %vm946, %v969, %v984
        %v987 = vunpack.c.l.s4 1934713408
        %v988 = vunpack.c.0.s8 %v987
        %v989 = vperm.slane %v983, %v988
        %v991 = vunpack.c.l.s4 1934713408
        %v992 = vunpack.c.0.s8 %v991
        %v993 = vperm.slane %v985, %v992
        %v994 = vrot.slane %v977, 4
        %v995 = vsel %vm946, 0.0, %v994
        %v996 = vrot.slane %v981, 4
        %v997 = vsel %vm946, 0.0, %v996
        %v998 = vrot.slane %v989, 4
        %v999 = vsel %vm946, 0.0, %v998
        %v1000 = vrot.slane %v993, 4
        %v1001 = vsel %vm946, 0.0, %v1000
        %v1002 = vpack.c.bf16 %v977, %v977
        %v1003 = vpack.c.bf16 %v995, %v995
        %v1004 = vpack.c.bf16 %v981, %v981
        %v1005 = vpack.c.bf16 %v997, %v997
        %v1006 = vpack.c.bf16 %v989, %v989
        %v1007 = vpack.c.bf16 %v999, %v999
        %v1008 = vpack.c.bf16 %v993, %v993
        %v1009 = vpack.c.bf16 %v1001, %v1001
        %1011 = vrot.lane.b32.xlu0 %v892, 120
        %v1012 = vpop.permute.xlu0 %1011
        %1014 = vrot.lane.b32.xlu0 %v892, 112
        %v1015 = vpop.permute.xlu0 %1014
        %1017 = vrot.lane.b32.xlu0 %v892, 104
        %v1018 = vpop.permute.xlu0 %1017
        %v1020 = vrot.slane %v1015, 4
        %v1021 = vsel %vm946, %v1020, %v892
        %v1022 = vrot.slane %v892, 4
        %v1023 = vsel %vm946, %v1015, %v1022
        %v1025 = vunpack.c.l.s4 1983009808
        %v1026 = vunpack.c.0.s8 %v1025
        %v1027 = vperm.slane %v1021, %v1026
        %v1029 = vunpack.c.l.s4 1983009808
        %v1030 = vunpack.c.0.s8 %v1029
        %v1031 = vperm.slane %v1023, %v1030
        %v1032 = vrot.slane %v1018, 4
        %v1033 = vsel %vm946, %v1032, %v1012
        %v1034 = vrot.slane %v1012, 4
        %v1035 = vsel %vm946, %v1018, %v1034
        %v1037 = vunpack.c.l.s4 1983009808
        %v1038 = vunpack.c.0.s8 %v1037
        %v1039 = vperm.slane %v1033, %v1038
        %v1041 = vunpack.c.l.s4 1983009808
        %v1042 = vunpack.c.0.s8 %v1041
        %v1043 = vperm.slane %v1035, %v1042
        %v1044 = vrot.slane %v1039, 4
        %v1045 = vsel %vm946, %v1044, %v1027
        %v1046 = vrot.slane %v1027, 4
        %v1047 = vsel %vm946, %v1039, %v1046
        %v1049 = vunpack.c.l.s4 1934713408
        %v1050 = vunpack.c.0.s8 %v1049
        %v1051 = vperm.slane %v1045, %v1050
        %v1053 = vunpack.c.l.s4 1934713408
        %v1054 = vunpack.c.0.s8 %v1053
        %v1055 = vperm.slane %v1047, %v1054
        %v1056 = vrot.slane %v1043, 4
        %v1057 = vsel %vm946, %v1056, %v1031
        %v1058 = vrot.slane %v1031, 4
        %v1059 = vsel %vm946, %v1043, %v1058
        %v1061 = vunpack.c.l.s4 1934713408
        %v1062 = vunpack.c.0.s8 %v1061
        %v1063 = vperm.slane %v1057, %v1062
        %v1065 = vunpack.c.l.s4 1934713408
        %v1066 = vunpack.c.0.s8 %v1065
        %v1067 = vperm.slane %v1059, %v1066
        %v1068 = vrot.slane %v1051, 4
        %v1069 = vsel %vm946, 0.0, %v1068
        %v1070 = vrot.slane %v1055, 4
        %v1071 = vsel %vm946, 0.0, %v1070
        %v1072 = vrot.slane %v1063, 4
        %v1073 = vsel %vm946, 0.0, %v1072
        %v1074 = vrot.slane %v1067, 4
        %v1075 = vsel %vm946, 0.0, %v1074
        %v1076 = vpack.c.bf16 %v1051, %v1051
        %v1077 = vpack.c.bf16 %v1069, %v1069
        %v1078 = vpack.c.bf16 %v1055, %v1055
        %v1079 = vpack.c.bf16 %v1071, %v1071
        %v1080 = vpack.c.bf16 %v1063, %v1063
        %v1081 = vpack.c.bf16 %v1073, %v1073
        %v1082 = vpack.c.bf16 %v1067, %v1067
        %v1083 = vpack.c.bf16 %v1075, %v1075
        %1085 = vrot.lane.b32.xlu0 %v928, 120
        %v1086 = vpop.permute.xlu0 %1085
        %1088 = vrot.lane.b32.xlu0 %v928, 112
        %v1089 = vpop.permute.xlu0 %1088
        %1091 = vrot.lane.b32.xlu0 %v928, 104
        %v1092 = vpop.permute.xlu0 %1091
        %v1094 = vrot.slane %v1089, 4
        %v1095 = vsel %vm946, %v1094, %v928
        %v1096 = vrot.slane %v928, 4
        %v1097 = vsel %vm946, %v1089, %v1096
        %v1099 = vunpack.c.l.s4 1983009808
        %v1100 = vunpack.c.0.s8 %v1099
        %v1101 = vperm.slane %v1095, %v1100
        %v1103 = vunpack.c.l.s4 1983009808
        %v1104 = vunpack.c.0.s8 %v1103
        %v1105 = vperm.slane %v1097, %v1104
        %v1106 = vrot.slane %v1092, 4
        %v1107 = vsel %vm946, %v1106, %v1086
        %v1108 = vrot.slane %v1086, 4
        %v1109 = vsel %vm946, %v1092, %v1108
        %v1111 = vunpack.c.l.s4 1983009808
        %v1112 = vunpack.c.0.s8 %v1111
        %v1113 = vperm.slane %v1107, %v1112
        %v1115 = vunpack.c.l.s4 1983009808
        %v1116 = vunpack.c.0.s8 %v1115
        %v1117 = vperm.slane %v1109, %v1116
        %v1118 = vrot.slane %v1113, 4
        %v1119 = vsel %vm946, %v1118, %v1101
        %v1120 = vrot.slane %v1101, 4
        %v1121 = vsel %vm946, %v1113, %v1120
        %v1123 = vunpack.c.l.s4 1934713408
        %v1124 = vunpack.c.0.s8 %v1123
        %v1125 = vperm.slane %v1119, %v1124
        %v1127 = vunpack.c.l.s4 1934713408
        %v1128 = vunpack.c.0.s8 %v1127
        %v1129 = vperm.slane %v1121, %v1128
        %v1130 = vrot.slane %v1117, 4
        %v1131 = vsel %vm946, %v1130, %v1105
        %v1132 = vrot.slane %v1105, 4
        %v1133 = vsel %vm946, %v1117, %v1132
        %v1135 = vunpack.c.l.s4 1934713408
        %v1136 = vunpack.c.0.s8 %v1135
        %v1137 = vperm.slane %v1131, %v1136
        %v1139 = vunpack.c.l.s4 1934713408
        %v1140 = vunpack.c.0.s8 %v1139
        %v1141 = vperm.slane %v1133, %v1140
        %v1142 = vrot.slane %v1125, 4
        %v1143 = vsel %vm946, 0.0, %v1142
        %v1144 = vrot.slane %v1129, 4
        %v1145 = vsel %vm946, 0.0, %v1144
        %v1146 = vrot.slane %v1137, 4
        %v1147 = vsel %vm946, 0.0, %v1146
        %v1148 = vrot.slane %v1141, 4
        %v1149 = vsel %vm946, 0.0, %v1148
        %v1150 = vpack.c.bf16 %v1125, %v1125
        %v1151 = vpack.c.bf16 %v1143, %v1143
        %v1152 = vpack.c.bf16 %v1129, %v1129
        %v1153 = vpack.c.bf16 %v1145, %v1145
        %v1154 = vpack.c.bf16 %v1137, %v1137
        %v1155 = vpack.c.bf16 %v1147, %v1147
        %v1156 = vpack.c.bf16 %v1141, %v1141
        %v1157 = vpack.c.bf16 %v1149, %v1149
        %v1158 = vrot.slane %v1006, 4
        %vm1159 = vcmask 1047556
        %v1160 = vsel %vm1159, %v1158, %v1002
        %v1162 = vunpack.c.l.s4 1983009808
        %v1163 = vunpack.c.0.s8 %v1162
        %v1164 = vperm.slane %v1160, %v1163
        %v1165 = vrot.slane %v1008, 4
        %v1166 = vsel %vm1159, %v1165, %v1004
        %v1168 = vunpack.c.l.s4 1983009808
        %v1169 = vunpack.c.0.s8 %v1168
        %v1170 = vperm.slane %v1166, %v1169
        %v1171 = vrot.slane %v1170, 4
        %v1172 = vsel %vm1159, %v1171, %v1164
        %v1174 = vunpack.c.l.s4 1934713408
        %v1175 = vunpack.c.0.s8 %v1174
        %v1176 = vperm.slane %v1172, %v1175
        %v1177 = vrot.slane %v1176, 4
        %v1178 = vsel %vm1159, 0, %v1177
        %v1179 = vrot.slane %v1007, 4
        %v1180 = vsel %vm1159, %v1179, %v1003
        %v1182 = vunpack.c.l.s4 1983009808
        %v1183 = vunpack.c.0.s8 %v1182
        %v1184 = vperm.slane %v1180, %v1183
        %v1185 = vrot.slane %v1009, 4
        %v1186 = vsel %vm1159, %v1185, %v1005
        %v1188 = vunpack.c.l.s4 1983009808
        %v1189 = vunpack.c.0.s8 %v1188
        %v1190 = vperm.slane %v1186, %v1189
        %v1191 = vrot.slane %v1190, 4
        %v1192 = vsel %vm1159, %v1191, %v1184
        %v1194 = vunpack.c.l.s4 1934713408
        %v1195 = vunpack.c.0.s8 %v1194
        %v1196 = vperm.slane %v1192, %v1195
        %v1197 = vrot.slane %v1196, 4
        %v1198 = vsel %vm1159, 0, %v1197
        %v1201 = vpack.i.b16 %v1196, %v1176
        %v1202 = vshrl.u32 %v1176, 16
        %v1203 = vshrl.u32 %v1196, 16
        %v1204 = vpack.i.b16 %v1203, %v1202
        %v1207 = vpack.i.b16 %v1198, %v1178
        %v1208 = vshrl.u32 %v1178, 16
        %v1209 = vshrl.u32 %v1198, 16
        %v1210 = vpack.i.b16 %v1209, %v1208
        %1211 = vxpose.xlu0.c.b16.start [1/8] %v1076, 128
        %1212 = vxpose.xlu0.c.b16.cont [2/8] 0, 128
        %1213 = vxpose.xlu0.c.b16.cont [3/8] 0, 128
        %1214 = vxpose.xlu0.c.b16.cont [4/8] 0, 128
        %1215 = vxpose.xlu0.c.b16.cont [5/8] 0, 128
        %1216 = vxpose.xlu0.c.b16.cont [6/8] 0, 128
        %1217 = vxpose.xlu0.c.b16.cont [7/8] 0, 128
        %1218 = vxpose.xlu0.c.b16.end [8/8] 0, 128
        %v1219 = vpop.trf.xlu0
        %v1220 = vpop.trf.xlu0
        %v1221 = vpop.trf.xlu0
        %v1222 = vpop.trf.xlu0
        %v1223 = vpop.trf.xlu0
        %v1224 = vpop.trf.xlu0
        %v1225 = vpop.trf.xlu0
        %v1226 = vpop.trf.xlu0
        %1227 = vxpose.xlu0.c.b16.start [1/8] %v1077, 128
        %1228 = vxpose.xlu0.c.b16.cont [2/8] 0, 128
        %1229 = vxpose.xlu0.c.b16.cont [3/8] 0, 128
        %1230 = vxpose.xlu0.c.b16.cont [4/8] 0, 128
        %1231 = vxpose.xlu0.c.b16.cont [5/8] 0, 128
        %1232 = vxpose.xlu0.c.b16.cont [6/8] 0, 128
        %1233 = vxpose.xlu0.c.b16.cont [7/8] 0, 128
        %1234 = vxpose.xlu0.c.b16.end [8/8] 0, 128
        %v1235 = vpop.trf.xlu0
        %v1236 = vpop.trf.xlu0
        %v1237 = vpop.trf.xlu0
        %v1238 = vpop.trf.xlu0
        %v1239 = vpop.trf.xlu0
        %v1240 = vpop.trf.xlu0
        %v1241 = vpop.trf.xlu0
        %v1242 = vpop.trf.xlu0
        %1243 = vxpose.xlu0.c.b16.start [1/8] %v1078, 128
        %1244 = vxpose.xlu0.c.b16.cont [2/8] 0, 128
        %1245 = vxpose.xlu0.c.b16.cont [3/8] 0, 128
        %1246 = vxpose.xlu0.c.b16.cont [4/8] 0, 128
        %1247 = vxpose.xlu0.c.b16.cont [5/8] 0, 128
        %1248 = vxpose.xlu0.c.b16.cont [6/8] 0, 128
        %1249 = vxpose.xlu0.c.b16.cont [7/8] 0, 128
        %1250 = vxpose.xlu0.c.b16.end [8/8] 0, 128
        %v1251 = vpop.trf.xlu0
        %v1252 = vpop.trf.xlu0
        %v1253 = vpop.trf.xlu0
        %v1254 = vpop.trf.xlu0
        %v1255 = vpop.trf.xlu0
        %v1256 = vpop.trf.xlu0
        %v1257 = vpop.trf.xlu0
        %v1258 = vpop.trf.xlu0
        %1259 = vxpose.xlu0.c.b16.start [1/8] %v1079, 128
        %1260 = vxpose.xlu0.c.b16.cont [2/8] 0, 128
        %1261 = vxpose.xlu0.c.b16.cont [3/8] 0, 128
        %1262 = vxpose.xlu0.c.b16.cont [4/8] 0, 128
        %1263 = vxpose.xlu0.c.b16.cont [5/8] 0, 128
        %1264 = vxpose.xlu0.c.b16.cont [6/8] 0, 128
        %1265 = vxpose.xlu0.c.b16.cont [7/8] 0, 128
        %1266 = vxpose.xlu0.c.b16.end [8/8] 0, 128
        %v1267 = vpop.trf.xlu0
        %v1268 = vpop.trf.xlu0
        %v1269 = vpop.trf.xlu0
        %v1270 = vpop.trf.xlu0
        %v1271 = vpop.trf.xlu0
        %v1272 = vpop.trf.xlu0
        %v1273 = vpop.trf.xlu0
        %v1274 = vpop.trf.xlu0
        %1275 = vxpose.xlu0.c.b16.start [1/8] %v1080, 128
        %1276 = vxpose.xlu0.c.b16.cont [2/8] 0, 128
        %1277 = vxpose.xlu0.c.b16.cont [3/8] 0, 128
        %1278 = vxpose.xlu0.c.b16.cont [4/8] 0, 128
        %1279 = vxpose.xlu0.c.b16.cont [5/8] 0, 128
        %1280 = vxpose.xlu0.c.b16.cont [6/8] 0, 128
        %1281 = vxpose.xlu0.c.b16.cont [7/8] 0, 128
        %1282 = vxpose.xlu0.c.b16.end [8/8] 0, 128
        %v1283 = vpop.trf.xlu0
        %v1284 = vpop.trf.xlu0
        %v1285 = vpop.trf.xlu0
        %v1286 = vpop.trf.xlu0
        %v1287 = vpop.trf.xlu0
        %v1288 = vpop.trf.xlu0
        %v1289 = vpop.trf.xlu0
        %v1290 = vpop.trf.xlu0
        %1291 = vxpose.xlu0.c.b16.start [1/8] %v1081, 128
        %1292 = vxpose.xlu0.c.b16.cont [2/8] 0, 128
        %1293 = vxpose.xlu0.c.b16.cont [3/8] 0, 128
        %1294 = vxpose.xlu0.c.b16.cont [4/8] 0, 128
        %1295 = vxpose.xlu0.c.b16.cont [5/8] 0, 128
        %1296 = vxpose.xlu0.c.b16.cont [6/8] 0, 128
        %1297 = vxpose.xlu0.c.b16.cont [7/8] 0, 128
        %1298 = vxpose.xlu0.c.b16.end [8/8] 0, 128
        %v1299 = vpop.trf.xlu0
        %v1300 = vpop.trf.xlu0
        %v1301 = vpop.trf.xlu0
        %v1302 = vpop.trf.xlu0
        %v1303 = vpop.trf.xlu0
        %v1304 = vpop.trf.xlu0
        %v1305 = vpop.trf.xlu0
        %v1306 = vpop.trf.xlu0
        %1307 = vxpose.xlu0.c.b16.start [1/8] %v1082, 128
        %1308 = vxpose.xlu0.c.b16.cont [2/8] 0, 128
        %1309 = vxpose.xlu0.c.b16.cont [3/8] 0, 128
        %1310 = vxpose.xlu0.c.b16.cont [4/8] 0, 128
        %1311 = vxpose.xlu0.c.b16.cont [5/8] 0, 128
        %1312 = vxpose.xlu0.c.b16.cont [6/8] 0, 128
        %1313 = vxpose.xlu0.c.b16.cont [7/8] 0, 128
        %1314 = vxpose.xlu0.c.b16.end [8/8] 0, 128
        %v1315 = vpop.trf.xlu0
        %v1316 = vpop.trf.xlu0
        %v1317 = vpop.trf.xlu0
        %v1318 = vpop.trf.xlu0
        %v1319 = vpop.trf.xlu0
        %v1320 = vpop.trf.xlu0
        %v1321 = vpop.trf.xlu0
        %v1322 = vpop.trf.xlu0
        %1323 = vxpose.xlu0.c.b16.start [1/8] %v1083, 128
        %1324 = vxpose.xlu0.c.b16.cont [2/8] 0, 128
        %1325 = vxpose.xlu0.c.b16.cont [3/8] 0, 128
        %1326 = vxpose.xlu0.c.b16.cont [4/8] 0, 128
        %1327 = vxpose.xlu0.c.b16.cont [5/8] 0, 128
        %1328 = vxpose.xlu0.c.b16.cont [6/8] 0, 128
        %1329 = vxpose.xlu0.c.b16.cont [7/8] 0, 128
        %1330 = vxpose.xlu0.c.b16.end [8/8] 0, 128
        %v1331 = vpop.trf.xlu0
        %v1332 = vpop.trf.xlu0
        %v1333 = vpop.trf.xlu0
        %v1334 = vpop.trf.xlu0
        %v1335 = vpop.trf.xlu0
        %v1336 = vpop.trf.xlu0
        %v1337 = vpop.trf.xlu0
        %v1338 = vpop.trf.xlu0
        %v1339 = vrot.slane %v1283, 4
        %v1340 = vsel %vm1159, %v1339, %v1219
        %v1342 = vunpack.c.l.s4 1983009808
        %v1343 = vunpack.c.0.s8 %v1342
        %v1344 = vperm.slane %v1340, %v1343
        %v1345 = vrot.slane %v1315, 4
        %v1346 = vsel %vm1159, %v1345, %v1251
        %v1348 = vunpack.c.l.s4 1983009808
        %v1349 = vunpack.c.0.s8 %v1348
        %v1350 = vperm.slane %v1346, %v1349
        %v1351 = vrot.slane %v1350, 4
        %v1352 = vsel %vm1159, %v1351, %v1344
        %v1353 = vrot.slane %v1344, 4
        %v1354 = vsel %vm1159, %v1350, %v1353
        %v1356 = vunpack.c.l.s4 1934713408
        %v1357 = vunpack.c.0.s8 %v1356
        %v1358 = vperm.slane %v1352, %v1357
        %v1360 = vunpack.c.l.s4 1934713408
        %v1361 = vunpack.c.0.s8 %v1360
        %v1362 = vperm.slane %v1354, %v1361
        %v1363 = vrot.slane %v1358, 4
        %v1364 = vsel %vm1159, 0, %v1363
        %v1365 = vrot.slane %v1362, 4
        %v1366 = vsel %vm1159, 0, %v1365
        %v1367 = vrot.slane %v1299, 4
        %v1368 = vsel %vm1159, %v1367, %v1235
        %v1370 = vunpack.c.l.s4 1983009808
        %v1371 = vunpack.c.0.s8 %v1370
        %v1372 = vperm.slane %v1368, %v1371
        %v1373 = vrot.slane %v1331, 4
        %v1374 = vsel %vm1159, %v1373, %v1267
        %v1376 = vunpack.c.l.s4 1983009808
        %v1377 = vunpack.c.0.s8 %v1376
        %v1378 = vperm.slane %v1374, %v1377
        %v1379 = vrot.slane %v1378, 4
        %v1380 = vsel %vm1159, %v1379, %v1372
        %v1381 = vrot.slane %v1372, 4
        %v1382 = vsel %vm1159, %v1378, %v1381
        %v1384 = vunpack.c.l.s4 1934713408
        %v1385 = vunpack.c.0.s8 %v1384
        %v1386 = vperm.slane %v1380, %v1385
        %v1388 = vunpack.c.l.s4 1934713408
        %v1389 = vunpack.c.0.s8 %v1388
        %v1390 = vperm.slane %v1382, %v1389
        %v1391 = vrot.slane %v1386, 4
        %v1392 = vsel %vm1159, 0, %v1391
        %v1393 = vrot.slane %v1390, 4
        %v1394 = vsel %vm1159, 0, %v1393
        %v1397 = vpack.i.b16 %v1386, %v1358
        %v1399 = vshrl.u32 %v1358, 16
        %v1400 = vshrl.u32 %v1386, 16
        %v1401 = vpack.i.b16 %v1400, %v1399
        %v1405 = vpack.i.b16 %v1392, %v1364
        %v1407 = vshrl.u32 %v1364, 16
        %v1408 = vshrl.u32 %v1392, 16
        %v1409 = vpack.i.b16 %v1408, %v1407
        %v1413 = vpack.i.b16 %v1390, %v1362
        %v1415 = vshrl.u32 %v1362, 16
        %v1416 = vshrl.u32 %v1390, 16
        %v1417 = vpack.i.b16 %v1416, %v1415
        %v1421 = vpack.i.b16 %v1394, %v1366
        %v1423 = vshrl.u32 %v1366, 16
        %v1424 = vshrl.u32 %v1394, 16
        %v1425 = vpack.i.b16 %v1424, %v1423
        %1427 = vxpose.xlu0.c.b16.start [1/8] %v1397, 128
        %1428 = vxpose.xlu0.c.b16.cont [2/8] 0, 128
        %1429 = vxpose.xlu0.c.b16.cont [3/8] 0, 128
        %1430 = vxpose.xlu0.c.b16.cont [4/8] 0, 128
        %1431 = vxpose.xlu0.c.b16.cont [5/8] 0, 128
        %1432 = vxpose.xlu0.c.b16.cont [6/8] 0, 128
        %1433 = vxpose.xlu0.c.b16.cont [7/8] 0, 128
        %1434 = vxpose.xlu0.c.b16.end [8/8] 0, 128
        %v1435 = vpop.trf.xlu0
        %v1436 = vpop.trf.xlu0
        %v1437 = vpop.trf.xlu0
        %v1438 = vpop.trf.xlu0
        %v1439 = vpop.trf.xlu0
        %v1440 = vpop.trf.xlu0
        %v1441 = vpop.trf.xlu0
        %v1442 = vpop.trf.xlu0
        %1443 = vxpose.xlu0.c.b16.start [1/8] %v1401, 128
        %1444 = vxpose.xlu0.c.b16.cont [2/8] 0, 128
        %1445 = vxpose.xlu0.c.b16.cont [3/8] 0, 128
        %1446 = vxpose.xlu0.c.b16.cont [4/8] 0, 128
        %1447 = vxpose.xlu0.c.b16.cont [5/8] 0, 128
        %1448 = vxpose.xlu0.c.b16.cont [6/8] 0, 128
        %1449 = vxpose.xlu0.c.b16.cont [7/8] 0, 128
        %1450 = vxpose.xlu0.c.b16.end [8/8] 0, 128
        %v1451 = vpop.trf.xlu0
        %v1452 = vpop.trf.xlu0
        %v1453 = vpop.trf.xlu0
        %v1454 = vpop.trf.xlu0
        %v1455 = vpop.trf.xlu0
        %v1456 = vpop.trf.xlu0
        %v1457 = vpop.trf.xlu0
        %v1458 = vpop.trf.xlu0
        %1459 = vxpose.xlu0.c.b16.start [1/8] %v1405, 128
        %1460 = vxpose.xlu0.c.b16.cont [2/8] 0, 128
        %1461 = vxpose.xlu0.c.b16.cont [3/8] 0, 128
        %1462 = vxpose.xlu0.c.b16.cont [4/8] 0, 128
        %1463 = vxpose.xlu0.c.b16.cont [5/8] 0, 128
        %1464 = vxpose.xlu0.c.b16.cont [6/8] 0, 128
        %1465 = vxpose.xlu0.c.b16.cont [7/8] 0, 128
        %1466 = vxpose.xlu0.c.b16.end [8/8] 0, 128
        %v1467 = vpop.trf.xlu0
        %v1468 = vpop.trf.xlu0
        %v1469 = vpop.trf.xlu0
        %v1470 = vpop.trf.xlu0
        %v1471 = vpop.trf.xlu0
        %v1472 = vpop.trf.xlu0
        %v1473 = vpop.trf.xlu0
        %v1474 = vpop.trf.xlu0
        %1475 = vxpose.xlu0.c.b16.start [1/8] %v1409, 128
        %1476 = vxpose.xlu0.c.b16.cont [2/8] 0, 128
        %1477 = vxpose.xlu0.c.b16.cont [3/8] 0, 128
        %1478 = vxpose.xlu0.c.b16.cont [4/8] 0, 128
        %1479 = vxpose.xlu0.c.b16.cont [5/8] 0, 128
        %1480 = vxpose.xlu0.c.b16.cont [6/8] 0, 128
        %1481 = vxpose.xlu0.c.b16.cont [7/8] 0, 128
        %1482 = vxpose.xlu0.c.b16.end [8/8] 0, 128
        %v1483 = vpop.trf.xlu0
        %v1484 = vpop.trf.xlu0
        %v1485 = vpop.trf.xlu0
        %v1486 = vpop.trf.xlu0
        %v1487 = vpop.trf.xlu0
        %v1488 = vpop.trf.xlu0
        %v1489 = vpop.trf.xlu0
        %v1490 = vpop.trf.xlu0
        %1491 = vxpose.xlu0.c.b16.start [1/8] %v1413, 128
        %1492 = vxpose.xlu0.c.b16.cont [2/8] 0, 128
        %1493 = vxpose.xlu0.c.b16.cont [3/8] 0, 128
        %1494 = vxpose.xlu0.c.b16.cont [4/8] 0, 128
        %1495 = vxpose.xlu0.c.b16.cont [5/8] 0, 128
        %1496 = vxpose.xlu0.c.b16.cont [6/8] 0, 128
        %1497 = vxpose.xlu0.c.b16.cont [7/8] 0, 128
        %1498 = vxpose.xlu0.c.b16.end [8/8] 0, 128
        %v1499 = vpop.trf.xlu0
        %v1500 = vpop.trf.xlu0
        %v1501 = vpop.trf.xlu0
        %v1502 = vpop.trf.xlu0
        %v1503 = vpop.trf.xlu0
        %v1504 = vpop.trf.xlu0
        %v1505 = vpop.trf.xlu0
        %v1506 = vpop.trf.xlu0
        %1507 = vxpose.xlu0.c.b16.start [1/8] %v1417, 128
        %1508 = vxpose.xlu0.c.b16.cont [2/8] 0, 128
        %1509 = vxpose.xlu0.c.b16.cont [3/8] 0, 128
        %1510 = vxpose.xlu0.c.b16.cont [4/8] 0, 128
        %1511 = vxpose.xlu0.c.b16.cont [5/8] 0, 128
        %1512 = vxpose.xlu0.c.b16.cont [6/8] 0, 128
        %1513 = vxpose.xlu0.c.b16.cont [7/8] 0, 128
        %1514 = vxpose.xlu0.c.b16.end [8/8] 0, 128
        %v1515 = vpop.trf.xlu0
        %v1516 = vpop.trf.xlu0
        %v1517 = vpop.trf.xlu0
        %v1518 = vpop.trf.xlu0
        %v1519 = vpop.trf.xlu0
        %v1520 = vpop.trf.xlu0
        %v1521 = vpop.trf.xlu0
        %v1522 = vpop.trf.xlu0
        %1523 = vxpose.xlu0.c.b16.start [1/8] %v1421, 128
        %1524 = vxpose.xlu0.c.b16.cont [2/8] 0, 128
        %1525 = vxpose.xlu0.c.b16.cont [3/8] 0, 128
        %1526 = vxpose.xlu0.c.b16.cont [4/8] 0, 128
        %1527 = vxpose.xlu0.c.b16.cont [5/8] 0, 128
        %1528 = vxpose.xlu0.c.b16.cont [6/8] 0, 128
        %1529 = vxpose.xlu0.c.b16.cont [7/8] 0, 128
        %1530 = vxpose.xlu0.c.b16.end [8/8] 0, 128
        %v1531 = vpop.trf.xlu0
        %v1532 = vpop.trf.xlu0
        %v1533 = vpop.trf.xlu0
        %v1534 = vpop.trf.xlu0
        %v1535 = vpop.trf.xlu0
        %v1536 = vpop.trf.xlu0
        %v1537 = vpop.trf.xlu0
        %v1538 = vpop.trf.xlu0
        %1539 = vxpose.xlu0.c.b16.start [1/8] %v1425, 128
        %1540 = vxpose.xlu0.c.b16.cont [2/8] 0, 128
        %1541 = vxpose.xlu0.c.b16.cont [3/8] 0, 128
        %1542 = vxpose.xlu0.c.b16.cont [4/8] 0, 128
        %1543 = vxpose.xlu0.c.b16.cont [5/8] 0, 128
        %1544 = vxpose.xlu0.c.b16.cont [6/8] 0, 128
        %1545 = vxpose.xlu0.c.b16.cont [7/8] 0, 128
        %1546 = vxpose.xlu0.c.b16.end [8/8] 0, 128
        %v1547 = vpop.trf.xlu0
        %v1548 = vpop.trf.xlu0
        %v1549 = vpop.trf.xlu0
        %v1550 = vpop.trf.xlu0
        %v1551 = vpop.trf.xlu0
        %v1552 = vpop.trf.xlu0
        %v1553 = vpop.trf.xlu0
        %v1554 = vpop.trf.xlu0
        %v1555 = vrot.slane %v1499, 4
        %v1556 = vsel %vm1159, %v1555, %v1435
        %v1558 = vunpack.c.l.s4 1983009808
        %v1559 = vunpack.c.0.s8 %v1558
        %v1560 = vperm.slane %v1556, %v1559
        %v1561 = vrot.slane %v1531, 4
        %v1562 = vsel %vm1159, %v1561, %v1467
        %v1564 = vunpack.c.l.s4 1983009808
        %v1565 = vunpack.c.0.s8 %v1564
        %v1566 = vperm.slane %v1562, %v1565
        %v1567 = vrot.slane %v1566, 4
        %v1568 = vsel %vm1159, %v1567, %v1560
        %v1570 = vunpack.c.l.s4 1934713408
        %v1571 = vunpack.c.0.s8 %v1570
        %v1572 = vperm.slane %v1568, %v1571
        %v1573 = vrot.slane %v1572, 4
        %v1574 = vsel %vm1159, 0, %v1573
        %v1575 = vrot.slane %v1515, 4
        %v1576 = vsel %vm1159, %v1575, %v1451
        %v1578 = vunpack.c.l.s4 1983009808
        %v1579 = vunpack.c.0.s8 %v1578
        %v1580 = vperm.slane %v1576, %v1579
        %v1581 = vrot.slane %v1547, 4
        %v1582 = vsel %vm1159, %v1581, %v1483
        %v1584 = vunpack.c.l.s4 1983009808
        %v1585 = vunpack.c.0.s8 %v1584
        %v1586 = vperm.slane %v1582, %v1585
        %v1587 = vrot.slane %v1586, 4
        %v1588 = vsel %vm1159, %v1587, %v1580
        %v1590 = vunpack.c.l.s4 1934713408
        %v1591 = vunpack.c.0.s8 %v1590
        %v1592 = vperm.slane %v1588, %v1591
        %v1593 = vrot.slane %v1592, 4
        %v1594 = vsel %vm1159, 0, %v1593
        %v1597 = vpack.i.b16 %v1592, %v1572
        %v1598 = vshrl.u32 %v1572, 16
        %v1599 = vshrl.u32 %v1592, 16
        %v1600 = vpack.i.b16 %v1599, %v1598
        %v1603 = vpack.i.b16 %v1594, %v1574
        %v1604 = vshrl.u32 %v1574, 16
        %v1605 = vshrl.u32 %v1594, 16
        %v1606 = vpack.i.b16 %v1605, %v1604
        %vm1607 = vcmask 64512
        %v1609 = vsel %vm1607, %v1201, 0
        %vm1611 = vcmask 1043456
        %v1613 = vsel %vm1611, %v1597, 0
        %1615 = vmatpush.bf16.msra.mxu0 0
        %1616 = vmatpush.bf16.msra.mxu0 0
        %1617 = vmatpush.bf16.msra.mxu0 0
        %1618 = vmatpush.bf16.msra.mxu0 0
        %1619 = vmatpush.bf16.msra.mxu0 0
        %1620 = vmatpush.bf16.msra.mxu0 0
        %1621 = vmatpush.bf16.msra.mxu0 0
        %1622 = vmatpush.bf16.msra.mxu0 %v1613
        %1623 = vmatmul.bf16.gmra.mxu0 %v1609
        %v1624 = vpop.f32.mrf.mxu0
        %v1625 = vadd.f32 %v934, %v1624
        %v1626 = vpop.f32.mrf.mxu0
        %1627 = vdwg.mxu0
        %v1629 = vsel %vm1607, %v1204, 0
        %v1632 = vsel %vm1611, %v1600, 0
        %1634 = vmatpush.bf16.msra.mxu0 0
        %1635 = vmatpush.bf16.msra.mxu0 0
        %1636 = vmatpush.bf16.msra.mxu0 0
        %1637 = vmatpush.bf16.msra.mxu0 0
        %1638 = vmatpush.bf16.msra.mxu0 0
        %1639 = vmatpush.bf16.msra.mxu0 0
        %1640 = vmatpush.bf16.msra.mxu0 0
        %1641 = vmatpush.bf16.msra.mxu0 %v1632
        %1642 = vmatmul.bf16.gmra.mxu0 %v1629
        %v1643 = vpop.f32.mrf.mxu0
        %v1644 = vadd.f32 %v934, %v1643
        %v1645 = vpop.f32.mrf.mxu0
        %1646 = vdwg.mxu0
        %v1648 = vsel %vm1607, %v1207, 0
        %v1651 = vsel %vm1611, %v1603, 0
        %1653 = vmatpush.bf16.msra.mxu0 0
        %1654 = vmatpush.bf16.msra.mxu0 0
        %1655 = vmatpush.bf16.msra.mxu0 0
        %1656 = vmatpush.bf16.msra.mxu0 0
        %1657 = vmatpush.bf16.msra.mxu0 0
        %1658 = vmatpush.bf16.msra.mxu0 0
        %1659 = vmatpush.bf16.msra.mxu0 0
        %1660 = vmatpush.bf16.msra.mxu0 %v1651
        %1661 = vmatmul.bf16.gmra.mxu0 %v1648
        %v1662 = vpop.f32.mrf.mxu0
        %v1663 = vadd.f32 %v934, %v1662
        %v1664 = vpop.f32.mrf.mxu0
        %1665 = vdwg.mxu0
        %v1667 = vsel %vm1607, %v1210, 0
        %v1670 = vsel %vm1611, %v1606, 0
        %1672 = vmatpush.bf16.msra.mxu0 0
        %1673 = vmatpush.bf16.msra.mxu0 0
        %1674 = vmatpush.bf16.msra.mxu0 0
        %1675 = vmatpush.bf16.msra.mxu0 0
        %1676 = vmatpush.bf16.msra.mxu0 0
        %1677 = vmatpush.bf16.msra.mxu0 0
        %1678 = vmatpush.bf16.msra.mxu0 0
        %1679 = vmatpush.bf16.msra.mxu0 %v1670
        %1680 = vmatmul.bf16.gmra.mxu0 %v1667
        %v1681 = vpop.f32.mrf.mxu0
        %v1682 = vadd.f32 %v934, %v1681
        %v1683 = vpop.f32.mrf.mxu0
        %1684 = vdwg.mxu0
        %v1685 = vsel %vm1607, %v1625, -inf
        %1686 = vmax.xlane.f32.xlu0 %v1685
        %v1687 = vpop.xlane.xlu0 %1686
        %v1688 = vsel %vm1607, %v1644, -inf
        %1689 = vmax.xlane.f32.xlu0 %v1688
        %v1690 = vpop.xlane.xlu0 %1689
        %v1691 = vsel %vm1607, %v1663, -inf
        %1692 = vmax.xlane.f32.xlu0 %v1691
        %v1693 = vpop.xlane.xlu0 %1692
        %v1694 = vsel %vm1607, %v1682, -inf
        %1695 = vmax.xlane.f32.xlu0 %v1694
        %v1696 = vpop.xlane.xlu0 %1695
        %v1697 = vsub.f32 %v1625, %v1687
        %v1698 = vsub.f32 %v1644, %v1690
        %v1699 = vsub.f32 %v1663, %v1693
        %v1700 = vsub.f32 %v1682, %v1696
        %v1701 = vmul.f32 %v1697, 1.442695
        %v1702 = vpow.pop %v1701
        %v1703 = vmul.f32 %v1698, 1.442695
        %v1704 = vpow.pop %v1703
        %v1705 = vmul.f32 %v1699, 1.442695
        %v1706 = vpow.pop %v1705
        %v1707 = vmul.f32 %v1700, 1.442695
        %v1708 = vpow.pop %v1707
        %v1709 = vsel %vm1607, %v1702, 0.0
        %1710 = vadd.xlane.f32.xlu0 %v1709
        %v1711 = vpop.xlane.xlu0 %1710
        %v1712 = vsel %vm1607, %v1704, 0.0
        %1713 = vadd.xlane.f32.xlu0 %v1712
        %v1714 = vpop.xlane.xlu0 %1713
        %v1715 = vsel %vm1607, %v1706, 0.0
        %1716 = vadd.xlane.f32.xlu0 %v1715
        %v1717 = vpop.xlane.xlu0 %1716
        %v1718 = vsel %vm1607, %v1708, 0.0
        %1719 = vadd.xlane.f32.xlu0 %v1718
        %v1720 = vpop.xlane.xlu0 %1719
        %v1721 = vpack.c.bf16 %v1702, %v1702
        %v1722 = vpack.c.bf16 %v1704, %v1704
        %v1723 = vpack.c.bf16 %v1706, %v1706
        %v1724 = vpack.c.bf16 %v1708, %v1708
        %v1725 = vrot.slane %v1154, 4
        %v1726 = vsel %vm1159, %v1725, %v1150
        %v1728 = vunpack.c.l.s4 1983009808
        %v1729 = vunpack.c.0.s8 %v1728
        %v1730 = vperm.slane %v1726, %v1729
        %v1731 = vrot.slane %v1156, 4
        %v1732 = vsel %vm1159, %v1731, %v1152
        %v1734 = vunpack.c.l.s4 1983009808
        %v1735 = vunpack.c.0.s8 %v1734
        %v1736 = vperm.slane %v1732, %v1735
        %v1737 = vrot.slane %v1736, 4
        %v1738 = vsel %vm1159, %v1737, %v1730
        %v1740 = vunpack.c.l.s4 1934713408
        %v1741 = vunpack.c.0.s8 %v1740
        %v1742 = vperm.slane %v1738, %v1741
        %v1743 = vrot.slane %v1742, 4
        %v1744 = vsel %vm1159, 0, %v1743
        %v1745 = vrot.slane %v1155, 4
        %v1746 = vsel %vm1159, %v1745, %v1151
        %v1748 = vunpack.c.l.s4 1983009808
        %v1749 = vunpack.c.0.s8 %v1748
        %v1750 = vperm.slane %v1746, %v1749
        %v1751 = vrot.slane %v1157, 4
        %v1752 = vsel %vm1159, %v1751, %v1153
        %v1754 = vunpack.c.l.s4 1983009808
        %v1755 = vunpack.c.0.s8 %v1754
        %v1756 = vperm.slane %v1752, %v1755
        %v1757 = vrot.slane %v1756, 4
        %v1758 = vsel %vm1159, %v1757, %v1750
        %v1760 = vunpack.c.l.s4 1934713408
        %v1761 = vunpack.c.0.s8 %v1760
        %v1762 = vperm.slane %v1758, %v1761
        %v1763 = vrot.slane %v1762, 4
        %v1764 = vsel %vm1159, 0, %v1763
        %v1767 = vpack.i.b16 %v1762, %v1742
        %v1768 = vshrl.u32 %v1742, 16
        %v1769 = vshrl.u32 %v1762, 16
        %v1770 = vpack.i.b16 %v1769, %v1768
        %v1773 = vpack.i.b16 %v1764, %v1744
        %v1774 = vshrl.u32 %v1744, 16
        %v1775 = vshrl.u32 %v1764, 16
        %v1776 = vpack.i.b16 %v1775, %v1774
        %v1778 = vsel %vm1607, %v1721, 0
        %v1781 = vsel %vm1611, %v1767, 0
        %1783 = vmatpush.bf16.msra.mxu0 0
        %1784 = vmatpush.bf16.msra.mxu0 0
        %1785 = vmatpush.bf16.msra.mxu0 0
        %1786 = vmatpush.bf16.msra.mxu0 0
        %1787 = vmatpush.bf16.msra.mxu0 0
        %1788 = vmatpush.bf16.msra.mxu0 0
        %1789 = vmatpush.bf16.msra.mxu0 0
        %1790 = vmatpush.bf16.msra.mxu0 %v1781
        %1791 = vmatmul.bf16.gmra.mxu0 %v1778
        %v1792 = vpop.f32.mrf.mxu0
        %v1793 = vadd.f32 0.0, %v1792
        %v1794 = vpop.f32.mrf.mxu0
        %1795 = vdwg.mxu0
        %v1797 = vsel %vm1607, %v1722, 0
        %v1800 = vsel %vm1611, %v1770, 0
        %1802 = vmatpush.bf16.msra.mxu0 0
        %1803 = vmatpush.bf16.msra.mxu0 0
        %1804 = vmatpush.bf16.msra.mxu0 0
        %1805 = vmatpush.bf16.msra.mxu0 0
        %1806 = vmatpush.bf16.msra.mxu0 0
        %1807 = vmatpush.bf16.msra.mxu0 0
        %1808 = vmatpush.bf16.msra.mxu0 0
        %1809 = vmatpush.bf16.msra.mxu0 %v1800
        %1810 = vmatmul.bf16.gmra.mxu0 %v1797
        %v1811 = vpop.f32.mrf.mxu0
        %v1812 = vadd.f32 0.0, %v1811
        %v1813 = vpop.f32.mrf.mxu0
        %1814 = vdwg.mxu0
        %v1816 = vsel %vm1607, %v1723, 0
        %v1819 = vsel %vm1611, %v1773, 0
        %1821 = vmatpush.bf16.msra.mxu0 0
        %1822 = vmatpush.bf16.msra.mxu0 0
        %1823 = vmatpush.bf16.msra.mxu0 0
        %1824 = vmatpush.bf16.msra.mxu0 0
        %1825 = vmatpush.bf16.msra.mxu0 0
        %1826 = vmatpush.bf16.msra.mxu0 0
        %1827 = vmatpush.bf16.msra.mxu0 0
        %1828 = vmatpush.bf16.msra.mxu0 %v1819
        %1829 = vmatmul.bf16.gmra.mxu0 %v1816
        %v1830 = vpop.f32.mrf.mxu0
        %v1831 = vadd.f32 0.0, %v1830
        %v1832 = vpop.f32.mrf.mxu0
        %1833 = vdwg.mxu0
        %v1835 = vsel %vm1607, %v1724, 0
        %v1838 = vsel %vm1611, %v1776, 0
        %1840 = vmatpush.bf16.msra.mxu0 0
        %1841 = vmatpush.bf16.msra.mxu0 0
        %1842 = vmatpush.bf16.msra.mxu0 0
        %1843 = vmatpush.bf16.msra.mxu0 0
        %1844 = vmatpush.bf16.msra.mxu0 0
        %1845 = vmatpush.bf16.msra.mxu0 0
        %1846 = vmatpush.bf16.msra.mxu0 0
        %1847 = vmatpush.bf16.msra.mxu0 %v1838
        %1848 = vmatmul.bf16.gmra.mxu0 %v1835
        %v1849 = vpop.f32.mrf.mxu0
        %v1850 = vadd.f32 0.0, %v1849
        %v1851 = vpop.f32.mrf.mxu0
        %1852 = vdwg.mxu0
        %v1853 = vrcp.pop %v1711
        %v1854 = vrcp.pop %v1714
        %v1855 = vrcp.pop %v1717
        %v1856 = vrcp.pop %v1720
        %v1857 = vmul.f32 %v1793, %v1853
        %v1858 = vmul.f32 %v1812, %v1854
        %v1859 = vmul.f32 %v1831, %v1855
        %v1860 = vmul.f32 %v1850, %v1856
        %v1861 = vrot.slane %v1859, 4
        %v1862 = vsel %vm946, %v1861, %v1857
        %v1863 = vrot.slane %v1857, 4
        %v1864 = vsel %vm946, %v1859, %v1863
        %v1866 = vunpack.c.l.s4 1983009808
        %v1867 = vunpack.c.0.s8 %v1866
        %v1868 = vperm.slane %v1862, %v1867
        %v1870 = vunpack.c.l.s4 1983009808
        %v1871 = vunpack.c.0.s8 %v1870
        %v1872 = vperm.slane %v1864, %v1871
        %v1873 = vrot.slane %v1860, 4
        %v1874 = vsel %vm946, %v1873, %v1858
        %v1875 = vrot.slane %v1858, 4
        %v1876 = vsel %vm946, %v1860, %v1875
        %v1878 = vunpack.c.l.s4 1983009808
        %v1879 = vunpack.c.0.s8 %v1878
        %v1880 = vperm.slane %v1874, %v1879
        %v1882 = vunpack.c.l.s4 1983009808
        %v1883 = vunpack.c.0.s8 %v1882
        %v1884 = vperm.slane %v1876, %v1883
        %v1885 = vrot.slane %v1880, 4
        %v1886 = vsel %vm946, %v1885, %v1868
        %v1887 = vrot.slane %v1868, 4
        %v1888 = vsel %vm946, %v1880, %v1887
        %v1890 = vunpack.c.l.s4 1934713408
        %v1891 = vunpack.c.0.s8 %v1890
        %v1892 = vperm.slane %v1886, %v1891
        %v1894 = vunpack.c.l.s4 1934713408
        %v1895 = vunpack.c.0.s8 %v1894
        %v1896 = vperm.slane %v1888, %v1895
        %v1897 = vrot.slane %v1884, 4
        %v1898 = vsel %vm946, %v1897, %v1872
        %v1899 = vrot.slane %v1872, 4
        %v1900 = vsel %vm946, %v1884, %v1899
        %v1902 = vunpack.c.l.s4 1934713408
        %v1903 = vunpack.c.0.s8 %v1902
        %v1904 = vperm.slane %v1898, %v1903
        %v1906 = vunpack.c.l.s4 1934713408
        %v1907 = vunpack.c.0.s8 %v1906
        %v1908 = vperm.slane %v1900, %v1907
        %v1909 = vrot.slane %v1892, 4
        %v1910 = vsel %vm946, 0.0, %v1909
        %v1911 = vrot.slane %v1896, 4
        %v1912 = vsel %vm946, 0.0, %v1911
        %v1913 = vrot.slane %v1904, 4
        %v1914 = vsel %vm946, 0.0, %v1913
        %v1915 = vrot.slane %v1908, 4
        %v1916 = vsel %vm946, 0.0, %v1915
        %v1917 = vsel %vm946, %v1911, %v1892
        %v1919 = vunpack.c.l.s4 1983009808
        %v1920 = vunpack.c.0.s8 %v1919
        %v1921 = vperm.slane %v1917, %v1920
        %v1922 = vrot.slane %v1912, 4
        %v1923 = vsel %vm946, %v1922, %v1910
        %v1925 = vunpack.c.l.s4 1983009808
        %v1926 = vunpack.c.0.s8 %v1925
        %v1927 = vperm.slane %v1923, %v1926
        %v1928 = vsel %vm946, %v1915, %v1904
        %v1930 = vunpack.c.l.s4 1983009808
        %v1931 = vunpack.c.0.s8 %v1930
        %v1932 = vperm.slane %v1928, %v1931
        %v1933 = vrot.slane %v1916, 4
        %v1934 = vsel %vm946, %v1933, %v1914
        %v1936 = vunpack.c.l.s4 1983009808
        %v1937 = vunpack.c.0.s8 %v1936
        %v1938 = vperm.slane %v1934, %v1937
        %v1939 = vrot.slane %v1927, 4
        %v1940 = vsel %vm946, %v1939, %v1921
        %v1941 = vrot.slane %v1921, 4
        %v1942 = vsel %vm946, %v1927, %v1941
        %v1944 = vunpack.c.l.s4 1934713408
        %v1945 = vunpack.c.0.s8 %v1944
        %v1946 = vperm.slane %v1940, %v1945
        %v1948 = vunpack.c.l.s4 1934713408
        %v1949 = vunpack.c.0.s8 %v1948
        %v1950 = vperm.slane %v1942, %v1949
        %v1951 = vrot.slane %v1938, 4
        %v1952 = vsel %vm946, %v1951, %v1932
        %v1953 = vrot.slane %v1932, 4
        %v1954 = vsel %vm946, %v1938, %v1953
        %v1956 = vunpack.c.l.s4 1934713408
        %v1957 = vunpack.c.0.s8 %v1956
        %v1958 = vperm.slane %v1952, %v1957
        %v1960 = vunpack.c.l.s4 1934713408
        %v1961 = vunpack.c.0.s8 %v1960
        %v1962 = vperm.slane %v1954, %v1961
        %v1963 = vrot.slane %v1958, 4
        %v1964 = vsel %vm946, %v1963, %v1946
        %v1965 = vrot.slane %v1946, 4
        %v1966 = vsel %vm946, %v1958, %v1965
        %v1967 = vrot.slane %v1962, 4
        %v1968 = vsel %vm946, %v1967, %v1950
        %v1969 = vrot.slane %v1950, 4
        %v1970 = vsel %vm946, %v1962, %v1969
        %1972 = vrot.lane.b32.xlu0 %v1966, 8
        %v1973 = vpop.permute.xlu0 %1972
        %1976 = vrot.lane.b32.xlu0 %v1968, 16
        %v1977 = vpop.permute.xlu0 %1976
        %1980 = vrot.lane.b32.xlu0 %v1970, 24
        %v1981 = vpop.permute.xlu0 %1980
        %v1983 = vsel %vm1607, %v1964, %v1973
        %vm1984 = vcmask 130048
        %v1985 = vsel %vm1984, %v1983, %v1977
        %vm1986 = vcmask 195584
        %v1987 = vsel %vm1986, %v1985, %v1981
        %v1988 = vpack.c.bf16 %v1987, %v1987
        %v1989 = vld [vmem:[#allocation10] sm:$0xf]
        %v1990 = vld [vmem:[#allocation10 + $0x4] sm:$0xf]
        %v1991 = vld [vmem:[#allocation10 + $0x8] sm:$0xf]
        %v1992 = vld [vmem:[#allocation10 + $0xc] sm:$0xf]
        %v1993 = vld [vmem:[%s11] sm:$0x1]
        %v1995 = vperm.slane %v1993, 0
        %v2001 = vunpack.c.l.b16 %v1989
        %v2002 = vunpack.c.l.b16 %v1990
        %v2003 = vunpack.c.l.b16 %v1991
        %v2004 = vunpack.c.l.b16 %v1992
        %v2005 = vpack.c.b16 %v2002, %v2001
        %v2006 = vpack.c.b16 %v2004, %v2003
        %v2010 = vsel %vm842, %v1988, 0
        %2012 = vmatpush.bf16.msra.mxu0 0
        %2013 = vmatpush.bf16.msra.mxu0 0
        %2014 = vmatpush.bf16.msra.mxu0 0
        %2015 = vmatpush.bf16.msra.mxu0 0
        %2016 = vmatpush.bf16.msra.mxu0 0
        %2017 = vmatpush.bf16.msra.mxu0 0
        %2018 = vmatpush.bf16.msra.mxu0 %v2006
        %2019 = vmatpush.bf16.msra.mxu0 %v2005
        %2020 = vmatmul.bf16.gmra.mxu0 %v2010
        %v2021 = vpop.f32.mrf.mxu0
        %v2022 = vadd.f32 %v1995, %v2021
        %v2023 = vpop.f32.mrf.mxu0
        %2024 = vdwg.mxu0
        %v2025 = vadd.f32 %v2022, %v818
        %v2026 = vld [vmem:[%s16] sm:$0x1]
        %v2027 = vld [vmem:[%s17] sm:$0x1]
        %v2028 = vsel %vm842, %v2025, 0.0
        %2029 = vadd.xlane.f32.xlu0 %v2028
        %v2030 = vpop.xlane.xlu0 %2029
        %v2031 = vrcp.pop 32.0
        %v2032 = vmul.f32 32.0, %v2031
        %v2033 = vsub.f32 1.0, %v2032
        %v2034 = vmul.f32 %v2031, %v2033
        %v2035 = vadd.f32 %v2031, %v2034
        %vm2036 = vweird.f32 %v2031
        %v2037 = vsel %vm2036, %v2031, %v2035
        %v2038 = vmul.f32 %v2030, %v2037
        %v2039 = vsub.f32 %v2025, %v2038
        %v2040 = vmul.f32 %v2039, %v2039
        %v2041 = vsel %vm842, %v2040, 0.0
        %2042 = vadd.xlane.f32.xlu0 %v2041
        %v2043 = vpop.xlane.xlu0 %2042
        %v2044 = vmul.f32 %v2043, %v2037
        %v2045 = vadd.f32 %v2044, 1e-06
        %v2046 = vrsqrt.pop %v2045
        %v2047 = vmul.f32 %v2046, %v2045
        %v2048 = vmul.f32 %v2047, %v2046
        %v2049 = vmul.f32 0.5, %v2048
        %v2050 = vsub.f32 1.5, %v2049
        %v2051 = vmul.f32 %v2046, %v2050
        %vm2052 = vweird.f32 %v2045
        %vm2053 = vweird.f32 %v2046
        %vm2054 = vmor %vm2052, %vm2053
        %v2055 = vsel %vm2054, %v2046, %v2051
        %v2056 = vmul.f32 %v2039, %v2055
        %v2058 = vperm.slane %v2026, 0
        %v2060 = vmul.f32 %v2056, %v2058
        %v2062 = vperm.slane %v2027, 0
        %v2064 = vadd.f32 %v2060, %v2062
        %v2065 = vpack.c.bf16 %v2064, %v2064
        %v2066 = vld [vmem:[#allocation11] sm:$0xf]
        %v2067 = vld [vmem:[#allocation11 + $0x4] sm:$0xf]
        %v2068 = vld [vmem:[#allocation11 + $0x8] sm:$0xf]
        %v2069 = vld [vmem:[#allocation11 + $0xc] sm:$0xf]
        %v2070 = vld [vmem:[%s13] sm:$0x1]
        %v2072 = vperm.slane %v2070, 0
        %v2078 = vunpack.c.l.b16 %v2066
        %v2079 = vunpack.c.l.b16 %v2067
        %v2080 = vunpack.c.l.b16 %v2068
        %v2081 = vunpack.c.l.b16 %v2069
        %v2082 = vpack.c.b16 %v2079, %v2078
        %v2083 = vpack.c.b16 %v2081, %v2080
        %v2087 = vsel %vm842, %v2065, 0
        %2089 = vmatpush.bf16.msra.mxu0 0
        %2090 = vmatpush.bf16.msra.mxu0 0
        %2091 = vmatpush.bf16.msra.mxu0 0
        %2092 = vmatpush.bf16.msra.mxu0 0
        %2093 = vmatpush.bf16.msra.mxu0 0
        %2094 = vmatpush.bf16.msra.mxu0 0
        %2095 = vmatpush.bf16.msra.mxu0 %v2083
        %2096 = vmatpush.bf16.msra.mxu0 %v2082
        %2097 = vmatmul.bf16.gmra.mxu0 %v2087
        %v2098 = vpop.f32.mrf.mxu0
        %v2099 = vadd.f32 %v2072, %v2098
        %v2100 = vpop.f32.mrf.mxu0
        %2101 = vdwg.mxu0
        %v2102 = vmax.f32 %v2099, 0.0
        %v2103 = vpack.c.bf16 %v2102, %v2102
        %v2104 = vld [vmem:[%s14] sm:$0xf]
        %v2105 = vld [vmem:[%s14 + $0x4] sm:$0xf]
        %v2106 = vld [vmem:[%s14 + $0x8] sm:$0xf]
        %v2107 = vld [vmem:[%s14 + $0xc] sm:$0xf]
        %v2108 = vld [vmem:[%s14 + $0x10] sm:$0xf]
        %v2109 = vld [vmem:[%s14 + $0x14] sm:$0xf]
        %v2110 = vld [vmem:[%s14 + $0x18] sm:$0xf]
        %v2111 = vld [vmem:[%s14 + $0x1c] sm:$0xf]
        %v2112 = vld [vmem:[%s15] sm:$0x1]
        %v2114 = vperm.slane %v2112, 0
        %v2124 = vunpack.c.l.b16 %v2104
        %v2125 = vunpack.c.l.b16 %v2105
        %v2126 = vunpack.c.l.b16 %v2106
        %v2127 = vunpack.c.l.b16 %v2107
        %v2128 = vunpack.c.l.b16 %v2108
        %v2129 = vunpack.c.l.b16 %v2109
        %v2130 = vunpack.c.l.b16 %v2110
        %v2131 = vunpack.c.l.b16 %v2111
        %v2132 = vpack.c.b16 %v2125, %v2124
        %v2133 = vpack.c.b16 %v2127, %v2126
        %v2134 = vpack.c.b16 %v2129, %v2128
        %v2135 = vpack.c.b16 %v2131, %v2130
        %vm2140 = vcmask 523264
        %v2142 = vsel %vm2140, %v2103, 0
        %2144 = vmatpush.bf16.msra.mxu0 0
        %2145 = vmatpush.bf16.msra.mxu0 0
        %2146 = vmatpush.bf16.msra.mxu0 0
        %2147 = vmatpush.bf16.msra.mxu0 0
        %2148 = vmatpush.bf16.msra.mxu0 %v2135
        %2149 = vmatpush.bf16.msra.mxu0 %v2134
        %2150 = vmatpush.bf16.msra.mxu0 %v2133
        %2151 = vmatpush.bf16.msra.mxu0 %v2132
        %2152 = vmatmul.bf16.gmra.mxu0 %v2142
        %v2153 = vpop.f32.mrf.mxu0
        %v2154 = vadd.f32 %v2114, %v2153
        %v2155 = vpop.f32.mrf.mxu0
        %2156 = vdwg.mxu0
        %v2157 = vadd.f32 %v2154, %v2064
        %v2158 = vld [vmem:[%s18] sm:$0x1]
        %v2159 = vld [vmem:[%s19] sm:$0x1]
        %v2160 = vsel %vm842, %v2157, 0.0
        %2161 = vadd.xlane.f32.xlu0 %v2160
        %v2162 = vpop.xlane.xlu0 %2161
        %v2163 = vmul.f32 %v2162, %v2037
        %v2164 = vsub.f32 %v2157, %v2163
        %v2165 = vmul.f32 %v2164, %v2164
        %v2166 = vsel %vm842, %v2165, 0.0
        %2167 = vadd.xlane.f32.xlu0 %v2166
        %v2168 = vpop.xlane.xlu0 %2167
        %v2169 = vmul.f32 %v2168, %v2037
        %v2170 = vadd.f32 %v2169, 1e-06
        %v2171 = vrsqrt.pop %v2170
        %v2172 = vmul.f32 %v2171, %v2170
        %v2173 = vmul.f32 %v2172, %v2171
        %v2174 = vmul.f32 0.5, %v2173
        %v2175 = vsub.f32 1.5, %v2174
        %v2176 = vmul.f32 %v2171, %v2175
        %vm2177 = vweird.f32 %v2170
        %vm2178 = vweird.f32 %v2171
        %vm2179 = vmor %vm2177, %vm2178
        %v2180 = vsel %vm2179, %v2171, %v2176
        %v2181 = vmul.f32 %v2164, %v2180
        %v2183 = vperm.slane %v2158, 0
        %v2185 = vmul.f32 %v2181, %v2183
        %v2187 = vperm.slane %v2159, 0
        %v2189 = vadd.f32 %v2185, %v2187
        %2190 = vst.msk [vmem:[%s809] sm:$0xff] %vm842, %v2189
        %s2191 = sand.u32 %s508, 1
        %s2192 = scalar_lea.sflag [#allocation4], %s2191
        %s2193 = sand.u32 %s508, 1
        %s2194 = smul.addr %s2193, 8
        %s2195 = scalar_lea.vmem [#allocation13], %s2194
        // Predicated region
        $region125: #{tpu_custom_call.1} parent=99 // pred_check
          %p2196 = pneg %p518
        $region126: #{tpu_custom_call.1} parent=99 // pred_check_branch
          %2198 = sbr.rel (%p2196) target = $region128
        $region127: #{tpu_custom_call.1} parent=99 // pred_region
          %2200 = vsyncadd %s2192, 0
          %s2201 = sadd.s32 %s47, %s46
          %s2202 = smul.addr %s2201, 8
          %s2203 = scalar_lea.hbm %s20, %s2202
          %s2205 = sshll.u32 %s2195, 4
          %s2206 = int_to_ptr.vmem [resolvable:$true] %s2205
          %s2207 = sshll.u32 %s2203, 4
          %s2208 = int_to_ptr.hbm [resolvable:$true] %s2207
          %2210 = dma.vmem_to_hbm [thread:$0]  %s2206, 128, %s2208, %s2192
        $region128: #{tpu_custom_call.1} parent=99 // pred_fallthru
          _
      $region100: #{tpu_custom_call.1} parent=5 // pred_fallthru
        _
      %p2211 = scmp.le.s32.totalorder 2, %s37
      // Predicated region
      $region129: #{tpu_custom_call.1} parent=5 // pred_check
        %p2212 = pneg %p2211
      $region130: #{tpu_custom_call.1} parent=5 // pred_check_branch
        %2214 = sbr.rel (%p2212) target = $region132
      $region131: #{tpu_custom_call.1} parent=5 // pred_region
        %s2215 = ssub.s32 %s37, 2
        // Predicated region
        $region133: #{tpu_custom_call.1} parent=131 // pred_check
          %p2216 = pneg %p524
        $region134: #{tpu_custom_call.1} parent=131 // pred_check_branch
          %2218 = sbr.rel (%p2216) target = $region136
        $region135: #{tpu_custom_call.1} parent=131 // pred_region
          %s2219 = sand.u32 %s509, 1
          %s2220 = scalar_lea.sflag [#allocation4], %s2219
          %s2221 = sand.u32 %s509, 1
          %s2222 = smul.addr %s2221, 8
          %s2223 = scalar_lea.vmem [#allocation13], %s2222
          %2225 = dma.done %s2220, 128
        $region136: #{tpu_custom_call.1} parent=131 // pred_fallthru
          _
      $region132: #{tpu_custom_call.1} parent=5 // pred_fallthru
        _
    $region6: #{tpu_custom_call.1} parent=1 // loop_footer
      %s41 = sadd.s32 1, %s37
    $region7: #{tpu_custom_call.1} parent=1 // loop_footer_branch
      %36 = sbr.rel target = $region3
    $region8: #{tpu_custom_call.1} parent=1 // loop_exit
      _
    %2226 = vsyncpa [#allocation3], 1
    %s2227 = scalar_lea.sflag [#allocation3], 1
    %2228 = vsyncpa %s2227, 1
    %2229 = vsyncpa [#allocation6], 1
    %s2230 = scalar_lea.sflag [#allocation6], 1
    %2231 = vsyncpa %s2230, 1
    %2232 = vsyncpa [#allocation9], 1
    %2233 = vsyncpa [#allocation12], 1
    %2234 = vsyncpa [#allocation4], 1
    %s2235 = scalar_lea.sflag [#allocation4], 1
    %2236 = vsyncpa %s2235, 1

// kernel: tpu_custom_call.1
$region0: #{tpu_custom_call.1}
  #allocation0 [shape = 'u32[]', space=smem, size = 0x4, offset = 0x4, fixed_abs, tag = 'smem constant byte address 0x4 - core index']
  #allocation1 [shape = 'u32[72,128]{1,0:T(1,128)}', space=vmem, size = 0x9000, scoped, tag = 'internal scratch']
  %s0 = inlined_call_operand.vmem [shape: f32[2,8,32], index: 0, kind: input, shape index: {}]
  %s1 = inlined_call_operand.hbm [shape: bf16[2,8,32], index: 1, kind: input, shape index: {}]
  %s2 = inlined_call_operand.hbm [shape: bf16[2,8,32], index: 2, kind: input, shape index: {}]
  %s3 = inlined_call_operand.hbm [shape: bf16[2,8,8], index: 3, kind: input, shape index: {}]
  %s4 = inlined_call_operand.vmem [shape: bf16[32,32], index: 4, kind: input, shape index: {}]
  %s5 = inlined_call_operand.vmem [shape: f32[1,32], index: 5, kind: input, shape index: {}]
  %s6 = inlined_call_operand.vmem [shape: bf16[32,32], index: 6, kind: input, shape index: {}]
  %s7 = inlined_call_operand.vmem [shape: f32[1,32], index: 7, kind: input, shape index: {}]
  %s8 = inlined_call_operand.hbm [shape: bf16[32,32], index: 8, kind: input, shape index: {}]
  %s9 = inlined_call_operand.vmem [shape: f32[1,32], index: 9, kind: input, shape index: {}]
  %s10 = inlined_call_operand.hbm [shape: bf16[32,32], index: 10, kind: input, shape index: {}]
  %s11 = inlined_call_operand.vmem [shape: f32[1,32], index: 11, kind: input, shape index: {}]
  %s12 = inlined_call_operand.hbm [shape: bf16[32,64], index: 12, kind: input, shape index: {}]
  %s13 = inlined_call_operand.vmem [shape: f32[1,64], index: 13, kind: input, shape index: {}]
  %s14 = inlined_call_operand.vmem [shape: bf16[64,32], index: 14, kind: input, shape index: {}]
  %s15 = inlined_call_operand.vmem [shape: f32[1,32], index: 15, kind: input, shape index: {}]
  %s16 = inlined_call_operand.vmem [shape: f32[1,32], index: 16, kind: input, shape index: {}]
  %s17 = inlined_call_operand.vmem [shape: f32[1,32], index: 17, kind: input, shape index: {}]
  %s18 = inlined_call_operand.vmem [shape: f32[1,32], index: 18, kind: input, shape index: {}]
  %s19 = inlined_call_operand.vmem [shape: f32[1,32], index: 19, kind: input, shape index: {}]
  %s20 = inlined_call_operand.hbm [shape: f32[2,8,32], index: 20, kind: output, shape index: {}]
  %s21 = sld [smem:[#allocation0]]
  $region137: #{tpu_custom_call.1} parent=0
    _
  %s23 = ssub.s32 1, %s21
  %s24 = scalar_select 0, %s23, %s21
  $region1: #{tpu_custom_call.1} parent=0
    #allocation2 [shape = 'u8[4096]{0}', space=vmem, size = 0x1000, scoped, tag = 'input window, operand 1']
    #allocation3 [shape = 's32[2]{0}', space=sflag, size = 0x8, scoped, tag = 'scoped memory for tpu_custom_call.1']
    #allocation4 [shape = 's32[2]{0}', space=sflag, size = 0x8, scoped, tag = 'scoped memory for tpu_custom_call.1']
    #allocation5 [shape = 'u8[4096]{0}', space=vmem, size = 0x1000, scoped, tag = 'input window, operand 2']
    #allocation6 [shape = 's32[2]{0}', space=sflag, size = 0x8, scoped, tag = 'scoped memory for tpu_custom_call.1']
    #allocation7 [shape = 'u8[4096]{0}', space=vmem, size = 0x1000, scoped, tag = 'input window, operand 3']
    #allocation8 [shape = 'u8[8192]{0}', space=vmem, size = 0x2000, scoped, tag = 'input window, operand 8, single buffered']
    #allocation9 [shape = 's32[1]{0}', space=sflag, size = 0x4, scoped, tag = 'scoped memory for tpu_custom_call.1']
    #allocation10 [shape = 'u8[8192]{0}', space=vmem, size = 0x2000, scoped, tag = 'input window, operand 10, single buffered']
    #allocation11 [shape = 'u8[8192]{0}', space=vmem, size = 0x2000, scoped, tag = 'input window, operand 12, single buffered']
    #allocation12 [shape = 's32[1]{0}', space=sflag, size = 0x4, scoped, tag = 'scoped memory for tpu_custom_call.1']
    #allocation13 [shape = 'u8[8192]{0}', space=vmem, size = 0x2000, scoped, tag = 'output window, operand 0']
    %25 = vsyncpa [#allocation3], 0
    %s26 = scalar_lea.sflag [#allocation3], 1
    %27 = vsyncpa %s26, 0
    %28 = vsyncpa [#allocation6], 0
    %s29 = scalar_lea.sflag [#allocation6], 1
    %30 = vsyncpa %s29, 0
    %31 = vsyncpa [#allocation9], 0
    %32 = vsyncpa [#allocation12], 0
    %33 = vsyncpa [#allocation4], 0
    %s34 = scalar_lea.sflag [#allocation4], 1
    %35 = vsyncpa %s34, 0
    loop: start=0, step=1, limit=4
    $region2: #{tpu_custom_call.1} parent=1 // loop_pre_header
      _
    $region3: #{tpu_custom_call.1} parent=1 // loop_header
      %s37 = sphi 0, %s41
      %p38 = scmp.ge.s32.totalorder %s37, 4
      %s44 = sphi 0, %s56
      %s45 = sphi 0, %s52
      %s46 = sphi 0, %s44
      %s47 = sphi 0, %s45
      %s48 = sphi 0, %s46
      %s49 = sphi 0, %s47
      %s61 = sphi 0, %s63
      %s64 = sphi 0, %s61
      %s65 = sphi 0, %s64
      %s81 = sphi 0, %s65
      %s87 = sphi 0, %s89
      %s90 = sphi 0, %s87
      %s91 = sphi 0, %s90
      %s107 = sphi 0, %s91
      %s113 = sphi 0, %s115
      %s116 = sphi 0, %s113
      %s117 = sphi 0, %s116
      %s133 = sphi 0, %s117
      %s141 = sphi 0, %s143
      %s144 = sphi 0, %s141
      %s145 = sphi 0, %s144
      %s161 = sphi 0, %s145
      %s165 = sphi 0, %s165
      %s167 = sphi 0, %s165
      %s168 = sphi 0, %s167
      %s182 = sphi 0, %s168
      %s186 = sphi 0, %s186
      %s188 = sphi 0, %s186
      %s189 = sphi 0, %s188
      %s203 = sphi 0, %s189
      %s207 = sphi 0, %s207
      %s209 = sphi 0, %s207
      %s210 = sphi 0, %s209
      %s224 = sphi 0, %s210
      %s228 = sphi 0, %s228
      %s230 = sphi 0, %s228
      %s231 = sphi 0, %s230
      %s245 = sphi 0, %s231
      %s249 = sphi 0, %s249
      %s251 = sphi 0, %s249
      %s252 = sphi 0, %s251
      %s266 = sphi 0, %s252
      %s270 = sphi 0, %s270
      %s272 = sphi 0, %s270
      %s273 = sphi 0, %s272
      %s287 = sphi 0, %s273
      %s291 = sphi 0, %s291
      %s293 = sphi 0, %s291
      %s294 = sphi 0, %s293
      %s308 = sphi 0, %s294
      %s312 = sphi 0, %s312
      %s314 = sphi 0, %s312
      %s315 = sphi 0, %s314
      %s329 = sphi 0, %s315
      %s333 = sphi 0, %s333
      %s335 = sphi 0, %s333
      %s336 = sphi 0, %s335
      %s350 = sphi 0, %s336
      %s354 = sphi 0, %s354
      %s356 = sphi 0, %s354
      %s357 = sphi 0, %s356
      %s371 = sphi 0, %s357
      %s375 = sphi 0, %s375
      %s377 = sphi 0, %s375
      %s378 = sphi 0, %s377
      %s392 = sphi 0, %s378
      %s396 = sphi 0, %s396
      %s398 = sphi 0, %s396
      %s399 = sphi 0, %s398
      %s413 = sphi 0, %s399
      %s417 = sphi 0, %s417
      %s419 = sphi 0, %s417
      %s420 = sphi 0, %s419
      %s434 = sphi 0, %s420
      %s438 = sphi 0, %s438
      %s440 = sphi 0, %s438
      %s441 = sphi 0, %s440
      %s455 = sphi 0, %s441
      %s459 = sphi 0, %s459
      %s461 = sphi 0, %s459
      %s462 = sphi 0, %s461
      %s476 = sphi 0, %s462
      %s480 = sphi 0, %s480
      %s482 = sphi 0, %s480
      %s483 = sphi 0, %s482
      %s497 = sphi 0, %s483
      %s505 = sphi 0, %s507
      %s508 = sphi 0, %s505
      %s509 = sphi 0, %s508
      %s525 = sphi 0, %s509
    $region4: #{tpu_custom_call.1} parent=1 // loop_header_branch
      %40 = sbr.rel (%p38) target = $region8
    $region5: #{tpu_custom_call.1} parent=1 // loop_body
      %s42 = ssub.s32 %s37, 1
      %s43 = ssub.s32 %s37, 2
      %s50 = sadd.s32 1, %s45
      %p51 = scmp.ge.s32.totalorder %s50, 1
      %s52 = scalar_select %p51, 0, %s50
      %s53 = sadd.s32 1, %s44
      %s54 = scalar_select %p51, %s53, %s44
      %p55 = scmp.ge.s32.totalorder %s54, 2
      %s56 = scalar_select %p55, 0, %s54
      %s57 = ssub.s32 %s44, %s56
      %s58 = ssub.s32 %s45, %s52
      %s59 = sor.u32 %s57, %s58
      %p60 = scmp.eq.s32.totalorder %s59, 0
      %s62 = sadd.s32 %s61, 1
      %s63 = scalar_select %p60, %s61, %s62
      %p66 = pneg %p60
      %p67 = scmp.eq.s32.totalorder %s37, 1
      %p68 = por %p66, %p67
      %p69 = scmp.ne.s32.totalorder %s61, %s64
      %p70 = scmp.eq.s32.totalorder %s37, 0
      %p71 = por %p69, %p70
      %p72 = scmp.ne.s32.totalorder %s61, %s64
      %p73 = scmp.eq.s32.totalorder %s42, 1
      %p74 = por %p72, %p73
      %p75 = scmp.ne.s32.totalorder %s64, %s65
      %p76 = scmp.eq.s32.totalorder %s42, 0
      %p77 = por %p75, %p76
      %p78 = scmp.ne.s32.totalorder %s64, %s65
      %p79 = scmp.eq.s32.totalorder %s43, 1
      %p80 = por %p78, %p79
      %p82 = scmp.ne.s32.totalorder %s65, %s81
      %p83 = scmp.eq.s32.totalorder %s43, 0
      %p84 = por %p82, %p83
      %s85 = ssub.s32 %s44, %s56
      %p86 = scmp.eq.s32.totalorder %s85, 0
      %s88 = sadd.s32 %s87, 1
      %s89 = scalar_select %p86, %s87, %s88
      %p92 = pneg %p86
      %p93 = scmp.eq.s32.totalorder %s37, 1
      %p94 = por %p92, %p93
      %p95 = scmp.ne.s32.totalorder %s87, %s90
      %p96 = scmp.eq.s32.totalorder %s37, 0
      %p97 = por %p95, %p96
      %p98 = scmp.ne.s32.totalorder %s87, %s90
      %p99 = scmp.eq.s32.totalorder %s42, 1
      %p100 = por %p98, %p99
      %p101 = scmp.ne.s32.totalorder %s90, %s91
      %p102 = scmp.eq.s32.totalorder %s42, 0
      %p103 = por %p101, %p102
      %p104 = scmp.ne.s32.totalorder %s90, %s91
      %p105 = scmp.eq.s32.totalorder %s43, 1
      %p106 = por %p104, %p105
      %p108 = scmp.ne.s32.totalorder %s91, %s107
      %p109 = scmp.eq.s32.totalorder %s43, 0
      %p110 = por %p108, %p109
      %s111 = ssub.s32 %s44, %s56
      %p112 = scmp.eq.s32.totalorder %s111, 0
      %s114 = sadd.s32 %s113, 1
      %s115 = scalar_select %p112, %s113, %s114
      %p118 = pneg %p112
      %p119 = scmp.eq.s32.totalorder %s37, 1
      %p120 = por %p118, %p119
      %p121 = scmp.ne.s32.totalorder %s113, %s116
      %p122 = scmp.eq.s32.totalorder %s37, 0
      %p123 = por %p121, %p122
      %p124 = scmp.ne.s32.totalorder %s113, %s116
      %p125 = scmp.eq.s32.totalorder %s42, 1
      %p126 = por %p124, %p125
      %p127 = scmp.ne.s32.totalorder %s116, %s117
      %p128 = scmp.eq.s32.totalorder %s42, 0
      %p129 = por %p127, %p128
      %p130 = scmp.ne.s32.totalorder %s116, %s117
      %p131 = scmp.eq.s32.totalorder %s43, 1
      %p132 = por %p130, %p131
      %p134 = scmp.ne.s32.totalorder %s117, %s133
      %p135 = scmp.eq.s32.totalorder %s43, 0
      %p136 = por %p134, %p135
      %s137 = ssub.s32 %s44, %s56
      %s138 = ssub.s32 %s45, %s52
      %s139 = sor.u32 %s137, %s138
      %p140 = scmp.eq.s32.totalorder %s139, 0
      %s142 = sadd.s32 %s141, 1
      %s143 = scalar_select %p140, %s141, %s142
      %p146 = pneg %p140
      %p147 = scmp.eq.s32.totalorder %s37, 1
      %p148 = por %p146, %p147
      %p149 = scmp.ne.s32.totalorder %s141, %s144
      %p150 = scmp.eq.s32.totalorder %s37, 0
      %p151 = por %p149, %p150
      %p152 = scmp.ne.s32.totalorder %s141, %s144
      %p153 = scmp.eq.s32.totalorder %s42, 1
      %p154 = por %p152, %p153
      %p155 = scmp.ne.s32.totalorder %s144, %s145
      %p156 = scmp.eq.s32.totalorder %s42, 0
      %p157 = por %p155, %p156
      %p158 = scmp.ne.s32.totalorder %s144, %s145
      %p159 = scmp.eq.s32.totalorder %s43, 1
      %p160 = por %p158, %p159
      %p162 = scmp.ne.s32.totalorder %s145, %s161
      %p163 = scmp.eq.s32.totalorder %s43, 0
      %p164 = por %p162, %p163
      %s166 = sadd.s32 %s165, 1
      %p169 = scmp.eq.s32.totalorder %s37, 1
      %p170 = scmp.ne.s32.totalorder %s165, %s167
      %p171 = scmp.eq.s32.totalorder %s37, 0
      %p172 = por %p170, %p171
      %p173 = scmp.ne.s32.totalorder %s165, %s167
      %p174 = scmp.eq.s32.totalorder %s42, 1
      %p175 = por %p173, %p174
      %p176 = scmp.ne.s32.totalorder %s167, %s168
      %p177 = scmp.eq.s32.totalorder %s42, 0
      %p178 = por %p176, %p177
      %p179 = scmp.ne.s32.totalorder %s167, %s168
      %p180 = scmp.eq.s32.totalorder %s43, 1
      %p181 = por %p179, %p180
      %p183 = scmp.ne.s32.totalorder %s168, %s182
      %p184 = scmp.eq.s32.totalorder %s43, 0
      %p185 = por %p183, %p184
      %s187 = sadd.s32 %s186, 1
      %p190 = scmp.eq.s32.totalorder %s37, 1
      %p191 = scmp.ne.s32.totalorder %s186, %s188
      %p192 = scmp.eq.s32.totalorder %s37, 0
      %p193 = por %p191, %p192
      %p194 = scmp.ne.s32.totalorder %s186, %s188
      %p195 = scmp.eq.s32.totalorder %s42, 1
      %p196 = por %p194, %p195
      %p197 = scmp.ne.s32.totalorder %s188, %s189
      %p198 = scmp.eq.s32.totalorder %s42, 0
      %p199 = por %p197, %p198
      %p200 = scmp.ne.s32.totalorder %s188, %s189
      %p201 = scmp.eq.s32.totalorder %s43, 1
      %p202 = por %p200, %p201
      %p204 = scmp.ne.s32.totalorder %s189, %s203
      %p205 = scmp.eq.s32.totalorder %s43, 0
      %p206 = por %p204, %p205
      %s208 = sadd.s32 %s207, 1
      %p211 = scmp.eq.s32.totalorder %s37, 1
      %p212 = scmp.ne.s32.totalorder %s207, %s209
      %p213 = scmp.eq.s32.totalorder %s37, 0
      %p214 = por %p212, %p213
      %p215 = scmp.ne.s32.totalorder %s207, %s209
      %p216 = scmp.eq.s32.totalorder %s42, 1
      %p217 = por %p215, %p216
      %p218 = scmp.ne.s32.totalorder %s209, %s210
      %p219 = scmp.eq.s32.totalorder %s42, 0
      %p220 = por %p218, %p219
      %p221 = scmp.ne.s32.totalorder %s209, %s210
      %p222 = scmp.eq.s32.totalorder %s43, 1
      %p223 = por %p221, %p222
      %p225 = scmp.ne.s32.totalorder %s210, %s224
      %p226 = scmp.eq.s32.totalorder %s43, 0
      %p227 = por %p225, %p226
      %s229 = sadd.s32 %s228, 1
      %p232 = scmp.eq.s32.totalorder %s37, 1
      %p233 = scmp.ne.s32.totalorder %s228, %s230
      %p234 = scmp.eq.s32.totalorder %s37, 0
      %p235 = por %p233, %p234
      %p236 = scmp.ne.s32.totalorder %s228, %s230
      %p237 = scmp.eq.s32.totalorder %s42, 1
      %p238 = por %p236, %p237
      %p239 = scmp.ne.s32.totalorder %s230, %s231
      %p240 = scmp.eq.s32.totalorder %s42, 0
      %p241 = por %p239, %p240
      %p242 = scmp.ne.s32.totalorder %s230, %s231
      %p243 = scmp.eq.s32.totalorder %s43, 1
      %p244 = por %p242, %p243
      %p246 = scmp.ne.s32.totalorder %s231, %s245
      %p247 = scmp.eq.s32.totalorder %s43, 0
      %p248 = por %p246, %p247
      %s250 = sadd.s32 %s249, 1
      %p253 = scmp.eq.s32.totalorder %s37, 1
      %p254 = scmp.ne.s32.totalorder %s249, %s251
      %p255 = scmp.eq.s32.totalorder %s37, 0
      %p256 = por %p254, %p255
      %p257 = scmp.ne.s32.totalorder %s249, %s251
      %p258 = scmp.eq.s32.totalorder %s42, 1
      %p259 = por %p257, %p258
      %p260 = scmp.ne.s32.totalorder %s251, %s252
      %p261 = scmp.eq.s32.totalorder %s42, 0
      %p262 = por %p260, %p261
      %p263 = scmp.ne.s32.totalorder %s251, %s252
      %p264 = scmp.eq.s32.totalorder %s43, 1
      %p265 = por %p263, %p264
      %p267 = scmp.ne.s32.totalorder %s252, %s266
      %p268 = scmp.eq.s32.totalorder %s43, 0
      %p269 = por %p267, %p268
      %s271 = sadd.s32 %s270, 1
      %p274 = scmp.eq.s32.totalorder %s37, 1
      %p275 = scmp.ne.s32.totalorder %s270, %s272
      %p276 = scmp.eq.s32.totalorder %s37, 0
      %p277 = por %p275, %p276
      %p278 = scmp.ne.s32.totalorder %s270, %s272
      %p279 = scmp.eq.s32.totalorder %s42, 1
      %p280 = por %p278, %p279
      %p281 = scmp.ne.s32.totalorder %s272, %s273
      %p282 = scmp.eq.s32.totalorder %s42, 0
      %p283 = por %p281, %p282
      %p284 = scmp.ne.s32.totalorder %s272, %s273
      %p285 = scmp.eq.s32.totalorder %s43, 1
      %p286 = por %p284, %p285
      %p288 = scmp.ne.s32.totalorder %s273, %s287
      %p289 = scmp.eq.s32.totalorder %s43, 0
      %p290 = por %p288, %p289
      %s292 = sadd.s32 %s291, 1
      %p295 = scmp.eq.s32.totalorder %s37, 1
      %p296 = scmp.ne.s32.totalorder %s291, %s293
      %p297 = scmp.eq.s32.totalorder %s37, 0
      %p298 = por %p296, %p297
      %p299 = scmp.ne.s32.totalorder %s291, %s293
      %p300 = scmp.eq.s32.totalorder %s42, 1
      %p301 = por %p299, %p300
      %p302 = scmp.ne.s32.totalorder %s293, %s294
      %p303 = scmp.eq.s32.totalorder %s42, 0
      %p304 = por %p302, %p303
      %p305 = scmp.ne.s32.totalorder %s293, %s294
      %p306 = scmp.eq.s32.totalorder %s43, 1
      %p307 = por %p305, %p306
      %p309 = scmp.ne.s32.totalorder %s294, %s308
      %p310 = scmp.eq.s32.totalorder %s43, 0
      %p311 = por %p309, %p310
      %s313 = sadd.s32 %s312, 1
      %p316 = scmp.eq.s32.totalorder %s37, 1
      %p317 = scmp.ne.s32.totalorder %s312, %s314
      %p318 = scmp.eq.s32.totalorder %s37, 0
      %p319 = por %p317, %p318
      %p320 = scmp.ne.s32.totalorder %s312, %s314
      %p321 = scmp.eq.s32.totalorder %s42, 1
      %p322 = por %p320, %p321
      %p323 = scmp.ne.s32.totalorder %s314, %s315
      %p324 = scmp.eq.s32.totalorder %s42, 0
      %p325 = por %p323, %p324
      %p326 = scmp.ne.s32.totalorder %s314, %s315
      %p327 = scmp.eq.s32.totalorder %s43, 1
      %p328 = por %p326, %p327
      %p330 = scmp.ne.s32.totalorder %s315, %s329
      %p331 = scmp.eq.s32.totalorder %s43, 0
      %p332 = por %p330, %p331
      %s334 = sadd.s32 %s333, 1
      %p337 = scmp.eq.s32.totalorder %s37, 1
      %p338 = scmp.ne.s32.totalorder %s333, %s335
      %p339 = scmp.eq.s32.totalorder %s37, 0
      %p340 = por %p338, %p339
      %p341 = scmp.ne.s32.totalorder %s333, %s335
      %p342 = scmp.eq.s32.totalorder %s42, 1
      %p343 = por %p341, %p342
      %p344 = scmp.ne.s32.totalorder %s335, %s336
      %p345 = scmp.eq.s32.totalorder %s42, 0
      %p346 = por %p344, %p345
      %p347 = scmp.ne.s32.totalorder %s335, %s336
      %p348 = scmp.eq.s32.totalorder %s43, 1
      %p349 = por %p347, %p348
      %p351 = scmp.ne.s32.totalorder %s336, %s350
      %p352 = scmp.eq.s32.totalorder %s43, 0
      %p353 = por %p351, %p352
      %s355 = sadd.s32 %s354, 1
      %p358 = scmp.eq.s32.totalorder %s37, 1
      %p359 = scmp.ne.s32.totalorder %s354, %s356
      %p360 = scmp.eq.s32.totalorder %s37, 0
      %p361 = por %p359, %p360
      %p362 = scmp.ne.s32.totalorder %s354, %s356
      %p363 = scmp.eq.s32.totalorder %s42, 1
      %p364 = por %p362, %p363
      %p365 = scmp.ne.s32.totalorder %s356, %s357
      %p366 = scmp.eq.s32.totalorder %s42, 0
      %p367 = por %p365, %p366
      %p368 = scmp.ne.s32.totalorder %s356, %s357
      %p369 = scmp.eq.s32.totalorder %s43, 1
      %p370 = por %p368, %p369
      %p372 = scmp.ne.s32.totalorder %s357, %s371
      %p373 = scmp.eq.s32.totalorder %s43, 0
      %p374 = por %p372, %p373
      %s376 = sadd.s32 %s375, 1
      %p379 = scmp.eq.s32.totalorder %s37, 1
      %p380 = scmp.ne.s32.totalorder %s375, %s377
      %p381 = scmp.eq.s32.totalorder %s37, 0
      %p382 = por %p380, %p381
      %p383 = scmp.ne.s32.totalorder %s375, %s377
      %p384 = scmp.eq.s32.totalorder %s42, 1
      %p385 = por %p383, %p384
      %p386 = scmp.ne.s32.totalorder %s377, %s378
      %p387 = scmp.eq.s32.totalorder %s42, 0
      %p388 = por %p386, %p387
      %p389 = scmp.ne.s32.totalorder %s377, %s378
      %p390 = scmp.eq.s32.totalorder %s43, 1
      %p391 = por %p389, %p390
      %p393 = scmp.ne.s32.totalorder %s378, %s392
      %p394 = scmp.eq.s32.totalorder %s43, 0
      %p395 = por %p393, %p394
      %s397 = sadd.s32 %s396, 1
      %p400 = scmp.eq.s32.totalorder %s37, 1
      %p401 = scmp.ne.s32.totalorder %s396, %s398
      %p402 = scmp.eq.s32.totalorder %s37, 0
      %p403 = por %p401, %p402
      %p404 = scmp.ne.s32.totalorder %s396, %s398
      %p405 = scmp.eq.s32.totalorder %s42, 1
      %p406 = por %p404, %p405
      %p407 = scmp.ne.s32.totalorder %s398, %s399
      %p408 = scmp.eq.s32.totalorder %s42, 0
      %p409 = por %p407, %p408
      %p410 = scmp.ne.s32.totalorder %s398, %s399
      %p411 = scmp.eq.s32.totalorder %s43, 1
      %p412 = por %p410, %p411
      %p414 = scmp.ne.s32.totalorder %s399, %s413
      %p415 = scmp.eq.s32.totalorder %s43, 0
      %p416 = por %p414, %p415
      %s418 = sadd.s32 %s417, 1
      %p421 = scmp.eq.s32.totalorder %s37, 1
      %p422 = scmp.ne.s32.totalorder %s417, %s419
      %p423 = scmp.eq.s32.totalorder %s37, 0
      %p424 = por %p422, %p423
      %p425 = scmp.ne.s32.totalorder %s417, %s419
      %p426 = scmp.eq.s32.totalorder %s42, 1
      %p427 = por %p425, %p426
      %p428 = scmp.ne.s32.totalorder %s419, %s420
      %p429 = scmp.eq.s32.totalorder %s42, 0
      %p430 = por %p428, %p429
      %p431 = scmp.ne.s32.totalorder %s419, %s420
      %p432 = scmp.eq.s32.totalorder %s43, 1
      %p433 = por %p431, %p432
      %p435 = scmp.ne.s32.totalorder %s420, %s434
      %p436 = scmp.eq.s32.totalorder %s43, 0
      %p437 = por %p435, %p436
      %s439 = sadd.s32 %s438, 1
      %p442 = scmp.eq.s32.totalorder %s37, 1
      %p443 = scmp.ne.s32.totalorder %s438, %s440
      %p444 = scmp.eq.s32.totalorder %s37, 0
      %p445 = por %p443, %p444
      %p446 = scmp.ne.s32.totalorder %s438, %s440
      %p447 = scmp.eq.s32.totalorder %s42, 1
      %p448 = por %p446, %p447
      %p449 = scmp.ne.s32.totalorder %s440, %s441
      %p450 = scmp.eq.s32.totalorder %s42, 0
      %p451 = por %p449, %p450
      %p452 = scmp.ne.s32.totalorder %s440, %s441
      %p453 = scmp.eq.s32.totalorder %s43, 1
      %p454 = por %p452, %p453
      %p456 = scmp.ne.s32.totalorder %s441, %s455
      %p457 = scmp.eq.s32.totalorder %s43, 0
      %p458 = por %p456, %p457
      %s460 = sadd.s32 %s459, 1
      %p463 = scmp.eq.s32.totalorder %s37, 1
      %p464 = scmp.ne.s32.totalorder %s459, %s461
      %p465 = scmp.eq.s32.totalorder %s37, 0
      %p466 = por %p464, %p465
      %p467 = scmp.ne.s32.totalorder %s459, %s461
      %p468 = scmp.eq.s32.totalorder %s42, 1
      %p469 = por %p467, %p468
      %p470 = scmp.ne.s32.totalorder %s461, %s462
      %p471 = scmp.eq.s32.totalorder %s42, 0
      %p472 = por %p470, %p471
      %p473 = scmp.ne.s32.totalorder %s461, %s462
      %p474 = scmp.eq.s32.totalorder %s43, 1
      %p475 = por %p473, %p474
      %p477 = scmp.ne.s32.totalorder %s462, %s476
      %p478 = scmp.eq.s32.totalorder %s43, 0
      %p479 = por %p477, %p478
      %s481 = sadd.s32 %s480, 1
      %p484 = scmp.eq.s32.totalorder %s37, 1
      %p485 = scmp.ne.s32.totalorder %s480, %s482
      %p486 = scmp.eq.s32.totalorder %s37, 0
      %p487 = por %p485, %p486
      %p488 = scmp.ne.s32.totalorder %s480, %s482
      %p489 = scmp.eq.s32.totalorder %s42, 1
      %p490 = por %p488, %p489
      %p491 = scmp.ne.s32.totalorder %s482, %s483
      %p492 = scmp.eq.s32.totalorder %s42, 0
      %p493 = por %p491, %p492
      %p494 = scmp.ne.s32.totalorder %s482, %s483
      %p495 = scmp.eq.s32.totalorder %s43, 1
      %p496 = por %p494, %p495
      %p498 = scmp.ne.s32.totalorder %s483, %s497
      %p499 = scmp.eq.s32.totalorder %s43, 0
      %p500 = por %p498, %p499
      %s501 = ssub.s32 %s44, %s56
      %s502 = ssub.s32 %s45, %s52
      %s503 = sor.u32 %s501, %s502
      %p504 = scmp.eq.s32.totalorder %s503, 0
      %s506 = sadd.s32 %s505, 1
      %s507 = scalar_select %p504, %s505, %s506
      %p510 = pneg %p504
      %p511 = scmp.eq.s32.totalorder %s37, 1
      %p512 = por %p510, %p511
      %p513 = scmp.ne.s32.totalorder %s505, %s508
      %p514 = scmp.eq.s32.totalorder %s37, 0
      %p515 = por %p513, %p514
      %p516 = scmp.ne.s32.totalorder %s505, %s508
      %p517 = scmp.eq.s32.totalorder %s42, 1
      %p518 = por %p516, %p517
      %p519 = scmp.ne.s32.totalorder %s508, %s509
      %p520 = scmp.eq.s32.totalorder %s42, 0
      %p521 = por %p519, %p520
      %p522 = scmp.ne.s32.totalorder %s508, %s509
      %p523 = scmp.eq.s32.totalorder %s43, 1
      %p524 = por %p522, %p523
      %p526 = scmp.ne.s32.totalorder %s509, %s525
      %p527 = scmp.eq.s32.totalorder %s43, 0
      %p528 = por %p526, %p527
      %p529 = scmp.le.s32.totalorder 1, %s37
      %p530 = scmp.lt.s32.totalorder %s37, 3
      %p531 = pnand %p529, %p530
      %p532 = pneg %p531
      // Predicated region
      $region9: #{tpu_custom_call.1} parent=5 // pred_check
        _
      $region10: #{tpu_custom_call.1} parent=5 // pred_check_branch
        %534 = sbr.rel (%p531) target = $region12
      $region11: #{tpu_custom_call.1} parent=5 // pred_region
        %s535 = ssub.s32 %s37, 1
        // Predicated region
        $region13: #{tpu_custom_call.1} parent=11 // pred_check
          %p536 = pneg %p178
        $region14: #{tpu_custom_call.1} parent=11 // pred_check_branch
          %538 = sbr.rel (%p536) target = $region16
        $region15: #{tpu_custom_call.1} parent=11 // pred_region
          _
        $region16: #{tpu_custom_call.1} parent=11 // pred_fallthru
          _
        // Predicated region
        $region17: #{tpu_custom_call.1} parent=11 // pred_check
          %p539 = pneg %p199
        $region18: #{tpu_custom_call.1} parent=11 // pred_check_branch
          %541 = sbr.rel (%p539) target = $region20
        $region19: #{tpu_custom_call.1} parent=11 // pred_region
          _
        $region20: #{tpu_custom_call.1} parent=11 // pred_fallthru
          _
        // Predicated region
        $region21: #{tpu_custom_call.1} parent=11 // pred_check
          %p542 = pneg %p220
        $region22: #{tpu_custom_call.1} parent=11 // pred_check_branch
          %544 = sbr.rel (%p542) target = $region24
        $region23: #{tpu_custom_call.1} parent=11 // pred_region
          _
        $region24: #{tpu_custom_call.1} parent=11 // pred_fallthru
          _
        // Predicated region
        $region25: #{tpu_custom_call.1} parent=11 // pred_check
          %p545 = pneg %p241
        $region26: #{tpu_custom_call.1} parent=11 // pred_check_branch
          %547 = sbr.rel (%p545) target = $region28
        $region27: #{tpu_custom_call.1} parent=11 // pred_region
          _
        $region28: #{tpu_custom_call.1} parent=11 // pred_fallthru
          _
        // Predicated region
        $region29: #{tpu_custom_call.1} parent=11 // pred_check
          %p548 = pneg %p262
        $region30: #{tpu_custom_call.1} parent=11 // pred_check_branch
          %550 = sbr.rel (%p548) target = $region32
        $region31: #{tpu_custom_call.1} parent=11 // pred_region
          %552 = vsyncadd [#allocation9], 0
          %s553 = sshll.u32 %s8, 4
          %s554 = int_to_ptr.hbm [resolvable:$true] %s553
          %s555 = sshll.u32 [#allocation8], 4
          %s556 = int_to_ptr.vmem [resolvable:$true] %s555
          %561 = dma.hbm_to_vmem [thread:$0]  %s554, 256, %s556, [#allocation9], 64, 64, 4
        $region32: #{tpu_custom_call.1} parent=11 // pred_fallthru
          _
        // Predicated region
        $region33: #{tpu_custom_call.1} parent=11 // pred_check
          %p562 = pneg %p283
        $region34: #{tpu_custom_call.1} parent=11 // pred_check_branch
          %564 = sbr.rel (%p562) target = $region36
        $region35: #{tpu_custom_call.1} parent=11 // pred_region
          _
        $region36: #{tpu_custom_call.1} parent=11 // pred_fallthru
          _
        // Predicated region
        $region37: #{tpu_custom_call.1} parent=11 // pred_check
          %p565 = pneg %p304
        $region38: #{tpu_custom_call.1} parent=11 // pred_check_branch
          %567 = sbr.rel (%p565) target = $region40
        $region39: #{tpu_custom_call.1} parent=11 // pred_region
          %569 = vsyncadd [#allocation9], 0
          %s570 = sshll.u32 %s10, 4
          %s571 = int_to_ptr.hbm [resolvable:$true] %s570
          %s572 = sshll.u32 [#allocation10], 4
          %s573 = int_to_ptr.vmem [resolvable:$true] %s572
          %578 = dma.hbm_to_vmem [thread:$0]  %s571, 256, %s573, [#allocation9], 64, 64, 4
        $region40: #{tpu_custom_call.1} parent=11 // pred_fallthru
          _
        // Predicated region
        $region41: #{tpu_custom_call.1} parent=11 // pred_check
          %p579 = pneg %p325
        $region42: #{tpu_custom_call.1} parent=11 // pred_check_branch
          %581 = sbr.rel (%p579) target = $region44
        $region43: #{tpu_custom_call.1} parent=11 // pred_region
          _
        $region44: #{tpu_custom_call.1} parent=11 // pred_fallthru
          _
        // Predicated region
        $region45: #{tpu_custom_call.1} parent=11 // pred_check
          %p582 = pneg %p346
        $region46: #{tpu_custom_call.1} parent=11 // pred_check_branch
          %584 = sbr.rel (%p582) target = $region48
        $region47: #{tpu_custom_call.1} parent=11 // pred_region
          %586 = vsyncadd [#allocation12], 0
          %s587 = sshll.u32 %s12, 4
          %s588 = int_to_ptr.hbm [resolvable:$true] %s587
          %s589 = sshll.u32 [#allocation11], 4
          %s590 = int_to_ptr.vmem [resolvable:$true] %s589
          %595 = dma.hbm_to_vmem [thread:$0]  %s588, 256, %s590, [#allocation12], 64, 64, 4
        $region48: #{tpu_custom_call.1} parent=11 // pred_fallthru
          _
        // Predicated region
        $region49: #{tpu_custom_call.1} parent=11 // pred_check
          %p596 = pneg %p367
        $region50: #{tpu_custom_call.1} parent=11 // pred_check_branch
          %598 = sbr.rel (%p596) target = $region52
        $region51: #{tpu_custom_call.1} parent=11 // pred_region
          _
        $region52: #{tpu_custom_call.1} parent=11 // pred_fallthru
          _
        // Predicated region
        $region53: #{tpu_custom_call.1} parent=11 // pred_check
          %p599 = pneg %p388
        $region54: #{tpu_custom_call.1} parent=11 // pred_check_branch
          %601 = sbr.rel (%p599) target = $region56
        $region55: #{tpu_custom_call.1} parent=11 // pred_region
          _
        $region56: #{tpu_custom_call.1} parent=11 // pred_fallthru
          _
        // Predicated region
        $region57: #{tpu_custom_call.1} parent=11 // pred_check
          %p602 = pneg %p409
        $region58: #{tpu_custom_call.1} parent=11 // pred_check_branch
          %604 = sbr.rel (%p602) target = $region60
        $region59: #{tpu_custom_call.1} parent=11 // pred_region
          _
        $region60: #{tpu_custom_call.1} parent=11 // pred_fallthru
          _
        // Predicated region
        $region61: #{tpu_custom_call.1} parent=11 // pred_check
          %p605 = pneg %p430
        $region62: #{tpu_custom_call.1} parent=11 // pred_check_branch
          %607 = sbr.rel (%p605) target = $region64
        $region63: #{tpu_custom_call.1} parent=11 // pred_region
          _
        $region64: #{tpu_custom_call.1} parent=11 // pred_fallthru
          _
        // Predicated region
        $region65: #{tpu_custom_call.1} parent=11 // pred_check
          %p608 = pneg %p451
        $region66: #{tpu_custom_call.1} parent=11 // pred_check_branch
          %610 = sbr.rel (%p608) target = $region68
        $region67: #{tpu_custom_call.1} parent=11 // pred_region
          _
        $region68: #{tpu_custom_call.1} parent=11 // pred_fallthru
          _
        // Predicated region
        $region69: #{tpu_custom_call.1} parent=11 // pred_check
          %p611 = pneg %p472
        $region70: #{tpu_custom_call.1} parent=11 // pred_check_branch
          %613 = sbr.rel (%p611) target = $region72
        $region71: #{tpu_custom_call.1} parent=11 // pred_region
          _
        $region72: #{tpu_custom_call.1} parent=11 // pred_fallthru
          _
        // Predicated region
        $region73: #{tpu_custom_call.1} parent=11 // pred_check
          %p614 = pneg %p493
        $region74: #{tpu_custom_call.1} parent=11 // pred_check_branch
          %616 = sbr.rel (%p614) target = $region76
        $region75: #{tpu_custom_call.1} parent=11 // pred_region
          _
        $region76: #{tpu_custom_call.1} parent=11 // pred_fallthru
          _
      $region12: #{tpu_custom_call.1} parent=5 // pred_fallthru
        _
      %p617 = scmp.lt.s32.totalorder %s37, 2
      // Predicated region
      $region77: #{tpu_custom_call.1} parent=5 // pred_check
        %p618 = pneg %p617
      $region78: #{tpu_custom_call.1} parent=5 // pred_check_branch
        %620 = sbr.rel (%p618) target = $region80
      $region79: #{tpu_custom_call.1} parent=5 // pred_region
        // Predicated region
        $region81: #{tpu_custom_call.1} parent=79 // pred_check
          %p621 = pneg %p71
        $region82: #{tpu_custom_call.1} parent=79 // pred_check_branch
          %623 = sbr.rel (%p621) target = $region84
        $region83: #{tpu_custom_call.1} parent=79 // pred_region
          %p624 = scmp.lt.s32.totalorder %s44, 1
          %s625 = scalar_select %p624, %s44, 1
          %p626 = scmp.lt.s32.totalorder %s45, 0
          %s627 = scalar_select %p626, %s45, 0
          %s628 = sadd.s32 %s627, %s625
          %s629 = smul.addr %s628, 8
          %s630 = scalar_lea.vmem %s0, %s629
        $region84: #{tpu_custom_call.1} parent=79 // pred_fallthru
          _
        // Predicated region
        $region85: #{tpu_custom_call.1} parent=79 // pred_check
          %p631 = pneg %p97
        $region86: #{tpu_custom_call.1} parent=79 // pred_check_branch
          %633 = sbr.rel (%p631) target = $region88
        $region87: #{tpu_custom_call.1} parent=79 // pred_region
          %s634 = sand.u32 %s87, 1
          %s635 = scalar_lea.sflag [#allocation3], %s634
          %s636 = sand.u32 %s87, 1
          %s637 = smul.addr %s636, 4
          %s638 = scalar_lea.vmem [#allocation2], %s637
          %640 = vsyncadd %s635, 0
          %s641 = smul.addr %s44, 4
          %s642 = scalar_lea.hbm %s1, %s641
          %s644 = sshll.u32 %s642, 4
          %s645 = int_to_ptr.hbm [resolvable:$true] %s644
          %s646 = sshll.u32 %s638, 4
          %s647 = int_to_ptr.vmem [resolvable:$true] %s646
          %649 = dma.hbm_to_vmem [thread:$0]  %s645, 64, %s647, %s635
        $region88: #{tpu_custom_call.1} parent=79 // pred_fallthru
          _
        // Predicated region
        $region89: #{tpu_custom_call.1} parent=79 // pred_check
          %p650 = pneg %p123
        $region90: #{tpu_custom_call.1} parent=79 // pred_check_branch
          %652 = sbr.rel (%p650) target = $region92
        $region91: #{tpu_custom_call.1} parent=79 // pred_region
          %s653 = sand.u32 %s37, 1
          %s654 = scalar_lea.sflag [#allocation6], %s653
          %s655 = sand.u32 %s113, 1
          %s656 = smul.addr %s655, 4
          %s657 = scalar_lea.vmem [#allocation5], %s656
          %659 = vsyncadd %s654, 0
          %s660 = smul.addr %s44, 4
          %s661 = scalar_lea.hbm %s2, %s660
          %s663 = sshll.u32 %s661, 4
          %s664 = int_to_ptr.hbm [resolvable:$true] %s663
          %s665 = sshll.u32 %s657, 4
          %s666 = int_to_ptr.vmem [resolvable:$true] %s665
          %668 = dma.hbm_to_vmem [thread:$0]  %s664, 64, %s666, %s654
        $region92: #{tpu_custom_call.1} parent=79 // pred_fallthru
          _
        // Predicated region
        $region93: #{tpu_custom_call.1} parent=79 // pred_check
          %p669 = pneg %p151
        $region94: #{tpu_custom_call.1} parent=79 // pred_check_branch
          %671 = sbr.rel (%p669) target = $region96
        $region95: #{tpu_custom_call.1} parent=79 // pred_region
          %s672 = sand.u32 %s37, 1
          %s673 = scalar_lea.sflag [#allocation6], %s672
          %s674 = sand.u32 %s141, 1
          %s675 = smul.addr %s674, 4
          %s676 = scalar_lea.vmem [#allocation7], %s675
          %678 = vsyncadd %s673, 0
          %s679 = sadd.s32 %s45, %s44
          %s680 = smul.addr %s679, 4
          %s681 = scalar_lea.hbm %s3, %s680
          %s683 = sshll.u32 %s681, 4
          %s684 = int_to_ptr.hbm [resolvable:$true] %s683
          %s685 = sshll.u32 %s676, 4
          %s686 = int_to_ptr.vmem [resolvable:$true] %s685
          %688 = dma.hbm_to_vmem [thread:$0]  %s684, 64, %s686, %s673
        $region96: #{tpu_custom_call.1} parent=79 // pred_fallthru
          _
      $region80: #{tpu_custom_call.1} parent=5 // pred_fallthru
        _
      %p689 = scmp.le.s32.totalorder 1, %s37
      %p690 = scmp.lt.s32.totalorder %s37, 3
      %p691 = pnand %p689, %p690
      %p692 = pneg %p691
      // Predicated region
      $region97: #{tpu_custom_call.1} parent=5 // pred_check
        _
      $region98: #{tpu_custom_call.1} parent=5 // pred_check_branch
        %694 = sbr.rel (%p691) target = $region100
      $region99: #{tpu_custom_call.1} parent=5 // pred_region
        %s695 = ssub.s32 %s37, 1
        %s696 = sand.u32 %s90, 1
        %s697 = scalar_lea.sflag [#allocation3], %s696
        %s698 = sand.u32 %s90, 1
        %s699 = smul.addr %s698, 4
        %s700 = scalar_lea.vmem [#allocation2], %s699
        // Predicated region
        $region101: #{tpu_custom_call.1} parent=99 // pred_check
          %p701 = pneg %p103
        $region102: #{tpu_custom_call.1} parent=99 // pred_check_branch
          %703 = sbr.rel (%p701) target = $region104
        $region103: #{tpu_custom_call.1} parent=99 // pred_region
          %705 = dma.done %s697, 64
        $region104: #{tpu_custom_call.1} parent=99 // pred_fallthru
          _
        %s706 = sand.u32 %s42, 1
        %s707 = scalar_lea.sflag [#allocation6], %s706
        %s708 = sand.u32 %s116, 1
        %s709 = smul.addr %s708, 4
        %s710 = scalar_lea.vmem [#allocation5], %s709
        // Predicated region
        $region105: #{tpu_custom_call.1} parent=99 // pred_check
          %p711 = pneg %p129
        $region106: #{tpu_custom_call.1} parent=99 // pred_check_branch
          %713 = sbr.rel (%p711) target = $region108
        $region107: #{tpu_custom_call.1} parent=99 // pred_region
          %715 = dma.done %s707, 64
        $region108: #{tpu_custom_call.1} parent=99 // pred_fallthru
          _
        %s716 = sand.u32 %s42, 1
        %s717 = scalar_lea.sflag [#allocation6], %s716
        %s718 = sand.u32 %s144, 1
        %s719 = smul.addr %s718, 4
        %s720 = scalar_lea.vmem [#allocation7], %s719
        // Predicated region
        $region109: #{tpu_custom_call.1} parent=99 // pred_check
          %p721 = pneg %p157
        $region110: #{tpu_custom_call.1} parent=99 // pred_check_branch
          %723 = sbr.rel (%p721) target = $region112
        $region111: #{tpu_custom_call.1} parent=99 // pred_region
          %725 = dma.done %s717, 64
        $region112: #{tpu_custom_call.1} parent=99 // pred_fallthru
          _
        // Predicated region
        $region113: #{tpu_custom_call.1} parent=99 // pred_check
          %p726 = pneg %p262
        $region114: #{tpu_custom_call.1} parent=99 // pred_check_branch
          %728 = sbr.rel (%p726) target = $region116
        $region115: #{tpu_custom_call.1} parent=99 // pred_region
          %730 = dma.done [#allocation9], 256
        $region116: #{tpu_custom_call.1} parent=99 // pred_fallthru
          _
        // Predicated region
        $region117: #{tpu_custom_call.1} parent=99 // pred_check
          %p731 = pneg %p304
        $region118: #{tpu_custom_call.1} parent=99 // pred_check_branch
          %733 = sbr.rel (%p731) target = $region120
        $region119: #{tpu_custom_call.1} parent=99 // pred_region
          %735 = dma.done [#allocation9], 256
        $region120: #{tpu_custom_call.1} parent=99 // pred_fallthru
          _
        // Predicated region
        $region121: #{tpu_custom_call.1} parent=99 // pred_check
          %p736 = pneg %p346
        $region122: #{tpu_custom_call.1} parent=99 // pred_check_branch
          %738 = sbr.rel (%p736) target = $region124
        $region123: #{tpu_custom_call.1} parent=99 // pred_region
          %740 = dma.done [#allocation12], 256
        $region124: #{tpu_custom_call.1} parent=99 // pred_fallthru
          _
        %p741 = scmp.lt.s32.totalorder %s46, 1
        %s742 = scalar_select %p741, %s46, 1
        %p743 = scmp.lt.s32.totalorder %s47, 0
        %s744 = scalar_select %p743, %s47, 0
        %s745 = sadd.s32 %s744, %s742
        %s746 = smul.addr %s745, 8
        %s747 = scalar_lea.vmem %s0, %s746
        %p748 = pneg %p77
        %p749 = pneg %p74
        %s750 = sand.u32 %s90, 1
        %s751 = scalar_lea.sflag [#allocation3], %s750
        %s752 = sand.u32 %s90, 1
        %s753 = smul.addr %s752, 4
        %s754 = scalar_lea.vmem [#allocation2], %s753
        %p755 = pneg %p103
        %p756 = pneg %p100
        %s757 = sand.u32 %s42, 1
        %s758 = scalar_lea.sflag [#allocation6], %s757
        %s759 = sand.u32 %s116, 1
        %s760 = smul.addr %s759, 4
        %s761 = scalar_lea.vmem [#allocation5], %s760
        %p762 = pneg %p129
        %p763 = pneg %p126
        %s764 = sand.u32 %s42, 1
        %s765 = scalar_lea.sflag [#allocation6], %s764
        %s766 = sand.u32 %s144, 1
        %s767 = smul.addr %s766, 4
        %s768 = scalar_lea.vmem [#allocation7], %s767
        %p769 = pneg %p157
        %p770 = pneg %p154
        %p771 = pneg %p178
        %p772 = pneg %p175
        %p773 = pneg %p199
        %p774 = pneg %p196
        %p775 = pneg %p220
        %p776 = pneg %p217
        %p777 = pneg %p241
        %p778 = pneg %p238
        %p779 = pneg %p262
        %p780 = pneg %p259
        %p781 = pneg %p283
        %p782 = pneg %p280
        %p783 = pneg %p304
        %p784 = pneg %p301
        %p785 = pneg %p325
        %p786 = pneg %p322
        %p787 = pneg %p346
        %p788 = pneg %p343
        %p789 = pneg %p367
        %p790 = pneg %p364
        %p791 = pneg %p388
        %p792 = pneg %p385
        %p793 = pneg %p409
        %p794 = pneg %p406
        %p795 = pneg %p430
        %p796 = pneg %p427
        %p797 = pneg %p451
        %p798 = pneg %p448
        %p799 = pneg %p472
        %p800 = pneg %p469
        %p801 = pneg %p493
        %p802 = pneg %p490
        %p803 = pneg %p521
        %p804 = pneg %p518
        %s805 = sand.u32 %s508, 1
        %s806 = scalar_lea.sflag [#allocation4], %s805
        %s807 = sand.u32 %s508, 1
        %s808 = smul.addr %s807, 8
        %s809 = scalar_lea.vmem [#allocation13], %s808
        %p810 = scmp.lt.s32.totalorder %s46, 1
        %s811 = scalar_select %p810, %s46, 1
        %p812 = scmp.lt.s32.totalorder %s47, 0
        %s813 = scalar_select %p812, %s47, 0
        %s814 = sadd.s32 %s813, %s811
        %s815 = smul.addr %s814, 8
        %s816 = scalar_lea.vmem %s0, %s815
        %v818 = vld [vmem:[%s816] sm:$0xff]
        %v819 = vpack.c.bf16 %v818, %v818
        %v820 = vld [vmem:[%s700] sm:$0xf]
        %v821 = vld [vmem:[%s710] sm:$0xf]
        %v822 = vld [vmem:[%s4] sm:$0xf]
        %v823 = vld [vmem:[%s4 + $0x4] sm:$0xf]
        %v824 = vld [vmem:[%s4 + $0x8] sm:$0xf]
        %v825 = vld [vmem:[%s4 + $0xc] sm:$0xf]
        %v826 = vld [vmem:[%s5] sm:$0x1]
        %v828 = vperm.slane %v826, 0
        %v834 = vunpack.c.l.b16 %v822
        %v835 = vunpack.c.l.b16 %v823
        %v836 = vunpack.c.l.b16 %v824
        %v837 = vunpack.c.l.b16 %v825
        %v838 = vpack.c.b16 %v835, %v834
        %v839 = vpack.c.b16 %v837, %v836
        %vm842 = vcmask 261120
        %v844 = vsel %vm842, %v819, 0
        %846 = vmatpush.bf16.msra.mxu0 0
        %847 = vmatpush.bf16.msra.mxu0 0
        %848 = vmatpush.bf16.msra.mxu0 0
        %849 = vmatpush.bf16.msra.mxu0 0
        %850 = vmatpush.bf16.msra.mxu0 0
        %851 = vmatpush.bf16.msra.mxu0 0
        %852 = vmatpush.bf16.msra.mxu0 %v839
        %853 = vmatpush.bf16.msra.mxu0 %v838
        %854 = vmatmul.bf16.gmra.mxu0 %v844
        %v855 = vpop.f32.mrf.mxu0
        %v856 = vadd.f32 %v828, %v855
        %v857 = vpop.f32.mrf.mxu0
        %858 = vdwg.mxu0
        %v859 = vld [vmem:[%s6] sm:$0xf]
        %v860 = vld [vmem:[%s6 + $0x4] sm:$0xf]
        %v861 = vld [vmem:[%s6 + $0x8] sm:$0xf]
        %v862 = vld [vmem:[%s6 + $0xc] sm:$0xf]
        %v863 = vld [vmem:[%s7] sm:$0x1]
        %v865 = vperm.slane %v863, 0
        %v871 = vunpack.c.l.b16 %v859
        %v872 = vunpack.c.l.b16 %v860
        %v873 = vunpack.c.l.b16 %v861
        %v874 = vunpack.c.l.b16 %v862
        %v875 = vpack.c.b16 %v872, %v871
        %v876 = vpack.c.b16 %v874, %v873
        %v880 = vsel %vm842, %v820, 0
        %882 = vmatpush.bf16.msra.mxu0 0
        %883 = vmatpush.bf16.msra.mxu0 0
        %884 = vmatpush.bf16.msra.mxu0 0
        %885 = vmatpush.bf16.msra.mxu0 0
        %886 = vmatpush.bf16.msra.mxu0 0
        %887 = vmatpush.bf16.msra.mxu0 0
        %888 = vmatpush.bf16.msra.mxu0 %v876
        %889 = vmatpush.bf16.msra.mxu0 %v875
        %890 = vmatmul.bf16.gmra.mxu0 %v880
        %v891 = vpop.f32.mrf.mxu0
        %v892 = vadd.f32 %v865, %v891
        %v893 = vpop.f32.mrf.mxu0
        %894 = vdwg.mxu0
        %v895 = vld [vmem:[#allocation8] sm:$0xf]
        %v896 = vld [vmem:[#allocation8 + $0x4] sm:$0xf]
        %v897 = vld [vmem:[#allocation8 + $0x8] sm:$0xf]
        %v898 = vld [vmem:[#allocation8 + $0xc] sm:$0xf]
        %v899 = vld [vmem:[%s9] sm:$0x1]
        %v901 = vperm.slane %v899, 0
        %v907 = vunpack.c.l.b16 %v895
        %v908 = vunpack.c.l.b16 %v896
        %v909 = vunpack.c.l.b16 %v897
        %v910 = vunpack.c.l.b16 %v898
        %v911 = vpack.c.b16 %v908, %v907
        %v912 = vpack.c.b16 %v910, %v909
        %v916 = vsel %vm842, %v821, 0
        %918 = vmatpush.bf16.msra.mxu0 0
        %919 = vmatpush.bf16.msra.mxu0 0
        %920 = vmatpush.bf16.msra.mxu0 0
        %921 = vmatpush.bf16.msra.mxu0 0
        %922 = vmatpush.bf16.msra.mxu0 0
        %923 = vmatpush.bf16.msra.mxu0 0
        %924 = vmatpush.bf16.msra.mxu0 %v912
        %925 = vmatpush.bf16.msra.mxu0 %v911
        %926 = vmatmul.bf16.gmra.mxu0 %v916
        %v927 = vpop.f32.mrf.mxu0
        %v928 = vadd.f32 %v901, %v927
        %v929 = vpop.f32.mrf.mxu0
        %930 = vdwg.mxu0
        %v931 = vld [vmem:[%s720] sm:$0xf]
        %v932 = vunpack.c.l.bf16 %v931
        %vm933 = vcmp.eq.f32.partialorder %v932, 0.0
        %v934 = vsel %vm933, -1e+30, 0.0
        %936 = vrot.lane.b32.xlu0 %v856, 120
        %v937 = vpop.permute.xlu0 %936
        %939 = vrot.lane.b32.xlu0 %v856, 112
        %v940 = vpop.permute.xlu0 %939
        %942 = vrot.lane.b32.xlu0 %v856, 104
        %v943 = vpop.permute.xlu0 %942
        %v945 = vrot.slane %v940, 4
        %vm946 = vcmask 1047556
        %v947 = vsel %vm946, %v945, %v856
        %v948 = vrot.slane %v856, 4
        %v949 = vsel %vm946, %v940, %v948
        %v951 = vunpack.c.l.s4 1983009808
        %v952 = vunpack.c.0.s8 %v951
        %v953 = vperm.slane %v947, %v952
        %v955 = vunpack.c.l.s4 1983009808
        %v956 = vunpack.c.0.s8 %v955
        %v957 = vperm.slane %v949, %v956
        %v958 = vrot.slane %v943, 4
        %v959 = vsel %vm946, %v958, %v937
        %v960 = vrot.slane %v937, 4
        %v961 = vsel %vm946, %v943, %v960
        %v963 = vunpack.c.l.s4 1983009808
        %v964 = vunpack.c.0.s8 %v963
        %v965 = vperm.slane %v959, %v964
        %v967 = vunpack.c.l.s4 1983009808
        %v968 = vunpack.c.0.s8 %v967
        %v969 = vperm.slane %v961, %v968
        %v970 = vrot.slane %v965, 4
        %v971 = vsel %vm946, %v970, %v953
        %v972 = vrot.slane %v953, 4
        %v973 = vsel %vm946, %v965, %v972
        %v975 = vunpack.c.l.s4 1934713408
        %v976 = vunpack.c.0.s8 %v975
        %v977 = vperm.slane %v971, %v976
        %v979 = vunpack.c.l.s4 1934713408
        %v980 = vunpack.c.0.s8 %v979
        %v981 = vperm.slane %v973, %v980
        %v982 = vrot.slane %v969, 4
        %v983 = vsel %vm946, %v982, %v957
        %v984 = vrot.slane %v957, 4
        %v985 = vsel %vm946, %v969, %v984
        %v987 = vunpack.c.l.s4 1934713408
        %v988 = vunpack.c.0.s8 %v987
        %v989 = vperm.slane %v983, %v988
        %v991 = vunpack.c.l.s4 1934713408
        %v992 = vunpack.c.0.s8 %v991
        %v993 = vperm.slane %v985, %v992
        %v994 = vrot.slane %v977, 4
        %v995 = vsel %vm946, 0.0, %v994
        %v996 = vrot.slane %v981, 4
        %v997 = vsel %vm946, 0.0, %v996
        %v998 = vrot.slane %v989, 4
        %v999 = vsel %vm946, 0.0, %v998
        %v1000 = vrot.slane %v993, 4
        %v1001 = vsel %vm946, 0.0, %v1000
        %v1002 = vpack.c.bf16 %v977, %v977
        %v1003 = vpack.c.bf16 %v995, %v995
        %v1004 = vpack.c.bf16 %v981, %v981
        %v1005 = vpack.c.bf16 %v997, %v997
        %v1006 = vpack.c.bf16 %v989, %v989
        %v1007 = vpack.c.bf16 %v999, %v999
        %v1008 = vpack.c.bf16 %v993, %v993
        %v1009 = vpack.c.bf16 %v1001, %v1001
        %1011 = vrot.lane.b32.xlu0 %v892, 120
        %v1012 = vpop.permute.xlu0 %1011
        %1014 = vrot.lane.b32.xlu0 %v892, 112
        %v1015 = vpop.permute.xlu0 %1014
        %1017 = vrot.lane.b32.xlu0 %v892, 104
        %v1018 = vpop.permute.xlu0 %1017
        %v1020 = vrot.slane %v1015, 4
        %v1021 = vsel %vm946, %v1020, %v892
        %v1022 = vrot.slane %v892, 4
        %v1023 = vsel %vm946, %v1015, %v1022
        %v1025 = vunpack.c.l.s4 1983009808
        %v1026 = vunpack.c.0.s8 %v1025
        %v1027 = vperm.slane %v1021, %v1026
        %v1029 = vunpack.c.l.s4 1983009808
        %v1030 = vunpack.c.0.s8 %v1029
        %v1031 = vperm.slane %v1023, %v1030
        %v1032 = vrot.slane %v1018, 4
        %v1033 = vsel %vm946, %v1032, %v1012
        %v1034 = vrot.slane %v1012, 4
        %v1035 = vsel %vm946, %v1018, %v1034
        %v1037 = vunpack.c.l.s4 1983009808
        %v1038 = vunpack.c.0.s8 %v1037
        %v1039 = vperm.slane %v1033, %v1038
        %v1041 = vunpack.c.l.s4 1983009808
        %v1042 = vunpack.c.0.s8 %v1041
        %v1043 = vperm.slane %v1035, %v1042
        %v1044 = vrot.slane %v1039, 4
        %v1045 = vsel %vm946, %v1044, %v1027
        %v1046 = vrot.slane %v1027, 4
        %v1047 = vsel %vm946, %v1039, %v1046
        %v1049 = vunpack.c.l.s4 1934713408
        %v1050 = vunpack.c.0.s8 %v1049
        %v1051 = vperm.slane %v1045, %v1050
        %v1053 = vunpack.c.l.s4 1934713408
        %v1054 = vunpack.c.0.s8 %v1053
        %v1055 = vperm.slane %v1047, %v1054
        %v1056 = vrot.slane %v1043, 4
        %v1057 = vsel %vm946, %v1056, %v1031
        %v1058 = vrot.slane %v1031, 4
        %v1059 = vsel %vm946, %v1043, %v1058
        %v1061 = vunpack.c.l.s4 1934713408
        %v1062 = vunpack.c.0.s8 %v1061
        %v1063 = vperm.slane %v1057, %v1062
        %v1065 = vunpack.c.l.s4 1934713408
        %v1066 = vunpack.c.0.s8 %v1065
        %v1067 = vperm.slane %v1059, %v1066
        %v1068 = vrot.slane %v1051, 4
        %v1069 = vsel %vm946, 0.0, %v1068
        %v1070 = vrot.slane %v1055, 4
        %v1071 = vsel %vm946, 0.0, %v1070
        %v1072 = vrot.slane %v1063, 4
        %v1073 = vsel %vm946, 0.0, %v1072
        %v1074 = vrot.slane %v1067, 4
        %v1075 = vsel %vm946, 0.0, %v1074
        %v1076 = vpack.c.bf16 %v1051, %v1051
        %v1077 = vpack.c.bf16 %v1069, %v1069
        %v1078 = vpack.c.bf16 %v1055, %v1055
        %v1079 = vpack.c.bf16 %v1071, %v1071
        %v1080 = vpack.c.bf16 %v1063, %v1063
        %v1081 = vpack.c.bf16 %v1073, %v1073
        %v1082 = vpack.c.bf16 %v1067, %v1067
        %v1083 = vpack.c.bf16 %v1075, %v1075
        %1085 = vrot.lane.b32.xlu0 %v928, 120
        %v1086 = vpop.permute.xlu0 %1085
        %1088 = vrot.lane.b32.xlu0 %v928, 112
        %v1089 = vpop.permute.xlu0 %1088
        %1091 = vrot.lane.b32.xlu0 %v928, 104
        %v1092 = vpop.permute.xlu0 %1091
        %v1094 = vrot.slane %v1089, 4
        %v1095 = vsel %vm946, %v1094, %v928
        %v1096 = vrot.slane %v928, 4
        %v1097 = vsel %vm946, %v1089, %v1096
        %v1099 = vunpack.c.l.s4 1983009808
        %v1100 = vunpack.c.0.s8 %v1099
        %v1101 = vperm.slane %v1095, %v1100
        %v1103 = vunpack.c.l.s4 1983009808
        %v1104 = vunpack.c.0.s8 %v1103
        %v1105 = vperm.slane %v1097, %v1104
        %v1106 = vrot.slane %v1092, 4
        %v1107 = vsel %vm946, %v1106, %v1086
        %v1108 = vrot.slane %v1086, 4
        %v1109 = vsel %vm946, %v1092, %v1108
        %v1111 = vunpack.c.l.s4 1983009808
        %v1112 = vunpack.c.0.s8 %v1111
        %v1113 = vperm.slane %v1107, %v1112
        %v1115 = vunpack.c.l.s4 1983009808
        %v1116 = vunpack.c.0.s8 %v1115
        %v1117 = vperm.slane %v1109, %v1116
        %v1118 = vrot.slane %v1113, 4
        %v1119 = vsel %vm946, %v1118, %v1101
        %v1120 = vrot.slane %v1101, 4
        %v1121 = vsel %vm946, %v1113, %v1120
        %v1123 = vunpack.c.l.s4 1934713408
        %v1124 = vunpack.c.0.s8 %v1123
        %v1125 = vperm.slane %v1119, %v1124
        %v1127 = vunpack.c.l.s4 1934713408
        %v1128 = vunpack.c.0.s8 %v1127
        %v1129 = vperm.slane %v1121, %v1128
        %v1130 = vrot.slane %v1117, 4
        %v1131 = vsel %vm946, %v1130, %v1105
        %v1132 = vrot.slane %v1105, 4
        %v1133 = vsel %vm946, %v1117, %v1132
        %v1135 = vunpack.c.l.s4 1934713408
        %v1136 = vunpack.c.0.s8 %v1135
        %v1137 = vperm.slane %v1131, %v1136
        %v1139 = vunpack.c.l.s4 1934713408
        %v1140 = vunpack.c.0.s8 %v1139
        %v1141 = vperm.slane %v1133, %v1140
        %v1142 = vrot.slane %v1125, 4
        %v1143 = vsel %vm946, 0.0, %v1142
        %v1144 = vrot.slane %v1129, 4
        %v1145 = vsel %vm946, 0.0, %v1144
        %v1146 = vrot.slane %v1137, 4
        %v1147 = vsel %vm946, 0.0, %v1146
        %v1148 = vrot.slane %v1141, 4
        %v1149 = vsel %vm946, 0.0, %v1148
        %v1150 = vpack.c.bf16 %v1125, %v1125
        %v1151 = vpack.c.bf16 %v1143, %v1143
        %v1152 = vpack.c.bf16 %v1129, %v1129
        %v1153 = vpack.c.bf16 %v1145, %v1145
        %v1154 = vpack.c.bf16 %v1137, %v1137
        %v1155 = vpack.c.bf16 %v1147, %v1147
        %v1156 = vpack.c.bf16 %v1141, %v1141
        %v1157 = vpack.c.bf16 %v1149, %v1149
        %v1158 = vrot.slane %v1006, 4
        %vm1159 = vcmask 1047556
        %v1160 = vsel %vm1159, %v1158, %v1002
        %v1162 = vunpack.c.l.s4 1983009808
        %v1163 = vunpack.c.0.s8 %v1162
        %v1164 = vperm.slane %v1160, %v1163
        %v1165 = vrot.slane %v1008, 4
        %v1166 = vsel %vm1159, %v1165, %v1004
        %v1168 = vunpack.c.l.s4 1983009808
        %v1169 = vunpack.c.0.s8 %v1168
        %v1170 = vperm.slane %v1166, %v1169
        %v1171 = vrot.slane %v1170, 4
        %v1172 = vsel %vm1159, %v1171, %v1164
        %v1174 = vunpack.c.l.s4 1934713408
        %v1175 = vunpack.c.0.s8 %v1174
        %v1176 = vperm.slane %v1172, %v1175
        %v1177 = vrot.slane %v1176, 4
        %v1178 = vsel %vm1159, 0, %v1177
        %v1179 = vrot.slane %v1007, 4
        %v1180 = vsel %vm1159, %v1179, %v1003
        %v1182 = vunpack.c.l.s4 1983009808
        %v1183 = vunpack.c.0.s8 %v1182
        %v1184 = vperm.slane %v1180, %v1183
        %v1185 = vrot.slane %v1009, 4
        %v1186 = vsel %vm1159, %v1185, %v1005
        %v1188 = vunpack.c.l.s4 1983009808
        %v1189 = vunpack.c.0.s8 %v1188
        %v1190 = vperm.slane %v1186, %v1189
        %v1191 = vrot.slane %v1190, 4
        %v1192 = vsel %vm1159, %v1191, %v1184
        %v1194 = vunpack.c.l.s4 1934713408
        %v1195 = vunpack.c.0.s8 %v1194
        %v1196 = vperm.slane %v1192, %v1195
        %v1197 = vrot.slane %v1196, 4
        %v1198 = vsel %vm1159, 0, %v1197
        %v1201 = vpack.i.b16 %v1196, %v1176
        %v1202 = vshrl.u32 %v1176, 16
        %v1203 = vshrl.u32 %v1196, 16
        %v1204 = vpack.i.b16 %v1203, %v1202
        %v1207 = vpack.i.b16 %v1198, %v1178
        %v1208 = vshrl.u32 %v1178, 16
        %v1209 = vshrl.u32 %v1198, 16
        %v1210 = vpack.i.b16 %v1209, %v1208
        %1211 = vxpose.xlu0.c.b16.start [1/8] %v1076, 128
        %1212 = vxpose.xlu0.c.b16.cont [2/8] 0, 128
        %1213 = vxpose.xlu0.c.b16.cont [3/8] 0, 128
        %1214 = vxpose.xlu0.c.b16.cont [4/8] 0, 128
        %1215 = vxpose.xlu0.c.b16.cont [5/8] 0, 128
        %1216 = vxpose.xlu0.c.b16.cont [6/8] 0, 128
        %1217 = vxpose.xlu0.c.b16.cont [7/8] 0, 128
        %1218 = vxpose.xlu0.c.b16.end [8/8] 0, 128
        %v1219 = vpop.trf.xlu0
        %v1220 = vpop.trf.xlu0
        %v1221 = vpop.trf.xlu0
        %v1222 = vpop.trf.xlu0
        %v1223 = vpop.trf.xlu0
        %v1224 = vpop.trf.xlu0
        %v1225 = vpop.trf.xlu0
        %v1226 = vpop.trf.xlu0
        %1227 = vxpose.xlu0.c.b16.start [1/8] %v1077, 128
        %1228 = vxpose.xlu0.c.b16.cont [2/8] 0, 128
        %1229 = vxpose.xlu0.c.b16.cont [3/8] 0, 128
        %1230 = vxpose.xlu0.c.b16.cont [4/8] 0, 128
        %1231 = vxpose.xlu0.c.b16.cont [5/8] 0, 128
        %1232 = vxpose.xlu0.c.b16.cont [6/8] 0, 128
        %1233 = vxpose.xlu0.c.b16.cont [7/8] 0, 128
        %1234 = vxpose.xlu0.c.b16.end [8/8] 0, 128
        %v1235 = vpop.trf.xlu0
        %v1236 = vpop.trf.xlu0
        %v1237 = vpop.trf.xlu0
        %v1238 = vpop.trf.xlu0
        %v1239 = vpop.trf.xlu0
        %v1240 = vpop.trf.xlu0
        %v1241 = vpop.trf.xlu0
        %v1242 = vpop.trf.xlu0
        %1243 = vxpose.xlu0.c.b16.start [1/8] %v1078, 128
        %1244 = vxpose.xlu0.c.b16.cont [2/8] 0, 128
        %1245 = vxpose.xlu0.c.b16.cont [3/8] 0, 128
        %1246 = vxpose.xlu0.c.b16.cont [4/8] 0, 128
        %1247 = vxpose.xlu0.c.b16.cont [5/8] 0, 128
        %1248 = vxpose.xlu0.c.b16.cont [6/8] 0, 128
        %1249 = vxpose.xlu0.c.b16.cont [7/8] 0, 128
        %1250 = vxpose.xlu0.c.b16.end [8/8] 0, 128
        %v1251 = vpop.trf.xlu0
        %v1252 = vpop.trf.xlu0
        %v1253 = vpop.trf.xlu0
        %v1254 = vpop.trf.xlu0
        %v1255 = vpop.trf.xlu0
        %v1256 = vpop.trf.xlu0
        %v1257 = vpop.trf.xlu0
        %v1258 = vpop.trf.xlu0
        %1259 = vxpose.xlu0.c.b16.start [1/8] %v1079, 128
        %1260 = vxpose.xlu0.c.b16.cont [2/8] 0, 128
        %1261 = vxpose.xlu0.c.b16.cont [3/8] 0, 128
        %1262 = vxpose.xlu0.c.b16.cont [4/8] 0, 128
        %1263 = vxpose.xlu0.c.b16.cont [5/8] 0, 128
        %1264 = vxpose.xlu0.c.b16.cont [6/8] 0, 128
        %1265 = vxpose.xlu0.c.b16.cont [7/8] 0, 128
        %1266 = vxpose.xlu0.c.b16.end [8/8] 0, 128
        %v1267 = vpop.trf.xlu0
        %v1268 = vpop.trf.xlu0
        %v1269 = vpop.trf.xlu0
        %v1270 = vpop.trf.xlu0
        %v1271 = vpop.trf.xlu0
        %v1272 = vpop.trf.xlu0
        %v1273 = vpop.trf.xlu0
        %v1274 = vpop.trf.xlu0
        %1275 = vxpose.xlu0.c.b16.start [1/8] %v1080, 128
        %1276 = vxpose.xlu0.c.b16.cont [2/8] 0, 128
        %1277 = vxpose.xlu0.c.b16.cont [3/8] 0, 128
        %1278 = vxpose.xlu0.c.b16.cont [4/8] 0, 128
        %1279 = vxpose.xlu0.c.b16.cont [5/8] 0, 128
        %1280 = vxpose.xlu0.c.b16.cont [6/8] 0, 128
        %1281 = vxpose.xlu0.c.b16.cont [7/8] 0, 128
        %1282 = vxpose.xlu0.c.b16.end [8/8] 0, 128
        %v1283 = vpop.trf.xlu0
        %v1284 = vpop.trf.xlu0
        %v1285 = vpop.trf.xlu0
        %v1286 = vpop.trf.xlu0
        %v1287 = vpop.trf.xlu0
        %v1288 = vpop.trf.xlu0
        %v1289 = vpop.trf.xlu0
        %v1290 = vpop.trf.xlu0
        %1291 = vxpose.xlu0.c.b16.start [1/8] %v1081, 128
        %1292 = vxpose.xlu0.c.b16.cont [2/8] 0, 128
        %1293 = vxpose.xlu0.c.b16.cont [3/8] 0, 128
        %1294 = vxpose.xlu0.c.b16.cont [4/8] 0, 128
        %1295 = vxpose.xlu0.c.b16.cont [5/8] 0, 128
        %1296 = vxpose.xlu0.c.b16.cont [6/8] 0, 128
        %1297 = vxpose.xlu0.c.b16.cont [7/8] 0, 128
        %1298 = vxpose.xlu0.c.b16.end [8/8] 0, 128
        %v1299 = vpop.trf.xlu0
        %v1300 = vpop.trf.xlu0
        %v1301 = vpop.trf.xlu0
        %v1302 = vpop.trf.xlu0
        %v1303 = vpop.trf.xlu0
        %v1304 = vpop.trf.xlu0
        %v1305 = vpop.trf.xlu0
        %v1306 = vpop.trf.xlu0
        %1307 = vxpose.xlu0.c.b16.start [1/8] %v1082, 128
        %1308 = vxpose.xlu0.c.b16.cont [2/8] 0, 128
        %1309 = vxpose.xlu0.c.b16.cont [3/8] 0, 128
        %1310 = vxpose.xlu0.c.b16.cont [4/8] 0, 128
        %1311 = vxpose.xlu0.c.b16.cont [5/8] 0, 128
        %1312 = vxpose.xlu0.c.b16.cont [6/8] 0, 128
        %1313 = vxpose.xlu0.c.b16.cont [7/8] 0, 128
        %1314 = vxpose.xlu0.c.b16.end [8/8] 0, 128
        %v1315 = vpop.trf.xlu0
        %v1316 = vpop.trf.xlu0
        %v1317 = vpop.trf.xlu0
        %v1318 = vpop.trf.xlu0
        %v1319 = vpop.trf.xlu0
        %v1320 = vpop.trf.xlu0
        %v1321 = vpop.trf.xlu0
        %v1322 = vpop.trf.xlu0
        %1323 = vxpose.xlu0.c.b16.start [1/8] %v1083, 128
        %1324 = vxpose.xlu0.c.b16.cont [2/8] 0, 128
        %1325 = vxpose.xlu0.c.b16.cont [3/8] 0, 128
        %1326 = vxpose.xlu0.c.b16.cont [4/8] 0, 128
        %1327 = vxpose.xlu0.c.b16.cont [5/8] 0, 128
        %1328 = vxpose.xlu0.c.b16.cont [6/8] 0, 128
        %1329 = vxpose.xlu0.c.b16.cont [7/8] 0, 128
        %1330 = vxpose.xlu0.c.b16.end [8/8] 0, 128
        %v1331 = vpop.trf.xlu0
        %v1332 = vpop.trf.xlu0
        %v1333 = vpop.trf.xlu0
        %v1334 = vpop.trf.xlu0
        %v1335 = vpop.trf.xlu0
        %v1336 = vpop.trf.xlu0
        %v1337 = vpop.trf.xlu0
        %v1338 = vpop.trf.xlu0
        %v1339 = vrot.slane %v1283, 4
        %v1340 = vsel %vm1159, %v1339, %v1219
        %v1342 = vunpack.c.l.s4 1983009808
        %v1343 = vunpack.c.0.s8 %v1342
        %v1344 = vperm.slane %v1340, %v1343
        %v1345 = vrot.slane %v1315, 4
        %v1346 = vsel %vm1159, %v1345, %v1251
        %v1348 = vunpack.c.l.s4 1983009808
        %v1349 = vunpack.c.0.s8 %v1348
        %v1350 = vperm.slane %v1346, %v1349
        %v1351 = vrot.slane %v1350, 4
        %v1352 = vsel %vm1159, %v1351, %v1344
        %v1353 = vrot.slane %v1344, 4
        %v1354 = vsel %vm1159, %v1350, %v1353
        %v1356 = vunpack.c.l.s4 1934713408
        %v1357 = vunpack.c.0.s8 %v1356
        %v1358 = vperm.slane %v1352, %v1357
        %v1360 = vunpack.c.l.s4 1934713408
        %v1361 = vunpack.c.0.s8 %v1360
        %v1362 = vperm.slane %v1354, %v1361
        %v1363 = vrot.slane %v1358, 4
        %v1364 = vsel %vm1159, 0, %v1363
        %v1365 = vrot.slane %v1362, 4
        %v1366 = vsel %vm1159, 0, %v1365
        %v1367 = vrot.slane %v1299, 4
        %v1368 = vsel %vm1159, %v1367, %v1235
        %v1370 = vunpack.c.l.s4 1983009808
        %v1371 = vunpack.c.0.s8 %v1370
        %v1372 = vperm.slane %v1368, %v1371
        %v1373 = vrot.slane %v1331, 4
        %v1374 = vsel %vm1159, %v1373, %v1267
        %v1376 = vunpack.c.l.s4 1983009808
        %v1377 = vunpack.c.0.s8 %v1376
        %v1378 = vperm.slane %v1374, %v1377
        %v1379 = vrot.slane %v1378, 4
        %v1380 = vsel %vm1159, %v1379, %v1372
        %v1381 = vrot.slane %v1372, 4
        %v1382 = vsel %vm1159, %v1378, %v1381
        %v1384 = vunpack.c.l.s4 1934713408
        %v1385 = vunpack.c.0.s8 %v1384
        %v1386 = vperm.slane %v1380, %v1385
        %v1388 = vunpack.c.l.s4 1934713408
        %v1389 = vunpack.c.0.s8 %v1388
        %v1390 = vperm.slane %v1382, %v1389
        %v1391 = vrot.slane %v1386, 4
        %v1392 = vsel %vm1159, 0, %v1391
        %v1393 = vrot.slane %v1390, 4
        %v1394 = vsel %vm1159, 0, %v1393
        %v1397 = vpack.i.b16 %v1386, %v1358
        %v1399 = vshrl.u32 %v1358, 16
        %v1400 = vshrl.u32 %v1386, 16
        %v1401 = vpack.i.b16 %v1400, %v1399
        %v1405 = vpack.i.b16 %v1392, %v1364
        %v1407 = vshrl.u32 %v1364, 16
        %v1408 = vshrl.u32 %v1392, 16
        %v1409 = vpack.i.b16 %v1408, %v1407
        %v1413 = vpack.i.b16 %v1390, %v1362
        %v1415 = vshrl.u32 %v1362, 16
        %v1416 = vshrl.u32 %v1390, 16
        %v1417 = vpack.i.b16 %v1416, %v1415
        %v1421 = vpack.i.b16 %v1394, %v1366
        %v1423 = vshrl.u32 %v1366, 16
        %v1424 = vshrl.u32 %v1394, 16
        %v1425 = vpack.i.b16 %v1424, %v1423
        %1427 = vxpose.xlu0.c.b16.start [1/8] %v1397, 128
        %1428 = vxpose.xlu0.c.b16.cont [2/8] 0, 128
        %1429 = vxpose.xlu0.c.b16.cont [3/8] 0, 128
        %1430 = vxpose.xlu0.c.b16.cont [4/8] 0, 128
        %1431 = vxpose.xlu0.c.b16.cont [5/8] 0, 128
        %1432 = vxpose.xlu0.c.b16.cont [6/8] 0, 128
        %1433 = vxpose.xlu0.c.b16.cont [7/8] 0, 128
        %1434 = vxpose.xlu0.c.b16.end [8/8] 0, 128
        %v1435 = vpop.trf.xlu0
        %v1436 = vpop.trf.xlu0
        %v1437 = vpop.trf.xlu0
        %v1438 = vpop.trf.xlu0
        %v1439 = vpop.trf.xlu0
        %v1440 = vpop.trf.xlu0
        %v1441 = vpop.trf.xlu0
        %v1442 = vpop.trf.xlu0
        %1443 = vxpose.xlu0.c.b16.start [1/8] %v1401, 128
        %1444 = vxpose.xlu0.c.b16.cont [2/8] 0, 128
        %1445 = vxpose.xlu0.c.b16.cont [3/8] 0, 128
        %1446 = vxpose.xlu0.c.b16.cont [4/8] 0, 128
        %1447 = vxpose.xlu0.c.b16.cont [5/8] 0, 128
        %1448 = vxpose.xlu0.c.b16.cont [6/8] 0, 128
        %1449 = vxpose.xlu0.c.b16.cont [7/8] 0, 128
        %1450 = vxpose.xlu0.c.b16.end [8/8] 0, 128
        %v1451 = vpop.trf.xlu0
        %v1452 = vpop.trf.xlu0
        %v1453 = vpop.trf.xlu0
        %v1454 = vpop.trf.xlu0
        %v1455 = vpop.trf.xlu0
        %v1456 = vpop.trf.xlu0
        %v1457 = vpop.trf.xlu0
        %v1458 = vpop.trf.xlu0
        %1459 = vxpose.xlu0.c.b16.start [1/8] %v1405, 128
        %1460 = vxpose.xlu0.c.b16.cont [2/8] 0, 128
        %1461 = vxpose.xlu0.c.b16.cont [3/8] 0, 128
        %1462 = vxpose.xlu0.c.b16.cont [4/8] 0, 128
        %1463 = vxpose.xlu0.c.b16.cont [5/8] 0, 128
        %1464 = vxpose.xlu0.c.b16.cont [6/8] 0, 128
        %1465 = vxpose.xlu0.c.b16.cont [7/8] 0, 128
        %1466 = vxpose.xlu0.c.b16.end [8/8] 0, 128
        %v1467 = vpop.trf.xlu0
        %v1468 = vpop.trf.xlu0
        %v1469 = vpop.trf.xlu0
        %v1470 = vpop.trf.xlu0
        %v1471 = vpop.trf.xlu0
        %v1472 = vpop.trf.xlu0
        %v1473 = vpop.trf.xlu0
        %v1474 = vpop.trf.xlu0
        %1475 = vxpose.xlu0.c.b16.start [1/8] %v1409, 128
        %1476 = vxpose.xlu0.c.b16.cont [2/8] 0, 128
        %1477 = vxpose.xlu0.c.b16.cont [3/8] 0, 128
        %1478 = vxpose.xlu0.c.b16.cont [4/8] 0, 128
        %1479 = vxpose.xlu0.c.b16.cont [5/8] 0, 128
        %1480 = vxpose.xlu0.c.b16.cont [6/8] 0, 128
        %1481 = vxpose.xlu0.c.b16.cont [7/8] 0, 128
        %1482 = vxpose.xlu0.c.b16.end [8/8] 0, 128
        %v1483 = vpop.trf.xlu0
        %v1484 = vpop.trf.xlu0
        %v1485 = vpop.trf.xlu0
        %v1486 = vpop.trf.xlu0
        %v1487 = vpop.trf.xlu0
        %v1488 = vpop.trf.xlu0
        %v1489 = vpop.trf.xlu0
        %v1490 = vpop.trf.xlu0
        %1491 = vxpose.xlu0.c.b16.start [1/8] %v1413, 128
        %1492 = vxpose.xlu0.c.b16.cont [2/8] 0, 128
        %1493 = vxpose.xlu0.c.b16.cont [3/8] 0, 128
        %1494 = vxpose.xlu0.c.b16.cont [4/8] 0, 128
        %1495 = vxpose.xlu0.c.b16.cont [5/8] 0, 128
        %1496 = vxpose.xlu0.c.b16.cont [6/8] 0, 128
        %1497 = vxpose.xlu0.c.b16.cont [7/8] 0, 128
        %1498 = vxpose.xlu0.c.b16.end [8/8] 0, 128
        %v1499 = vpop.trf.xlu0
        %v1500 = vpop.trf.xlu0
        %v1501 = vpop.trf.xlu0
        %v1502 = vpop.trf.xlu0
        %v1503 = vpop.trf.xlu0
        %v1504 = vpop.trf.xlu0
        %v1505 = vpop.trf.xlu0
        %v1506 = vpop.trf.xlu0
        %1507 = vxpose.xlu0.c.b16.start [1/8] %v1417, 128
        %1508 = vxpose.xlu0.c.b16.cont [2/8] 0, 128
        %1509 = vxpose.xlu0.c.b16.cont [3/8] 0, 128
        %1510 = vxpose.xlu0.c.b16.cont [4/8] 0, 128
        %1511 = vxpose.xlu0.c.b16.cont [5/8] 0, 128
        %1512 = vxpose.xlu0.c.b16.cont [6/8] 0, 128
        %1513 = vxpose.xlu0.c.b16.cont [7/8] 0, 128
        %1514 = vxpose.xlu0.c.b16.end [8/8] 0, 128
        %v1515 = vpop.trf.xlu0
        %v1516 = vpop.trf.xlu0
        %v1517 = vpop.trf.xlu0
        %v1518 = vpop.trf.xlu0
        %v1519 = vpop.trf.xlu0
        %v1520 = vpop.trf.xlu0
        %v1521 = vpop.trf.xlu0
        %v1522 = vpop.trf.xlu0
        %1523 = vxpose.xlu0.c.b16.start [1/8] %v1421, 128
        %1524 = vxpose.xlu0.c.b16.cont [2/8] 0, 128
        %1525 = vxpose.xlu0.c.b16.cont [3/8] 0, 128
        %1526 = vxpose.xlu0.c.b16.cont [4/8] 0, 128
        %1527 = vxpose.xlu0.c.b16.cont [5/8] 0, 128
        %1528 = vxpose.xlu0.c.b16.cont [6/8] 0, 128
        %1529 = vxpose.xlu0.c.b16.cont [7/8] 0, 128
        %1530 = vxpose.xlu0.c.b16.end [8/8] 0, 128
        %v1531 = vpop.trf.xlu0
        %v1532 = vpop.trf.xlu0
        %v1533 = vpop.trf.xlu0
        %v1534 = vpop.trf.xlu0
        %v1535 = vpop.trf.xlu0
        %v1536 = vpop.trf.xlu0
        %v1537 = vpop.trf.xlu0
        %v1538 = vpop.trf.xlu0
        %1539 = vxpose.xlu0.c.b16.start [1/8] %v1425, 128
        %1540 = vxpose.xlu0.c.b16.cont [2/8] 0, 128
        %1541 = vxpose.xlu0.c.b16.cont [3/8] 0, 128
        %1542 = vxpose.xlu0.c.b16.cont [4/8] 0, 128
        %1543 = vxpose.xlu0.c.b16.cont [5/8] 0, 128
        %1544 = vxpose.xlu0.c.b16.cont [6/8] 0, 128
        %1545 = vxpose.xlu0.c.b16.cont [7/8] 0, 128
        %1546 = vxpose.xlu0.c.b16.end [8/8] 0, 128
        %v1547 = vpop.trf.xlu0
        %v1548 = vpop.trf.xlu0
        %v1549 = vpop.trf.xlu0
        %v1550 = vpop.trf.xlu0
        %v1551 = vpop.trf.xlu0
        %v1552 = vpop.trf.xlu0
        %v1553 = vpop.trf.xlu0
        %v1554 = vpop.trf.xlu0
        %v1555 = vrot.slane %v1499, 4
        %v1556 = vsel %vm1159, %v1555, %v1435
        %v1558 = vunpack.c.l.s4 1983009808
        %v1559 = vunpack.c.0.s8 %v1558
        %v1560 = vperm.slane %v1556, %v1559
        %v1561 = vrot.slane %v1531, 4
        %v1562 = vsel %vm1159, %v1561, %v1467
        %v1564 = vunpack.c.l.s4 1983009808
        %v1565 = vunpack.c.0.s8 %v1564
        %v1566 = vperm.slane %v1562, %v1565
        %v1567 = vrot.slane %v1566, 4
        %v1568 = vsel %vm1159, %v1567, %v1560
        %v1570 = vunpack.c.l.s4 1934713408
        %v1571 = vunpack.c.0.s8 %v1570
        %v1572 = vperm.slane %v1568, %v1571
        %v1573 = vrot.slane %v1572, 4
        %v1574 = vsel %vm1159, 0, %v1573
        %v1575 = vrot.slane %v1515, 4
        %v1576 = vsel %vm1159, %v1575, %v1451
        %v1578 = vunpack.c.l.s4 1983009808
        %v1579 = vunpack.c.0.s8 %v1578
        %v1580 = vperm.slane %v1576, %v1579
        %v1581 = vrot.slane %v1547, 4
        %v1582 = vsel %vm1159, %v1581, %v1483
        %v1584 = vunpack.c.l.s4 1983009808
        %v1585 = vunpack.c.0.s8 %v1584
        %v1586 = vperm.slane %v1582, %v1585
        %v1587 = vrot.slane %v1586, 4
        %v1588 = vsel %vm1159, %v1587, %v1580
        %v1590 = vunpack.c.l.s4 1934713408
        %v1591 = vunpack.c.0.s8 %v1590
        %v1592 = vperm.slane %v1588, %v1591
        %v1593 = vrot.slane %v1592, 4
        %v1594 = vsel %vm1159, 0, %v1593
        %v1597 = vpack.i.b16 %v1592, %v1572
        %v1598 = vshrl.u32 %v1572, 16
        %v1599 = vshrl.u32 %v1592, 16
        %v1600 = vpack.i.b16 %v1599, %v1598
        %v1603 = vpack.i.b16 %v1594, %v1574
        %v1604 = vshrl.u32 %v1574, 16
        %v1605 = vshrl.u32 %v1594, 16
        %v1606 = vpack.i.b16 %v1605, %v1604
        %vm1607 = vcmask 64512
        %v1609 = vsel %vm1607, %v1201, 0
        %vm1611 = vcmask 1043456
        %v1613 = vsel %vm1611, %v1597, 0
        %1615 = vmatpush.bf16.msra.mxu0 0
        %1616 = vmatpush.bf16.msra.mxu0 0
        %1617 = vmatpush.bf16.msra.mxu0 0
        %1618 = vmatpush.bf16.msra.mxu0 0
        %1619 = vmatpush.bf16.msra.mxu0 0
        %1620 = vmatpush.bf16.msra.mxu0 0
        %1621 = vmatpush.bf16.msra.mxu0 0
        %1622 = vmatpush.bf16.msra.mxu0 %v1613
        %1623 = vmatmul.bf16.gmra.mxu0 %v1609
        %v1624 = vpop.f32.mrf.mxu0
        %v1625 = vadd.f32 %v934, %v1624
        %v1626 = vpop.f32.mrf.mxu0
        %1627 = vdwg.mxu0
        %v1629 = vsel %vm1607, %v1204, 0
        %v1632 = vsel %vm1611, %v1600, 0
        %1634 = vmatpush.bf16.msra.mxu0 0
        %1635 = vmatpush.bf16.msra.mxu0 0
        %1636 = vmatpush.bf16.msra.mxu0 0
        %1637 = vmatpush.bf16.msra.mxu0 0
        %1638 = vmatpush.bf16.msra.mxu0 0
        %1639 = vmatpush.bf16.msra.mxu0 0
        %1640 = vmatpush.bf16.msra.mxu0 0
        %1641 = vmatpush.bf16.msra.mxu0 %v1632
        %1642 = vmatmul.bf16.gmra.mxu0 %v1629
        %v1643 = vpop.f32.mrf.mxu0
        %v1644 = vadd.f32 %v934, %v1643
        %v1645 = vpop.f32.mrf.mxu0
        %1646 = vdwg.mxu0
        %v1648 = vsel %vm1607, %v1207, 0
        %v1651 = vsel %vm1611, %v1603, 0
        %1653 = vmatpush.bf16.msra.mxu0 0
        %1654 = vmatpush.bf16.msra.mxu0 0
        %1655 = vmatpush.bf16.msra.mxu0 0
        %1656 = vmatpush.bf16.msra.mxu0 0
        %1657 = vmatpush.bf16.msra.mxu0 0
        %1658 = vmatpush.bf16.msra.mxu0 0
        %1659 = vmatpush.bf16.msra.mxu0 0
        %1660 = vmatpush.bf16.msra.mxu0 %v1651
        %1661 = vmatmul.bf16.gmra.mxu0 %v1648
        %v1662 = vpop.f32.mrf.mxu0
        %v1663 = vadd.f32 %v934, %v1662
        %v1664 = vpop.f32.mrf.mxu0
        %1665 = vdwg.mxu0
        %v1667 = vsel %vm1607, %v1210, 0
        %v1670 = vsel %vm1611, %v1606, 0
        %1672 = vmatpush.bf16.msra.mxu0 0
        %1673 = vmatpush.bf16.msra.mxu0 0
        %1674 = vmatpush.bf16.msra.mxu0 0
        %1675 = vmatpush.bf16.msra.mxu0 0
        %1676 = vmatpush.bf16.msra.mxu0 0
        %1677 = vmatpush.bf16.msra.mxu0 0
        %1678 = vmatpush.bf16.msra.mxu0 0
        %1679 = vmatpush.bf16.msra.mxu0 %v1670
        %1680 = vmatmul.bf16.gmra.mxu0 %v1667
        %v1681 = vpop.f32.mrf.mxu0
        %v1682 = vadd.f32 %v934, %v1681
        %v1683 = vpop.f32.mrf.mxu0
        %1684 = vdwg.mxu0
        %v1685 = vsel %vm1607, %v1625, -inf
        %1686 = vmax.xlane.f32.xlu0 %v1685
        %v1687 = vpop.xlane.xlu0 %1686
        %v1688 = vsel %vm1607, %v1644, -inf
        %1689 = vmax.xlane.f32.xlu0 %v1688
        %v1690 = vpop.xlane.xlu0 %1689
        %v1691 = vsel %vm1607, %v1663, -inf
        %1692 = vmax.xlane.f32.xlu0 %v1691
        %v1693 = vpop.xlane.xlu0 %1692
        %v1694 = vsel %vm1607, %v1682, -inf
        %1695 = vmax.xlane.f32.xlu0 %v1694
        %v1696 = vpop.xlane.xlu0 %1695
        %v1697 = vsub.f32 %v1625, %v1687
        %v1698 = vsub.f32 %v1644, %v1690
        %v1699 = vsub.f32 %v1663, %v1693
        %v1700 = vsub.f32 %v1682, %v1696
        %v1701 = vmul.f32 %v1697, 1.442695
        %v1702 = vpow.pop %v1701
        %v1703 = vmul.f32 %v1698, 1.442695
        %v1704 = vpow.pop %v1703
        %v1705 = vmul.f32 %v1699, 1.442695
        %v1706 = vpow.pop %v1705
        %v1707 = vmul.f32 %v1700, 1.442695
        %v1708 = vpow.pop %v1707
        %v1709 = vsel %vm1607, %v1702, 0.0
        %1710 = vadd.xlane.f32.xlu0 %v1709
        %v1711 = vpop.xlane.xlu0 %1710
        %v1712 = vsel %vm1607, %v1704, 0.0
        %1713 = vadd.xlane.f32.xlu0 %v1712
        %v1714 = vpop.xlane.xlu0 %1713
        %v1715 = vsel %vm1607, %v1706, 0.0
        %1716 = vadd.xlane.f32.xlu0 %v1715
        %v1717 = vpop.xlane.xlu0 %1716
        %v1718 = vsel %vm1607, %v1708, 0.0
        %1719 = vadd.xlane.f32.xlu0 %v1718
        %v1720 = vpop.xlane.xlu0 %1719
        %v1721 = vpack.c.bf16 %v1702, %v1702
        %v1722 = vpack.c.bf16 %v1704, %v1704
        %v1723 = vpack.c.bf16 %v1706, %v1706
        %v1724 = vpack.c.bf16 %v1708, %v1708
        %v1725 = vrot.slane %v1154, 4
        %v1726 = vsel %vm1159, %v1725, %v1150
        %v1728 = vunpack.c.l.s4 1983009808
        %v1729 = vunpack.c.0.s8 %v1728
        %v1730 = vperm.slane %v1726, %v1729
        %v1731 = vrot.slane %v1156, 4
        %v1732 = vsel %vm1159, %v1731, %v1152
        %v1734 = vunpack.c.l.s4 1983009808
        %v1735 = vunpack.c.0.s8 %v1734
        %v1736 = vperm.slane %v1732, %v1735
        %v1737 = vrot.slane %v1736, 4
        %v1738 = vsel %vm1159, %v1737, %v1730
        %v1740 = vunpack.c.l.s4 1934713408
        %v1741 = vunpack.c.0.s8 %v1740
        %v1742 = vperm.slane %v1738, %v1741
        %v1743 = vrot.slane %v1742, 4
        %v1744 = vsel %vm1159, 0, %v1743
        %v1745 = vrot.slane %v1155, 4
        %v1746 = vsel %vm1159, %v1745, %v1151
        %v1748 = vunpack.c.l.s4 1983009808
        %v1749 = vunpack.c.0.s8 %v1748
        %v1750 = vperm.slane %v1746, %v1749
        %v1751 = vrot.slane %v1157, 4
        %v1752 = vsel %vm1159, %v1751, %v1153
        %v1754 = vunpack.c.l.s4 1983009808
        %v1755 = vunpack.c.0.s8 %v1754
        %v1756 = vperm.slane %v1752, %v1755
        %v1757 = vrot.slane %v1756, 4
        %v1758 = vsel %vm1159, %v1757, %v1750
        %v1760 = vunpack.c.l.s4 1934713408
        %v1761 = vunpack.c.0.s8 %v1760
        %v1762 = vperm.slane %v1758, %v1761
        %v1763 = vrot.slane %v1762, 4
        %v1764 = vsel %vm1159, 0, %v1763
        %v1767 = vpack.i.b16 %v1762, %v1742
        %v1768 = vshrl.u32 %v1742, 16
        %v1769 = vshrl.u32 %v1762, 16
        %v1770 = vpack.i.b16 %v1769, %v1768
        %v1773 = vpack.i.b16 %v1764, %v1744
        %v1774 = vshrl.u32 %v1744, 16
        %v1775 = vshrl.u32 %v1764, 16
        %v1776 = vpack.i.b16 %v1775, %v1774
        %v1778 = vsel %vm1607, %v1721, 0
        %v1781 = vsel %vm1611, %v1767, 0
        %1783 = vmatpush.bf16.msra.mxu0 0
        %1784 = vmatpush.bf16.msra.mxu0 0
        %1785 = vmatpush.bf16.msra.mxu0 0
        %1786 = vmatpush.bf16.msra.mxu0 0
        %1787 = vmatpush.bf16.msra.mxu0 0
        %1788 = vmatpush.bf16.msra.mxu0 0
        %1789 = vmatpush.bf16.msra.mxu0 0
        %1790 = vmatpush.bf16.msra.mxu0 %v1781
        %1791 = vmatmul.bf16.gmra.mxu0 %v1778
        %v1792 = vpop.f32.mrf.mxu0
        %v1793 = vadd.f32 0.0, %v1792
        %v1794 = vpop.f32.mrf.mxu0
        %1795 = vdwg.mxu0
        %v1797 = vsel %vm1607, %v1722, 0
        %v1800 = vsel %vm1611, %v1770, 0
        %1802 = vmatpush.bf16.msra.mxu0 0
        %1803 = vmatpush.bf16.msra.mxu0 0
        %1804 = vmatpush.bf16.msra.mxu0 0
        %1805 = vmatpush.bf16.msra.mxu0 0
        %1806 = vmatpush.bf16.msra.mxu0 0
        %1807 = vmatpush.bf16.msra.mxu0 0
        %1808 = vmatpush.bf16.msra.mxu0 0
        %1809 = vmatpush.bf16.msra.mxu0 %v1800
        %1810 = vmatmul.bf16.gmra.mxu0 %v1797
        %v1811 = vpop.f32.mrf.mxu0
        %v1812 = vadd.f32 0.0, %v1811
        %v1813 = vpop.f32.mrf.mxu0
        %1814 = vdwg.mxu0
        %v1816 = vsel %vm1607, %v1723, 0
        %v1819 = vsel %vm1611, %v1773, 0
        %1821 = vmatpush.bf16.msra.mxu0 0
        %1822 = vmatpush.bf16.msra.mxu0 0
        %1823 = vmatpush.bf16.msra.mxu0 0
        %1824 = vmatpush.bf16.msra.mxu0 0
        %1825 = vmatpush.bf16.msra.mxu0 0
        %1826 = vmatpush.bf16.msra.mxu0 0
        %1827 = vmatpush.bf16.msra.mxu0 0
        %1828 = vmatpush.bf16.msra.mxu0 %v1819
        %1829 = vmatmul.bf16.gmra.mxu0 %v1816
        %v1830 = vpop.f32.mrf.mxu0
        %v1831 = vadd.f32 0.0, %v1830
        %v1832 = vpop.f32.mrf.mxu0
        %1833 = vdwg.mxu0
        %v1835 = vsel %vm1607, %v1724, 0
        %v1838 = vsel %vm1611, %v1776, 0
        %1840 = vmatpush.bf16.msra.mxu0 0
        %1841 = vmatpush.bf16.msra.mxu0 0
        %1842 = vmatpush.bf16.msra.mxu0 0
        %1843 = vmatpush.bf16.msra.mxu0 0
        %1844 = vmatpush.bf16.msra.mxu0 0
        %1845 = vmatpush.bf16.msra.mxu0 0
        %1846 = vmatpush.bf16.msra.mxu0 0
        %1847 = vmatpush.bf16.msra.mxu0 %v1838
        %1848 = vmatmul.bf16.gmra.mxu0 %v1835
        %v1849 = vpop.f32.mrf.mxu0
        %v1850 = vadd.f32 0.0, %v1849
        %v1851 = vpop.f32.mrf.mxu0
        %1852 = vdwg.mxu0
        %v1853 = vrcp.pop %v1711
        %v1854 = vrcp.pop %v1714
        %v1855 = vrcp.pop %v1717
        %v1856 = vrcp.pop %v1720
        %v1857 = vmul.f32 %v1793, %v1853
        %v1858 = vmul.f32 %v1812, %v1854
        %v1859 = vmul.f32 %v1831, %v1855
        %v1860 = vmul.f32 %v1850, %v1856
        %v1861 = vrot.slane %v1859, 4
        %v1862 = vsel %vm946, %v1861, %v1857
        %v1863 = vrot.slane %v1857, 4
        %v1864 = vsel %vm946, %v1859, %v1863
        %v1866 = vunpack.c.l.s4 1983009808
        %v1867 = vunpack.c.0.s8 %v1866
        %v1868 = vperm.slane %v1862, %v1867
        %v1870 = vunpack.c.l.s4 1983009808
        %v1871 = vunpack.c.0.s8 %v1870
        %v1872 = vperm.slane %v1864, %v1871
        %v1873 = vrot.slane %v1860, 4
        %v1874 = vsel %vm946, %v1873, %v1858
        %v1875 = vrot.slane %v1858, 4
        %v1876 = vsel %vm946, %v1860, %v1875
        %v1878 = vunpack.c.l.s4 1983009808
        %v1879 = vunpack.c.0.s8 %v1878
        %v1880 = vperm.slane %v1874, %v1879
        %v1882 = vunpack.c.l.s4 1983009808
        %v1883 = vunpack.c.0.s8 %v1882
        %v1884 = vperm.slane %v1876, %v1883
        %v1885 = vrot.slane %v1880, 4
        %v1886 = vsel %vm946, %v1885, %v1868
        %v1887 = vrot.slane %v1868, 4
        %v1888 = vsel %vm946, %v1880, %v1887
        %v1890 = vunpack.c.l.s4 1934713408
        %v1891 = vunpack.c.0.s8 %v1890
        %v1892 = vperm.slane %v1886, %v1891
        %v1894 = vunpack.c.l.s4 1934713408
        %v1895 = vunpack.c.0.s8 %v1894
        %v1896 = vperm.slane %v1888, %v1895
        %v1897 = vrot.slane %v1884, 4
        %v1898 = vsel %vm946, %v1897, %v1872
        %v1899 = vrot.slane %v1872, 4
        %v1900 = vsel %vm946, %v1884, %v1899
        %v1902 = vunpack.c.l.s4 1934713408
        %v1903 = vunpack.c.0.s8 %v1902
        %v1904 = vperm.slane %v1898, %v1903
        %v1906 = vunpack.c.l.s4 1934713408
        %v1907 = vunpack.c.0.s8 %v1906
        %v1908 = vperm.slane %v1900, %v1907
        %v1909 = vrot.slane %v1892, 4
        %v1910 = vsel %vm946, 0.0, %v1909
        %v1911 = vrot.slane %v1896, 4
        %v1912 = vsel %vm946, 0.0, %v1911
        %v1913 = vrot.slane %v1904, 4
        %v1914 = vsel %vm946, 0.0, %v1913
        %v1915 = vrot.slane %v1908, 4
        %v1916 = vsel %vm946, 0.0, %v1915
        %v1917 = vsel %vm946, %v1911, %v1892
        %v1919 = vunpack.c.l.s4 1983009808
        %v1920 = vunpack.c.0.s8 %v1919
        %v1921 = vperm.slane %v1917, %v1920
        %v1922 = vrot.slane %v1912, 4
        %v1923 = vsel %vm946, %v1922, %v1910
        %v1925 = vunpack.c.l.s4 1983009808
        %v1926 = vunpack.c.0.s8 %v1925
        %v1927 = vperm.slane %v1923, %v1926
        %v1928 = vsel %vm946, %v1915, %v1904
        %v1930 = vunpack.c.l.s4 1983009808
        %v1931 = vunpack.c.0.s8 %v1930
        %v1932 = vperm.slane %v1928, %v1931
        %v1933 = vrot.slane %v1916, 4
        %v1934 = vsel %vm946, %v1933, %v1914
        %v1936 = vunpack.c.l.s4 1983009808
        %v1937 = vunpack.c.0.s8 %v1936
        %v1938 = vperm.slane %v1934, %v1937
        %v1939 = vrot.slane %v1927, 4
        %v1940 = vsel %vm946, %v1939, %v1921
        %v1941 = vrot.slane %v1921, 4
        %v1942 = vsel %vm946, %v1927, %v1941
        %v1944 = vunpack.c.l.s4 1934713408
        %v1945 = vunpack.c.0.s8 %v1944
        %v1946 = vperm.slane %v1940, %v1945
        %v1948 = vunpack.c.l.s4 1934713408
        %v1949 = vunpack.c.0.s8 %v1948
        %v1950 = vperm.slane %v1942, %v1949
        %v1951 = vrot.slane %v1938, 4
        %v1952 = vsel %vm946, %v1951, %v1932
        %v1953 = vrot.slane %v1932, 4
        %v1954 = vsel %vm946, %v1938, %v1953
        %v1956 = vunpack.c.l.s4 1934713408
        %v1957 = vunpack.c.0.s8 %v1956
        %v1958 = vperm.slane %v1952, %v1957
        %v1960 = vunpack.c.l.s4 1934713408
        %v1961 = vunpack.c.0.s8 %v1960
        %v1962 = vperm.slane %v1954, %v1961
        %v1963 = vrot.slane %v1958, 4
        %v1964 = vsel %vm946, %v1963, %v1946
        %v1965 = vrot.slane %v1946, 4
        %v1966 = vsel %vm946, %v1958, %v1965
        %v1967 = vrot.slane %v1962, 4
        %v1968 = vsel %vm946, %v1967, %v1950
        %v1969 = vrot.slane %v1950, 4
        %v1970 = vsel %vm946, %v1962, %v1969
        %1972 = vrot.lane.b32.xlu0 %v1966, 8
        %v1973 = vpop.permute.xlu0 %1972
        %1976 = vrot.lane.b32.xlu0 %v1968, 16
        %v1977 = vpop.permute.xlu0 %1976
        %1980 = vrot.lane.b32.xlu0 %v1970, 24
        %v1981 = vpop.permute.xlu0 %1980
        %v1983 = vsel %vm1607, %v1964, %v1973
        %vm1984 = vcmask 130048
        %v1985 = vsel %vm1984, %v1983, %v1977
        %vm1986 = vcmask 195584
        %v1987 = vsel %vm1986, %v1985, %v1981
        %v1988 = vpack.c.bf16 %v1987, %v1987
        %v1989 = vld [vmem:[#allocation10] sm:$0xf]
        %v1990 = vld [vmem:[#allocation10 + $0x4] sm:$0xf]
        %v1991 = vld [vmem:[#allocation10 + $0x8] sm:$0xf]
        %v1992 = vld [vmem:[#allocation10 + $0xc] sm:$0xf]
        %v1993 = vld [vmem:[%s11] sm:$0x1]
        %v1995 = vperm.slane %v1993, 0
        %v2001 = vunpack.c.l.b16 %v1989
        %v2002 = vunpack.c.l.b16 %v1990
        %v2003 = vunpack.c.l.b16 %v1991
        %v2004 = vunpack.c.l.b16 %v1992
        %v2005 = vpack.c.b16 %v2002, %v2001
        %v2006 = vpack.c.b16 %v2004, %v2003
        %v2010 = vsel %vm842, %v1988, 0
        %2012 = vmatpush.bf16.msra.mxu0 0
        %2013 = vmatpush.bf16.msra.mxu0 0
        %2014 = vmatpush.bf16.msra.mxu0 0
        %2015 = vmatpush.bf16.msra.mxu0 0
        %2016 = vmatpush.bf16.msra.mxu0 0
        %2017 = vmatpush.bf16.msra.mxu0 0
        %2018 = vmatpush.bf16.msra.mxu0 %v2006
        %2019 = vmatpush.bf16.msra.mxu0 %v2005
        %2020 = vmatmul.bf16.gmra.mxu0 %v2010
        %v2021 = vpop.f32.mrf.mxu0
        %v2022 = vadd.f32 %v1995, %v2021
        %v2023 = vpop.f32.mrf.mxu0
        %2024 = vdwg.mxu0
        %v2025 = vadd.f32 %v2022, %v818
        %v2026 = vld [vmem:[%s16] sm:$0x1]
        %v2027 = vld [vmem:[%s17] sm:$0x1]
        %v2028 = vsel %vm842, %v2025, 0.0
        %2029 = vadd.xlane.f32.xlu0 %v2028
        %v2030 = vpop.xlane.xlu0 %2029
        %v2031 = vrcp.pop 32.0
        %v2032 = vmul.f32 32.0, %v2031
        %v2033 = vsub.f32 1.0, %v2032
        %v2034 = vmul.f32 %v2031, %v2033
        %v2035 = vadd.f32 %v2031, %v2034
        %vm2036 = vweird.f32 %v2031
        %v2037 = vsel %vm2036, %v2031, %v2035
        %v2038 = vmul.f32 %v2030, %v2037
        %v2039 = vsub.f32 %v2025, %v2038
        %v2040 = vmul.f32 %v2039, %v2039
        %v2041 = vsel %vm842, %v2040, 0.0
        %2042 = vadd.xlane.f32.xlu0 %v2041
        %v2043 = vpop.xlane.xlu0 %2042
        %v2044 = vmul.f32 %v2043, %v2037
        %v2045 = vadd.f32 %v2044, 1e-06
        %v2046 = vrsqrt.pop %v2045
        %v2047 = vmul.f32 %v2046, %v2045
        %v2048 = vmul.f32 %v2047, %v2046
        %v2049 = vmul.f32 0.5, %v2048
        %v2050 = vsub.f32 1.5, %v2049
        %v2051 = vmul.f32 %v2046, %v2050
        %vm2052 = vweird.f32 %v2045
        %vm2053 = vweird.f32 %v2046
        %vm2054 = vmor %vm2052, %vm2053
        %v2055 = vsel %vm2054, %v2046, %v2051
        %v2056 = vmul.f32 %v2039, %v2055
        %v2058 = vperm.slane %v2026, 0
        %v2060 = vmul.f32 %v2056, %v2058
        %v2062 = vperm.slane %v2027, 0
        %v2064 = vadd.f32 %v2060, %v2062
        %v2065 = vpack.c.bf16 %v2064, %v2064
        %v2066 = vld [vmem:[#allocation11] sm:$0xf]
        %v2067 = vld [vmem:[#allocation11 + $0x4] sm:$0xf]
        %v2068 = vld [vmem:[#allocation11 + $0x8] sm:$0xf]
        %v2069 = vld [vmem:[#allocation11 + $0xc] sm:$0xf]
        %v2070 = vld [vmem:[%s13] sm:$0x1]
        %v2072 = vperm.slane %v2070, 0
        %v2078 = vunpack.c.l.b16 %v2066
        %v2079 = vunpack.c.l.b16 %v2067
        %v2080 = vunpack.c.l.b16 %v2068
        %v2081 = vunpack.c.l.b16 %v2069
        %v2082 = vpack.c.b16 %v2079, %v2078
        %v2083 = vpack.c.b16 %v2081, %v2080
        %v2087 = vsel %vm842, %v2065, 0
        %2089 = vmatpush.bf16.msra.mxu0 0
        %2090 = vmatpush.bf16.msra.mxu0 0
        %2091 = vmatpush.bf16.msra.mxu0 0
        %2092 = vmatpush.bf16.msra.mxu0 0
        %2093 = vmatpush.bf16.msra.mxu0 0
        %2094 = vmatpush.bf16.msra.mxu0 0
        %2095 = vmatpush.bf16.msra.mxu0 %v2083
        %2096 = vmatpush.bf16.msra.mxu0 %v2082
        %2097 = vmatmul.bf16.gmra.mxu0 %v2087
        %v2098 = vpop.f32.mrf.mxu0
        %v2099 = vadd.f32 %v2072, %v2098
        %v2100 = vpop.f32.mrf.mxu0
        %2101 = vdwg.mxu0
        %v2102 = vmax.f32 %v2099, 0.0
        %v2103 = vpack.c.bf16 %v2102, %v2102
        %v2104 = vld [vmem:[%s14] sm:$0xf]
        %v2105 = vld [vmem:[%s14 + $0x4] sm:$0xf]
        %v2106 = vld [vmem:[%s14 + $0x8] sm:$0xf]
        %v2107 = vld [vmem:[%s14 + $0xc] sm:$0xf]
        %v2108 = vld [vmem:[%s14 + $0x10] sm:$0xf]
        %v2109 = vld [vmem:[%s14 + $0x14] sm:$0xf]
        %v2110 = vld [vmem:[%s14 + $0x18] sm:$0xf]
        %v2111 = vld [vmem:[%s14 + $0x1c] sm:$0xf]
        %v2112 = vld [vmem:[%s15] sm:$0x1]
        %v2114 = vperm.slane %v2112, 0
        %v2124 = vunpack.c.l.b16 %v2104
        %v2125 = vunpack.c.l.b16 %v2105
        %v2126 = vunpack.c.l.b16 %v2106
        %v2127 = vunpack.c.l.b16 %v2107
        %v2128 = vunpack.c.l.b16 %v2108
        %v2129 = vunpack.c.l.b16 %v2109
        %v2130 = vunpack.c.l.b16 %v2110
        %v2131 = vunpack.c.l.b16 %v2111
        %v2132 = vpack.c.b16 %v2125, %v2124
        %v2133 = vpack.c.b16 %v2127, %v2126
        %v2134 = vpack.c.b16 %v2129, %v2128
        %v2135 = vpack.c.b16 %v2131, %v2130
        %vm2140 = vcmask 523264
        %v2142 = vsel %vm2140, %v2103, 0
        %2144 = vmatpush.bf16.msra.mxu0 0
        %2145 = vmatpush.bf16.msra.mxu0 0
        %2146 = vmatpush.bf16.msra.mxu0 0
        %2147 = vmatpush.bf16.msra.mxu0 0
        %2148 = vmatpush.bf16.msra.mxu0 %v2135
        %2149 = vmatpush.bf16.msra.mxu0 %v2134
        %2150 = vmatpush.bf16.msra.mxu0 %v2133
        %2151 = vmatpush.bf16.msra.mxu0 %v2132
        %2152 = vmatmul.bf16.gmra.mxu0 %v2142
        %v2153 = vpop.f32.mrf.mxu0
        %v2154 = vadd.f32 %v2114, %v2153
        %v2155 = vpop.f32.mrf.mxu0
        %2156 = vdwg.mxu0
        %v2157 = vadd.f32 %v2154, %v2064
        %v2158 = vld [vmem:[%s18] sm:$0x1]
        %v2159 = vld [vmem:[%s19] sm:$0x1]
        %v2160 = vsel %vm842, %v2157, 0.0
        %2161 = vadd.xlane.f32.xlu0 %v2160
        %v2162 = vpop.xlane.xlu0 %2161
        %v2163 = vmul.f32 %v2162, %v2037
        %v2164 = vsub.f32 %v2157, %v2163
        %v2165 = vmul.f32 %v2164, %v2164
        %v2166 = vsel %vm842, %v2165, 0.0
        %2167 = vadd.xlane.f32.xlu0 %v2166
        %v2168 = vpop.xlane.xlu0 %2167
        %v2169 = vmul.f32 %v2168, %v2037
        %v2170 = vadd.f32 %v2169, 1e-06
        %v2171 = vrsqrt.pop %v2170
        %v2172 = vmul.f32 %v2171, %v2170
        %v2173 = vmul.f32 %v2172, %v2171
        %v2174 = vmul.f32 0.5, %v2173
        %v2175 = vsub.f32 1.5, %v2174
        %v2176 = vmul.f32 %v2171, %v2175
        %vm2177 = vweird.f32 %v2170
        %vm2178 = vweird.f32 %v2171
        %vm2179 = vmor %vm2177, %vm2178
        %v2180 = vsel %vm2179, %v2171, %v2176
        %v2181 = vmul.f32 %v2164, %v2180
        %v2183 = vperm.slane %v2158, 0
        %v2185 = vmul.f32 %v2181, %v2183
        %v2187 = vperm.slane %v2159, 0
        %v2189 = vadd.f32 %v2185, %v2187
        %2190 = vst.msk [vmem:[%s809] sm:$0xff] %vm842, %v2189
        %s2191 = sand.u32 %s508, 1
        %s2192 = scalar_lea.sflag [#allocation4], %s2191
        %s2193 = sand.u32 %s508, 1
        %s2194 = smul.addr %s2193, 8
        %s2195 = scalar_lea.vmem [#allocation13], %s2194
        // Predicated region
        $region125: #{tpu_custom_call.1} parent=99 // pred_check
          %p2196 = pneg %p518
        $region126: #{tpu_custom_call.1} parent=99 // pred_check_branch
          %2198 = sbr.rel (%p2196) target = $region128
        $region127: #{tpu_custom_call.1} parent=99 // pred_region
          %2200 = vsyncadd %s2192, 0
          %s2201 = sadd.s32 %s47, %s46
          %s2202 = smul.addr %s2201, 8
          %s2203 = scalar_lea.hbm %s20, %s2202
          %s2205 = sshll.u32 %s2195, 4
          %s2206 = int_to_ptr.vmem [resolvable:$true] %s2205
          %s2207 = sshll.u32 %s2203, 4
          %s2208 = int_to_ptr.hbm [resolvable:$true] %s2207
          %2210 = dma.vmem_to_hbm [thread:$0]  %s2206, 128, %s2208, %s2192
        $region128: #{tpu_custom_call.1} parent=99 // pred_fallthru
          _
      $region100: #{tpu_custom_call.1} parent=5 // pred_fallthru
        _
      %p2211 = scmp.le.s32.totalorder 2, %s37
      // Predicated region
      $region129: #{tpu_custom_call.1} parent=5 // pred_check
        %p2212 = pneg %p2211
      $region130: #{tpu_custom_call.1} parent=5 // pred_check_branch
        %2214 = sbr.rel (%p2212) target = $region132
      $region131: #{tpu_custom_call.1} parent=5 // pred_region
        %s2215 = ssub.s32 %s37, 2
        // Predicated region
        $region133: #{tpu_custom_call.1} parent=131 // pred_check
          %p2216 = pneg %p524
        $region134: #{tpu_custom_call.1} parent=131 // pred_check_branch
          %2218 = sbr.rel (%p2216) target = $region136
        $region135: #{tpu_custom_call.1} parent=131 // pred_region
          %s2219 = sand.u32 %s509, 1
          %s2220 = scalar_lea.sflag [#allocation4], %s2219
          %s2221 = sand.u32 %s509, 1
          %s2222 = smul.addr %s2221, 8
          %s2223 = scalar_lea.vmem [#allocation13], %s2222
          %2225 = dma.done %s2220, 128
        $region136: #{tpu_custom_call.1} parent=131 // pred_fallthru
          _
      $region132: #{tpu_custom_call.1} parent=5 // pred_fallthru
        _
    $region6: #{tpu_custom_call.1} parent=1 // loop_footer
      %s41 = sadd.s32 1, %s37
    $region7: #{tpu_custom_call.1} parent=1 // loop_footer_branch
      %36 = sbr.rel target = $region3
    $region8: #{tpu_custom_call.1} parent=1 // loop_exit
      _
    %2226 = vsyncpa [#allocation3], 1
    %s2227 = scalar_lea.sflag [#allocation3], 1
    %2228 = vsyncpa %s2227, 1
    %2229 = vsyncpa [#allocation6], 1
    %s2230 = scalar_lea.sflag [#allocation6], 1
    %2231 = vsyncpa %s2230, 1
    %2232 = vsyncpa [#allocation9], 1
    %2233 = vsyncpa [#allocation12], 1
    %2234 = vsyncpa [#allocation4], 1
    %s2235 = scalar_lea.sflag [#allocation4], 1
    %2236 = vsyncpa %s2235, 1

</llo_original>
